<compile_context>
chip_gen: v5e
topology: v5e:2x2
jax: 0.10.0
libtpu: 0.0.40
codegen_flags: <defaults>
</compile_context>

<pallas_src>
import jax
import jax.numpy as jnp
from jax import lax
from jax.experimental import pallas as pl
from jax.experimental.pallas import tpu as pltpu


def _round_up(x, m):
    return (x + m - 1) // m * m


def _pick_row_width(H, W):
    """Smallest padded row width >= W+2 with H*Wrow % 128 == 0 (lane-dense output)."""
    base = W + 2
    for cand in range(base, base + 65):
        if (H * cand) % 128 == 0:
            return cand
    return base


def _make_unet_up_kernel(C1, Cu, C2, Co, Ccp, Cop, H, W, Wrow, H2, W2):
    Lq = H * Wrow                      # output lanes (full padded rows)
    o = Wrow + 1                       # flat offset of data pixel (0, 0) in the frame
    Lf2 = (H + 2) * Wrow + 2           # frame length (covers the furthest 3x3 tap)
    taps = tuple((ty, tx) for ty in range(3) for tx in range(3))

    def kernel(x1_ref, x2_ref, wd_ref, bd_ref, w1_ref, b1_ref, w2_ref, b2_ref,
               o_ref, frame, h1f):
        f32, bf16 = jnp.float32, jnp.bfloat16

        # --- zero ONLY the border strips / padded channel rows that are read by the
        # tap matmuls but never overwritten by the per-step data writes (cheap and
        # correct under megacore-parallel grid splitting).
        frame[:, 0:o] = jnp.zeros((Ccp, o), bf16)
        frame[:, o + Lq:Lf2] = jnp.zeros((Ccp, Lf2 - o - Lq), bf16)
        if C1 + Cu < Ccp:
            frame[C1 + Cu:Ccp, :] = jnp.zeros((Ccp - C1 - Cu, Lf2), bf16)
        h1f[:, 0:o] = jnp.zeros((Cop, o), bf16)
        h1f[:, o + Lq:Lf2] = jnp.zeros((Cop, Lf2 - o - Lq), bf16)

        # --- skip connection: scatter rows of x1 into the padded-flat frame (VMEM).
        x1v = x1_ref[0].astype(bf16)                         # (C1, H*W)
        zrow = jnp.zeros((C1, Wrow - W), bf16)
        for y in range(H):
            seg = jnp.concatenate([x1v[:, y * W:(y + 1) * W], zrow], axis=1)
            frame[0:C1, o + y * Wrow:o + (y + 1) * Wrow] = seg

        # --- in-kernel ConvTranspose2d(k=2, s=2): one MXU matmul producing the four
        # (dx, dy) sub-pixel planes, then a per-input-row scatter where the x-parity
        # interleave is done by tiny matmuls with 0/1 dilation matrices (built from
        # iota), so the upsampled tensor goes straight into the VMEM frame.
        x2v = x2_ref[0].astype(bf16)                         # (C2, H2*W2)
        y4 = jnp.dot(wd_ref[...], x2v, preferred_element_type=f32)
        y4 = (y4 + bd_ref[...]).astype(bf16)                 # rows ordered (dx, dy, c)
        jj = lax.broadcasted_iota(jnp.int32, (W2, Wrow), 0)
        xx = lax.broadcasted_iota(jnp.int32, (W2, Wrow), 1)
        S0 = (xx == 2 * jj).astype(bf16)                     # source j -> column 2j
        S1 = (xx == 2 * jj + 1).astype(bf16)                 # source j -> column 2j+1
        for i in range(H2):
            blk = y4[:, i * W2:(i + 1) * W2]                 # (4*Cu, W2)
            v = (jnp.dot(blk[:2 * Cu], S0, preferred_element_type=f32)
                 + jnp.dot(blk[2 * Cu:], S1, preferred_element_type=f32))
            v = v.astype(bf16)                               # rows [0:Cu]=row 2i, [Cu:2Cu]=row 2i+1
            frame[C1:C1 + Cu, o + (2 * i) * Wrow:o + (2 * i + 1) * Wrow] = v[:Cu]
            frame[C1:C1 + Cu, o + (2 * i + 1) * Wrow:o + (2 * i + 2) * Wrow] = v[Cu:]

        # --- conv1 (3x3 SAME over the implicit concat) + ReLU: 9 accumulated matmuls
        # reading lane-offset tap slices of the frame directly (no im2col buffer).
        q = lax.broadcasted_iota(jnp.int32, (1, Lq), 1)
        mask = ((q % Wrow) < W).astype(f32)                  # zero the pad columns
        acc = jnp.zeros((Cop, Lq), f32)
        for t, (ty, tx) in enumerate(taps):
            off = ty * Wrow + tx
            acc = acc + jnp.dot(w1_ref[t], frame[:, off:off + Lq],
                                preferred_element_type=f32)
        h1 = jnp.maximum(acc + b1_ref[...], 0.0) * mask
        h1f[:, o:o + Lq] = h1.astype(bf16)                   # re-embed, stays in VMEM

        # --- conv2 (3x3 SAME) + ReLU.
        acc2 = jnp.zeros((Cop, Lq), f32)
        for t, (ty, tx) in enumerate(taps):
            off = ty * Wrow + tx
            acc2 = acc2 + jnp.dot(w2_ref[t], h1f[:, off:off + Lq],
                                  preferred_element_type=f32)
        h2 = jnp.maximum(acc2 + b2_ref[...], 0.0)
        o_ref[0] = h2[:Co].astype(o_ref.dtype)               # lane-dense (Co, Lq) store

    return kernel


def unet_up_deconv_forward(params, inputs1, inputs2):
    """UnetUp forward with is_deconv=True.  inputs1: (N,C1,H,W), inputs2: (N,C2,H2,W2)."""
    up_w, up_b = params["up_w"], params["up_b"]
    w1, b1 = params["c1_w"], params["c1_b"]
    w2, b2 = params["c2_w"], params["c2_b"]

    N, C2, H2, W2 = inputs2.shape
    H, W = 2 * H2, 2 * W2
    Cu = up_w.shape[1]
    C1 = inputs1.shape[1]
    Co = w1.shape[0]

    # PyTorch module's offset padding of the skip connection (no-op at matched shapes).
    off_h = H - inputs1.shape[2]
    off_w = W - inputs1.shape[3]
    if off_h or off_w:
        inputs1 = jnp.pad(inputs1, ((0, 0), (0, 0),
                                    (off_h // 2, off_h - off_h // 2),
                                    (off_w // 2, off_w - off_w // 2)))

    Ccp = _round_up(C1 + Cu, 16)       # bf16 sublane packing
    Cop = _round_up(Co, 16)
    Wrow = _pick_row_width(H, W)
    Lq = H * Wrow
    Lf2 = (H + 2) * Wrow + 2
    L2 = H2 * W2

    x1f = inputs1.reshape(N, C1, H * W)          # free reshapes, no HBM copies
    x2f = inputs2.reshape(N, C2, L2)

    dt = jnp.bfloat16
    # deconv weight rows ordered (dx, dy, cout); PyTorch layout is (cin, cout, dy, dx)
    wd = jnp.transpose(up_w, (3, 2, 1, 0)).reshape(4 * Cu, C2).astype(dt)
    bd = jnp.tile(up_b, 4).reshape(4 * Cu, 1).astype(jnp.float32)

    def conv_w(w, cin_pad):
        co, ci = w.shape[0], w.shape[1]
        wt = jnp.transpose(w, (2, 3, 0, 1)).reshape(9, co, ci)     # tap-major
        return jnp.pad(wt, ((0, 0), (0, Cop - co), (0, cin_pad - ci))).astype(dt)

    w1k = conv_w(w1, Ccp)
    w2k = conv_w(w2, Cop)
    b1c = jnp.pad(b1.reshape(Co, 1), ((0, Cop - Co), (0, 0))).astype(jnp.float32)
    b2c = jnp.pad(b2.reshape(Co, 1), ((0, Cop - Co), (0, 0))).astype(jnp.float32)

    kernel = _make_unet_up_kernel(C1, Cu, C2, Co, Ccp, Cop, H, W, Wrow, H2, W2)

    out = pl.pallas_call(
        kernel,
        out_shape=jax.ShapeDtypeStruct((N, Co, Lq), inputs1.dtype),
        grid=(N,),
        in_specs=[
            pl.BlockSpec((1, C1, H * W), lambda n: (n, 0, 0)),
            pl.BlockSpec((1, C2, L2), lambda n: (n, 0, 0)),
            pl.BlockSpec((4 * Cu, C2), lambda n: (0, 0)),
            pl.BlockSpec((4 * Cu, 1), lambda n: (0, 0)),
            pl.BlockSpec((9, Cop, Ccp), lambda n: (0, 0, 0)),
            pl.BlockSpec((Cop, 1), lambda n: (0, 0)),
            pl.BlockSpec((9, Cop, Cop), lambda n: (0, 0, 0)),
            pl.BlockSpec((Cop, 1), lambda n: (0, 0)),
        ],
        out_specs=pl.BlockSpec((1, Co, Lq), lambda n: (n, 0, 0)),
        scratch_shapes=[
            pltpu.VMEM((Ccp, Lf2), jnp.bfloat16),   # padded-flat concat(x1, up) frame
            pltpu.VMEM((Cop, Lf2), jnp.bfloat16),   # padded-flat conv1 activation
        ],
        compiler_params=pltpu.CompilerParams(
            dimension_semantics=("parallel",),
            vmem_limit_bytes=48 * 1024 * 1024),
    )(x1f, x2f, wd, bd, w1k, b1c, w2k, b2c)

    # drop the junk pad columns per row -> NCHW output (one small XLA slice)
    return out.reshape(N, Co, H, Wrow)[:, :, :, :W]


def _bilinear_up2_align_corners_nchw(x):
    N, C, H, W = x.shape
    Ho, Wo = 2 * H, 2 * W
    ys = jnp.arange(Ho) * (H - 1) / max(Ho - 1, 1)
    xs = jnp.arange(Wo) * (W - 1) / max(Wo - 1, 1)
    y0 = jnp.floor(ys).astype(jnp.int32)
    x0 = jnp.floor(xs).astype(jnp.int32)
    y1 = jnp.minimum(y0 + 1, H - 1)
    x1 = jnp.minimum(x0 + 1, W - 1)
    wy = (ys - y0).astype(jnp.float32)[None, None, :, None]
    wx = (xs - x0).astype(jnp.float32)[None, None, None, :]
    g = lambda yi, xi: x[:, :, yi][:, :, :, xi]
    top = g(y0, x0) * (1 - wx) + g(y0, x1) * wx
    bot = g(y1, x0) * (1 - wx) + g(y1, x1) * wx
    return (top * (1 - wy) + bot * wy).astype(x.dtype)


def unet_up_forward(params, inputs1, inputs2, is_deconv=True):
    if is_deconv:
        return unet_up_deconv_forward(params, inputs1, inputs2)
    # TODO(synk): bilinear branch kept as plain JAX (no Pallas path); not used in demo.
    up = _bilinear_up2_align_corners_nchw(inputs2)
    off = up.shape[2] - inputs1.shape[2]
    p = off // 2
    x1 = jnp.pad(inputs1, ((0, 0), (0, 0), (p, off - p), (p, off - p)))
    cat = jnp.concatenate([x1, up], axis=1)

    def conv(x, w, b):
        y = lax.conv_general_dilated(x, w, (1, 1), 'SAME',
                                     dimension_numbers=('NCHW', 'OIHW', 'NCHW'))
        return jnp.maximum(y + b[None, :, None, None], 0.0)

    h = conv(cat, params["c1_w"], params["c1_b"])
    return conv(h, params["c2_w"], params["c2_b"])


# ----------------------------------------------------------------------------
# Pure-JAX reference (independent formulation) for a sanity check
# ----------------------------------------------------------------------------
def reference_forward(params, inputs1, inputs2):
    N, C2, H2, W2 = inputs2.shape
    Cu = params["up_w"].shape[1]
    up = jnp.einsum('ncij,couv->noiujv', inputs2, params["up_w"])
    up = up.reshape(N, Cu, 2 * H2, 2 * W2) + params["up_b"][None, :, None, None]
    cat = jnp.concatenate([inputs1, up], axis=1)     # offset == 0 at these shapes

    def conv(x, w_oihw, b):
        y = lax.conv_general_dilated(x, w_oihw, (1, 1), 'SAME',
                                     dimension_numbers=('NCHW', 'OIHW', 'NCHW'))
        return jnp.maximum(y + b[None, :, None, None], 0.0)

    h = conv(cat, params["c1_w"], params["c1_b"])
    h = conv(h, params["c2_w"], params["c2_b"])
    return h


if __name__ == "__main__":
    key = jax.random.PRNGKey(0)
    N = 2
    in_ch, out_ch = 8, 4          # UnetUp(in_channels=8, out_channels=4, is_deconv=True)
    H1 = W1 = 16                  # inputs1 spatial (skip connection, higher res)
    H2 = W2 = 8                   # inputs2 spatial (lower layer, upsampled x2)
    ks = jax.random.split(key, 8)

    params = {
        "up_w": jax.random.normal(ks[0], (in_ch, out_ch, 2, 2), jnp.float32) * 0.1,
        "up_b": jax.random.normal(ks[1], (out_ch,), jnp.float32) * 0.1,
        "c1_w": jax.random.normal(ks[2], (out_ch, in_ch, 3, 3), jnp.float32) * 0.1,
        "c1_b": jax.random.normal(ks[3], (out_ch,), jnp.float32) * 0.1,
        "c2_w": jax.random.normal(ks[4], (out_ch, out_ch, 3, 3), jnp.float32) * 0.1,
        "c2_b": jax.random.normal(ks[5], (out_ch,), jnp.float32) * 0.1,
    }

    inputs1 = jax.random.normal(ks[6], (N, out_ch, H1, W1), jnp.float32)   # NCHW
    inputs2 = jax.random.normal(ks[7], (N, in_ch, H2, W2), jnp.float32)    # NCHW

    out = jax.jit(unet_up_forward)(params, inputs1, inputs2)
    out = jax.block_until_ready(out)

    ref = reference_forward(params, inputs1, inputs2)
    assert out.shape == (N, out_ch, H1, W1), out.shape
    # bf16 MXU operands (f32 accumulation) -> slightly looser tolerance than pure f32.
    err = float(jnp.max(jnp.abs(out - ref)))
    assert jnp.allclose(out, ref, atol=5e-2, rtol=5e-2), err
    print("KERNEL_OK")
</pallas_src>

<mosaic_0001>
module attributes {stable_mosaic.version = 11 : i64} {
  func.func @kernel(%arg0: i32, %arg1: memref<1x4x256xf32, #tpu.memory_space<vmem>>, %arg2: memref<1x8x64xf32, #tpu.memory_space<vmem>>, %arg3: memref<16x8xbf16, #tpu.memory_space<vmem>>, %arg4: memref<16x1xf32, #tpu.memory_space<vmem>>, %arg5: memref<9x16x16xbf16, #tpu.memory_space<vmem>>, %arg6: memref<16x1xf32, #tpu.memory_space<vmem>>, %arg7: memref<9x16x16xbf16, #tpu.memory_space<vmem>>, %arg8: memref<16x1xf32, #tpu.memory_space<vmem>>, %arg9: memref<1x4x384xf32, #tpu.memory_space<vmem>>, %arg10: memref<16x434xbf16, #tpu.memory_space<vmem>>, %arg11: memref<16x434xbf16, #tpu.memory_space<vmem>>) attributes {dimension_semantics = [#tpu.dimension_semantics<parallel>], iteration_bounds = array<i64: 2>, scalar_prefetch = 0 : i64, scratch_operands = 2 : i64, tpu.core_type = #tpu.core_type<tc>, window_params = [{transform_indices = @transform_0, window_bounds = array<i64: 1, 4, 256>}, {transform_indices = @transform_1, window_bounds = array<i64: 1, 8, 64>}, {pipeline_mode = #tpu.pipeline_mode<synchronous>, transform_indices = @transform_2, window_bounds = array<i64: 16, 8>}, {pipeline_mode = #tpu.pipeline_mode<synchronous>, transform_indices = @transform_3, window_bounds = array<i64: 16, 1>}, {pipeline_mode = #tpu.pipeline_mode<synchronous>, transform_indices = @transform_4, window_bounds = array<i64: 9, 16, 16>}, {pipeline_mode = #tpu.pipeline_mode<synchronous>, transform_indices = @transform_5, window_bounds = array<i64: 16, 1>}, {pipeline_mode = #tpu.pipeline_mode<synchronous>, transform_indices = @transform_6, window_bounds = array<i64: 9, 16, 16>}, {pipeline_mode = #tpu.pipeline_mode<synchronous>, transform_indices = @transform_7, window_bounds = array<i64: 16, 1>}, {transform_indices = @transform_8, window_bounds = array<i64: 1, 4, 384>}]} {
    %cst = arith.constant 0.000000e+00 : bf16
    %0 = vector.broadcast %cst : bf16 to vector<16x25xbf16>
    %c0 = arith.constant 0 : index
    %c0_0 = arith.constant 0 : index
    %1 = vector.load %arg10[%c0, %c0_0] : memref<16x434xbf16, #tpu.memory_space<vmem>>, vector<16x25xbf16>
    tpu.vector_store %arg10[%c0, %c0_0], %0 {strides = array<i32>} : memref<16x434xbf16, #tpu.memory_space<vmem>>, vector<16x25xbf16>,
    %cst_1 = arith.constant 0.000000e+00 : bf16
    %2 = vector.broadcast %cst_1 : bf16 to vector<16x25xbf16>
    %c0_2 = arith.constant 0 : index
    %c409 = arith.constant 409 : index
    %3 = vector.load %arg10[%c0_2, %c409] : memref<16x434xbf16, #tpu.memory_space<vmem>>, vector<16x25xbf16>
    tpu.vector_store %arg10[%c0_2, %c409], %2 {strides = array<i32>} : memref<16x434xbf16, #tpu.memory_space<vmem>>, vector<16x25xbf16>,
    %cst_3 = arith.constant 0.000000e+00 : bf16
    %4 = vector.broadcast %cst_3 : bf16 to vector<8x434xbf16>
    %c8 = arith.constant 8 : index
    %c0_4 = arith.constant 0 : index
    %5 = vector.load %arg10[%c8, %c0_4] : memref<16x434xbf16, #tpu.memory_space<vmem>>, vector<8x434xbf16>
    tpu.vector_store %arg10[%c8, %c0_4], %4 {strides = array<i32>} : memref<16x434xbf16, #tpu.memory_space<vmem>>, vector<8x434xbf16>,
    %cst_5 = arith.constant 0.000000e+00 : bf16
    %6 = vector.broadcast %cst_5 : bf16 to vector<16x25xbf16>
    %c0_6 = arith.constant 0 : index
    %c0_7 = arith.constant 0 : index
    %7 = vector.load %arg11[%c0_6, %c0_7] : memref<16x434xbf16, #tpu.memory_space<vmem>>, vector<16x25xbf16>
    tpu.vector_store %arg11[%c0_6, %c0_7], %6 {strides = array<i32>} : memref<16x434xbf16, #tpu.memory_space<vmem>>, vector<16x25xbf16>,
    %cst_8 = arith.constant 0.000000e+00 : bf16
    %8 = vector.broadcast %cst_8 : bf16 to vector<16x25xbf16>
    %c0_9 = arith.constant 0 : index
    %c409_10 = arith.constant 409 : index
    %9 = vector.load %arg11[%c0_9, %c409_10] : memref<16x434xbf16, #tpu.memory_space<vmem>>, vector<16x25xbf16>
    tpu.vector_store %arg11[%c0_9, %c409_10], %8 {strides = array<i32>} : memref<16x434xbf16, #tpu.memory_space<vmem>>, vector<16x25xbf16>,
    %c0_11 = arith.constant 0 : index
    %c0_12 = arith.constant 0 : index
    %c0_13 = arith.constant 0 : index
    %10 = vector.load %arg1[%c0_11, %c0_12, %c0_13] : memref<1x4x256xf32, #tpu.memory_space<vmem>>, vector<1x4x256xf32>
    %11 = vector.shape_cast %10 : vector<1x4x256xf32> to vector<4x256xf32>
    %12 = arith.truncf %11 : vector<4x256xf32> to vector<4x256xbf16>
    %cst_14 = arith.constant 0.000000e+00 : bf16
    %13 = vector.broadcast %cst_14 : bf16 to vector<4x8xbf16>
    %14 = vector.extract_strided_slice %12 {offsets = [0, 0], sizes = [4, 16], strides = [1, 1]} : vector<4x256xbf16> to vector<4x16xbf16>
    %15 = tpu.concatenate %14, %13 in 1 : vector<4x16xbf16>, vector<4x8xbf16> -> vector<4x24xbf16>
    %c0_15 = arith.constant 0 : index
    %c25 = arith.constant 25 : index
    %16 = vector.load %arg10[%c0_15, %c25] : memref<16x434xbf16, #tpu.memory_space<vmem>>, vector<4x24xbf16>
    tpu.vector_store %arg10[%c0_15, %c25], %15 {strides = array<i32>} : memref<16x434xbf16, #tpu.memory_space<vmem>>, vector<4x24xbf16>,
    %17 = vector.extract_strided_slice %12 {offsets = [0, 16], sizes = [4, 16], strides = [1, 1]} : vector<4x256xbf16> to vector<4x16xbf16>
    %18 = tpu.concatenate %17, %13 in 1 : vector<4x16xbf16>, vector<4x8xbf16> -> vector<4x24xbf16>
    %c0_16 = arith.constant 0 : index
    %c49 = arith.constant 49 : index
    %19 = vector.load %arg10[%c0_16, %c49] : memref<16x434xbf16, #tpu.memory_space<vmem>>, vector<4x24xbf16>
    tpu.vector_store %arg10[%c0_16, %c49], %18 {strides = array<i32>} : memref<16x434xbf16, #tpu.memory_space<vmem>>, vector<4x24xbf16>,
    %20 = vector.extract_strided_slice %12 {offsets = [0, 32], sizes = [4, 16], strides = [1, 1]} : vector<4x256xbf16> to vector<4x16xbf16>
    %21 = tpu.concatenate %20, %13 in 1 : vector<4x16xbf16>, vector<4x8xbf16> -> vector<4x24xbf16>
    %c0_17 = arith.constant 0 : index
    %c73 = arith.constant 73 : index
    %22 = vector.load %arg10[%c0_17, %c73] : memref<16x434xbf16, #tpu.memory_space<vmem>>, vector<4x24xbf16>
    tpu.vector_store %arg10[%c0_17, %c73], %21 {strides = array<i32>} : memref<16x434xbf16, #tpu.memory_space<vmem>>, vector<4x24xbf16>,
    %23 = vector.extract_strided_slice %12 {offsets = [0, 48], sizes = [4, 16], strides = [1, 1]} : vector<4x256xbf16> to vector<4x16xbf16>
    %24 = tpu.concatenate %23, %13 in 1 : vector<4x16xbf16>, vector<4x8xbf16> -> vector<4x24xbf16>
    %c0_18 = arith.constant 0 : index
    %c97 = arith.constant 97 : index
    %25 = vector.load %arg10[%c0_18, %c97] : memref<16x434xbf16, #tpu.memory_space<vmem>>, vector<4x24xbf16>
    tpu.vector_store %arg10[%c0_18, %c97], %24 {strides = array<i32>} : memref<16x434xbf16, #tpu.memory_space<vmem>>, vector<4x24xbf16>,
    %26 = vector.extract_strided_slice %12 {offsets = [0, 64], sizes = [4, 16], strides = [1, 1]} : vector<4x256xbf16> to vector<4x16xbf16>
    %27 = tpu.concatenate %26, %13 in 1 : vector<4x16xbf16>, vector<4x8xbf16> -> vector<4x24xbf16>
    %c0_19 = arith.constant 0 : index
    %c121 = arith.constant 121 : index
    %28 = vector.load %arg10[%c0_19, %c121] : memref<16x434xbf16, #tpu.memory_space<vmem>>, vector<4x24xbf16>
    tpu.vector_store %arg10[%c0_19, %c121], %27 {strides = array<i32>} : memref<16x434xbf16, #tpu.memory_space<vmem>>, vector<4x24xbf16>,
    %29 = vector.extract_strided_slice %12 {offsets = [0, 80], sizes = [4, 16], strides = [1, 1]} : vector<4x256xbf16> to vector<4x16xbf16>
    %30 = tpu.concatenate %29, %13 in 1 : vector<4x16xbf16>, vector<4x8xbf16> -> vector<4x24xbf16>
    %c0_20 = arith.constant 0 : index
    %c145 = arith.constant 145 : index
    %31 = vector.load %arg10[%c0_20, %c145] : memref<16x434xbf16, #tpu.memory_space<vmem>>, vector<4x24xbf16>
    tpu.vector_store %arg10[%c0_20, %c145], %30 {strides = array<i32>} : memref<16x434xbf16, #tpu.memory_space<vmem>>, vector<4x24xbf16>,
    %32 = vector.extract_strided_slice %12 {offsets = [0, 96], sizes = [4, 16], strides = [1, 1]} : vector<4x256xbf16> to vector<4x16xbf16>
    %33 = tpu.concatenate %32, %13 in 1 : vector<4x16xbf16>, vector<4x8xbf16> -> vector<4x24xbf16>
    %c0_21 = arith.constant 0 : index
    %c169 = arith.constant 169 : index
    %34 = vector.load %arg10[%c0_21, %c169] : memref<16x434xbf16, #tpu.memory_space<vmem>>, vector<4x24xbf16>
    tpu.vector_store %arg10[%c0_21, %c169], %33 {strides = array<i32>} : memref<16x434xbf16, #tpu.memory_space<vmem>>, vector<4x24xbf16>,
    %35 = vector.extract_strided_slice %12 {offsets = [0, 112], sizes = [4, 16], strides = [1, 1]} : vector<4x256xbf16> to vector<4x16xbf16>
    %36 = tpu.concatenate %35, %13 in 1 : vector<4x16xbf16>, vector<4x8xbf16> -> vector<4x24xbf16>
    %c0_22 = arith.constant 0 : index
    %c193 = arith.constant 193 : index
    %37 = vector.load %arg10[%c0_22, %c193] : memref<16x434xbf16, #tpu.memory_space<vmem>>, vector<4x24xbf16>
    tpu.vector_store %arg10[%c0_22, %c193], %36 {strides = array<i32>} : memref<16x434xbf16, #tpu.memory_space<vmem>>, vector<4x24xbf16>,
    %38 = vector.extract_strided_slice %12 {offsets = [0, 128], sizes = [4, 16], strides = [1, 1]} : vector<4x256xbf16> to vector<4x16xbf16>
    %39 = tpu.concatenate %38, %13 in 1 : vector<4x16xbf16>, vector<4x8xbf16> -> vector<4x24xbf16>
    %c0_23 = arith.constant 0 : index
    %c217 = arith.constant 217 : index
    %40 = vector.load %arg10[%c0_23, %c217] : memref<16x434xbf16, #tpu.memory_space<vmem>>, vector<4x24xbf16>
    tpu.vector_store %arg10[%c0_23, %c217], %39 {strides = array<i32>} : memref<16x434xbf16, #tpu.memory_space<vmem>>, vector<4x24xbf16>,
    %41 = vector.extract_strided_slice %12 {offsets = [0, 144], sizes = [4, 16], strides = [1, 1]} : vector<4x256xbf16> to vector<4x16xbf16>
    %42 = tpu.concatenate %41, %13 in 1 : vector<4x16xbf16>, vector<4x8xbf16> -> vector<4x24xbf16>
    %c0_24 = arith.constant 0 : index
    %c241 = arith.constant 241 : index
    %43 = vector.load %arg10[%c0_24, %c241] : memref<16x434xbf16, #tpu.memory_space<vmem>>, vector<4x24xbf16>
    tpu.vector_store %arg10[%c0_24, %c241], %42 {strides = array<i32>} : memref<16x434xbf16, #tpu.memory_space<vmem>>, vector<4x24xbf16>,
    %44 = vector.extract_strided_slice %12 {offsets = [0, 160], sizes = [4, 16], strides = [1, 1]} : vector<4x256xbf16> to vector<4x16xbf16>
    %45 = tpu.concatenate %44, %13 in 1 : vector<4x16xbf16>, vector<4x8xbf16> -> vector<4x24xbf16>
    %c0_25 = arith.constant 0 : index
    %c265 = arith.constant 265 : index
    %46 = vector.load %arg10[%c0_25, %c265] : memref<16x434xbf16, #tpu.memory_space<vmem>>, vector<4x24xbf16>
    tpu.vector_store %arg10[%c0_25, %c265], %45 {strides = array<i32>} : memref<16x434xbf16, #tpu.memory_space<vmem>>, vector<4x24xbf16>,
    %47 = vector.extract_strided_slice %12 {offsets = [0, 176], sizes = [4, 16], strides = [1, 1]} : vector<4x256xbf16> to vector<4x16xbf16>
    %48 = tpu.concatenate %47, %13 in 1 : vector<4x16xbf16>, vector<4x8xbf16> -> vector<4x24xbf16>
    %c0_26 = arith.constant 0 : index
    %c289 = arith.constant 289 : index
    %49 = vector.load %arg10[%c0_26, %c289] : memref<16x434xbf16, #tpu.memory_space<vmem>>, vector<4x24xbf16>
    tpu.vector_store %arg10[%c0_26, %c289], %48 {strides = array<i32>} : memref<16x434xbf16, #tpu.memory_space<vmem>>, vector<4x24xbf16>,
    %50 = vector.extract_strided_slice %12 {offsets = [0, 192], sizes = [4, 16], strides = [1, 1]} : vector<4x256xbf16> to vector<4x16xbf16>
    %51 = tpu.concatenate %50, %13 in 1 : vector<4x16xbf16>, vector<4x8xbf16> -> vector<4x24xbf16>
    %c0_27 = arith.constant 0 : index
    %c313 = arith.constant 313 : index
    %52 = vector.load %arg10[%c0_27, %c313] : memref<16x434xbf16, #tpu.memory_space<vmem>>, vector<4x24xbf16>
    tpu.vector_store %arg10[%c0_27, %c313], %51 {strides = array<i32>} : memref<16x434xbf16, #tpu.memory_space<vmem>>, vector<4x24xbf16>,
    %53 = vector.extract_strided_slice %12 {offsets = [0, 208], sizes = [4, 16], strides = [1, 1]} : vector<4x256xbf16> to vector<4x16xbf16>
    %54 = tpu.concatenate %53, %13 in 1 : vector<4x16xbf16>, vector<4x8xbf16> -> vector<4x24xbf16>
    %c0_28 = arith.constant 0 : index
    %c337 = arith.constant 337 : index
    %55 = vector.load %arg10[%c0_28, %c337] : memref<16x434xbf16, #tpu.memory_space<vmem>>, vector<4x24xbf16>
    tpu.vector_store %arg10[%c0_28, %c337], %54 {strides = array<i32>} : memref<16x434xbf16, #tpu.memory_space<vmem>>, vector<4x24xbf16>,
    %56 = vector.extract_strided_slice %12 {offsets = [0, 224], sizes = [4, 16], strides = [1, 1]} : vector<4x256xbf16> to vector<4x16xbf16>
    %57 = tpu.concatenate %56, %13 in 1 : vector<4x16xbf16>, vector<4x8xbf16> -> vector<4x24xbf16>
    %c0_29 = arith.constant 0 : index
    %c361 = arith.constant 361 : index
    %58 = vector.load %arg10[%c0_29, %c361] : memref<16x434xbf16, #tpu.memory_space<vmem>>, vector<4x24xbf16>
    tpu.vector_store %arg10[%c0_29, %c361], %57 {strides = array<i32>} : memref<16x434xbf16, #tpu.memory_space<vmem>>, vector<4x24xbf16>,
    %59 = vector.extract_strided_slice %12 {offsets = [0, 240], sizes = [4, 16], strides = [1, 1]} : vector<4x256xbf16> to vector<4x16xbf16>
    %60 = tpu.concatenate %59, %13 in 1 : vector<4x16xbf16>, vector<4x8xbf16> -> vector<4x24xbf16>
    %c0_30 = arith.constant 0 : index
    %c385 = arith.constant 385 : index
    %61 = vector.load %arg10[%c0_30, %c385] : memref<16x434xbf16, #tpu.memory_space<vmem>>, vector<4x24xbf16>
    tpu.vector_store %arg10[%c0_30, %c385], %60 {strides = array<i32>} : memref<16x434xbf16, #tpu.memory_space<vmem>>, vector<4x24xbf16>,
    %c0_31 = arith.constant 0 : index
    %c0_32 = arith.constant 0 : index
    %c0_33 = arith.constant 0 : index
    %62 = vector.load %arg2[%c0_31, %c0_32, %c0_33] : memref<1x8x64xf32, #tpu.memory_space<vmem>>, vector<1x8x64xf32>
    %63 = vector.shape_cast %62 : vector<1x8x64xf32> to vector<8x64xf32>
    %64 = arith.truncf %63 : vector<8x64xf32> to vector<8x64xbf16>
    %c0_34 = arith.constant 0 : index
    %c0_35 = arith.constant 0 : index
    %65 = vector.load %arg3[%c0_34, %c0_35] : memref<16x8xbf16, #tpu.memory_space<vmem>>, vector<16x8xbf16>
    %cst_36 = arith.constant dense<0.000000e+00> : vector<16x64xf32>
    %66 = tpu.matmul %65, %64, %cst_36 {dimension_numbers = #tpu.dot_dimension_numbers<[1], [0], [0], [1], [0, 0, 1, 1], [], []>} : vector<16x8xbf16>, vector<8x64xbf16>, vector<16x64xf32> -> vector<16x64xf32>
    %c0_37 = arith.constant 0 : index
    %c0_38 = arith.constant 0 : index
    %67 = vector.load %arg4[%c0_37, %c0_38] : memref<16x1xf32, #tpu.memory_space<vmem>>, vector<16x1xf32>
    %68 = vector.broadcast %67 : vector<16x1xf32> to vector<16x64xf32>
    %69 = arith.addf %66, %68 : vector<16x64xf32>
    %70 = arith.truncf %69 : vector<16x64xf32> to vector<16x64xbf16>
    %71 = tpu.iota {dimensions = array<i32: 0>} : vector<8x24xi32>
    %72 = tpu.iota {dimensions = array<i32: 1>} : vector<8x24xi32>
    %c2_i32 = arith.constant 2 : i32
    %73 = vector.broadcast %c2_i32 : i32 to vector<8x24xi32>
    %74 = arith.muli %73, %71 : vector<8x24xi32>
    %75 = arith.cmpi eq, %72, %74 : vector<8x24xi32>
    %76 = arith.extui %75 : vector<8x24xi1> to vector<8x24xi32>
    %77 = arith.sitofp %76 : vector<8x24xi32> to vector<8x24xf32>
    %78 = arith.truncf %77 : vector<8x24xf32> to vector<8x24xbf16>
    %c2_i32_39 = arith.constant 2 : i32
    %79 = vector.broadcast %c2_i32_39 : i32 to vector<8x24xi32>
    %80 = arith.muli %79, %71 : vector<8x24xi32>
    %c1_i32 = arith.constant 1 : i32
    %81 = vector.broadcast %c1_i32 : i32 to vector<8x24xi32>
    %82 = arith.addi %80, %81 : vector<8x24xi32>
    %83 = arith.cmpi eq, %72, %82 : vector<8x24xi32>
    %84 = arith.extui %83 : vector<8x24xi1> to vector<8x24xi32>
    %85 = arith.sitofp %84 : vector<8x24xi32> to vector<8x24xf32>
    %86 = arith.truncf %85 : vector<8x24xf32> to vector<8x24xbf16>
    %87 = vector.extract_strided_slice %70 {offsets = [0, 0], sizes = [16, 8], strides = [1, 1]} : vector<16x64xbf16> to vector<16x8xbf16>
    %88 = vector.extract_strided_slice %87 {offsets = [0, 0], sizes = [8, 8], strides = [1, 1]} : vector<16x8xbf16> to vector<8x8xbf16>
    %cst_40 = arith.constant dense<0.000000e+00> : vector<8x24xf32>
    %89 = tpu.matmul %88, %78, %cst_40 {dimension_numbers = #tpu.dot_dimension_numbers<[1], [0], [0], [1], [0, 0, 1, 1], [], []>} : vector<8x8xbf16>, vector<8x24xbf16>, vector<8x24xf32> -> vector<8x24xf32>
    %90 = vector.extract_strided_slice %87 {offsets = [8, 0], sizes = [8, 8], strides = [1, 1]} : vector<16x8xbf16> to vector<8x8xbf16>
    %cst_41 = arith.constant dense<0.000000e+00> : vector<8x24xf32>
    %91 = tpu.matmul %90, %86, %cst_41 {dimension_numbers = #tpu.dot_dimension_numbers<[1], [0], [0], [1], [0, 0, 1, 1], [], []>} : vector<8x8xbf16>, vector<8x24xbf16>, vector<8x24xf32> -> vector<8x24xf32>
    %92 = arith.addf %89, %91 : vector<8x24xf32>
    %93 = arith.truncf %92 : vector<8x24xf32> to vector<8x24xbf16>
    %94 = vector.extract_strided_slice %93 {offsets = [0, 0], sizes = [4, 24], strides = [1, 1]} : vector<8x24xbf16> to vector<4x24xbf16>
    %c4 = arith.constant 4 : index
    %c25_42 = arith.constant 25 : index
    %95 = vector.load %arg10[%c4, %c25_42] : memref<16x434xbf16, #tpu.memory_space<vmem>>, vector<4x24xbf16>
    tpu.vector_store %arg10[%c4, %c25_42], %94 {strides = array<i32>} : memref<16x434xbf16, #tpu.memory_space<vmem>>, vector<4x24xbf16>,
    %96 = vector.extract_strided_slice %93 {offsets = [4, 0], sizes = [4, 24], strides = [1, 1]} : vector<8x24xbf16> to vector<4x24xbf16>
    %c4_43 = arith.constant 4 : index
    %c49_44 = arith.constant 49 : index
    %97 = vector.load %arg10[%c4_43, %c49_44] : memref<16x434xbf16, #tpu.memory_space<vmem>>, vector<4x24xbf16>
    tpu.vector_store %arg10[%c4_43, %c49_44], %96 {strides = array<i32>} : memref<16x434xbf16, #tpu.memory_space<vmem>>, vector<4x24xbf16>,
    %98 = vector.extract_strided_slice %70 {offsets = [0, 8], sizes = [16, 8], strides = [1, 1]} : vector<16x64xbf16> to vector<16x8xbf16>
    %99 = vector.extract_strided_slice %98 {offsets = [0, 0], sizes = [8, 8], strides = [1, 1]} : vector<16x8xbf16> to vector<8x8xbf16>
    %cst_45 = arith.constant dense<0.000000e+00> : vector<8x24xf32>
    %100 = tpu.matmul %99, %78, %cst_45 {dimension_numbers = #tpu.dot_dimension_numbers<[1], [0], [0], [1], [0, 0, 1, 1], [], []>} : vector<8x8xbf16>, vector<8x24xbf16>, vector<8x24xf32> -> vector<8x24xf32>
    %101 = vector.extract_strided_slice %98 {offsets = [8, 0], sizes = [8, 8], strides = [1, 1]} : vector<16x8xbf16> to vector<8x8xbf16>
    %cst_46 = arith.constant dense<0.000000e+00> : vector<8x24xf32>
    %102 = tpu.matmul %101, %86, %cst_46 {dimension_numbers = #tpu.dot_dimension_numbers<[1], [0], [0], [1], [0, 0, 1, 1], [], []>} : vector<8x8xbf16>, vector<8x24xbf16>, vector<8x24xf32> -> vector<8x24xf32>
    %103 = arith.addf %100, %102 : vector<8x24xf32>
    %104 = arith.truncf %103 : vector<8x24xf32> to vector<8x24xbf16>
    %105 = vector.extract_strided_slice %104 {offsets = [0, 0], sizes = [4, 24], strides = [1, 1]} : vector<8x24xbf16> to vector<4x24xbf16>
    %c4_47 = arith.constant 4 : index
    %c73_48 = arith.constant 73 : index
    %106 = vector.load %arg10[%c4_47, %c73_48] : memref<16x434xbf16, #tpu.memory_space<vmem>>, vector<4x24xbf16>
    tpu.vector_store %arg10[%c4_47, %c73_48], %105 {strides = array<i32>} : memref<16x434xbf16, #tpu.memory_space<vmem>>, vector<4x24xbf16>,
    %107 = vector.extract_strided_slice %104 {offsets = [4, 0], sizes = [4, 24], strides = [1, 1]} : vector<8x24xbf16> to vector<4x24xbf16>
    %c4_49 = arith.constant 4 : index
    %c97_50 = arith.constant 97 : index
    %108 = vector.load %arg10[%c4_49, %c97_50] : memref<16x434xbf16, #tpu.memory_space<vmem>>, vector<4x24xbf16>
    tpu.vector_store %arg10[%c4_49, %c97_50], %107 {strides = array<i32>} : memref<16x434xbf16, #tpu.memory_space<vmem>>, vector<4x24xbf16>,
    %109 = vector.extract_strided_slice %70 {offsets = [0, 16], sizes = [16, 8], strides = [1, 1]} : vector<16x64xbf16> to vector<16x8xbf16>
    %110 = vector.extract_strided_slice %109 {offsets = [0, 0], sizes = [8, 8], strides = [1, 1]} : vector<16x8xbf16> to vector<8x8xbf16>
    %cst_51 = arith.constant dense<0.000000e+00> : vector<8x24xf32>
    %111 = tpu.matmul %110, %78, %cst_51 {dimension_numbers = #tpu.dot_dimension_numbers<[1], [0], [0], [1], [0, 0, 1, 1], [], []>} : vector<8x8xbf16>, vector<8x24xbf16>, vector<8x24xf32> -> vector<8x24xf32>
    %112 = vector.extract_strided_slice %109 {offsets = [8, 0], sizes = [8, 8], strides = [1, 1]} : vector<16x8xbf16> to vector<8x8xbf16>
    %cst_52 = arith.constant dense<0.000000e+00> : vector<8x24xf32>
    %113 = tpu.matmul %112, %86, %cst_52 {dimension_numbers = #tpu.dot_dimension_numbers<[1], [0], [0], [1], [0, 0, 1, 1], [], []>} : vector<8x8xbf16>, vector<8x24xbf16>, vector<8x24xf32> -> vector<8x24xf32>
    %114 = arith.addf %111, %113 : vector<8x24xf32>
    %115 = arith.truncf %114 : vector<8x24xf32> to vector<8x24xbf16>
    %116 = vector.extract_strided_slice %115 {offsets = [0, 0], sizes = [4, 24], strides = [1, 1]} : vector<8x24xbf16> to vector<4x24xbf16>
    %c4_53 = arith.constant 4 : index
    %c121_54 = arith.constant 121 : index
    %117 = vector.load %arg10[%c4_53, %c121_54] : memref<16x434xbf16, #tpu.memory_space<vmem>>, vector<4x24xbf16>
    tpu.vector_store %arg10[%c4_53, %c121_54], %116 {strides = array<i32>} : memref<16x434xbf16, #tpu.memory_space<vmem>>, vector<4x24xbf16>,
    %118 = vector.extract_strided_slice %115 {offsets = [4, 0], sizes = [4, 24], strides = [1, 1]} : vector<8x24xbf16> to vector<4x24xbf16>
    %c4_55 = arith.constant 4 : index
    %c145_56 = arith.constant 145 : index
    %119 = vector.load %arg10[%c4_55, %c145_56] : memref<16x434xbf16, #tpu.memory_space<vmem>>, vector<4x24xbf16>
    tpu.vector_store %arg10[%c4_55, %c145_56], %118 {strides = array<i32>} : memref<16x434xbf16, #tpu.memory_space<vmem>>, vector<4x24xbf16>,
    %120 = vector.extract_strided_slice %70 {offsets = [0, 24], sizes = [16, 8], strides = [1, 1]} : vector<16x64xbf16> to vector<16x8xbf16>
    %121 = vector.extract_strided_slice %120 {offsets = [0, 0], sizes = [8, 8], strides = [1, 1]} : vector<16x8xbf16> to vector<8x8xbf16>
    %cst_57 = arith.constant dense<0.000000e+00> : vector<8x24xf32>
    %122 = tpu.matmul %121, %78, %cst_57 {dimension_numbers = #tpu.dot_dimension_numbers<[1], [0], [0], [1], [0, 0, 1, 1], [], []>} : vector<8x8xbf16>, vector<8x24xbf16>, vector<8x24xf32> -> vector<8x24xf32>
    %123 = vector.extract_strided_slice %120 {offsets = [8, 0], sizes = [8, 8], strides = [1, 1]} : vector<16x8xbf16> to vector<8x8xbf16>
    %cst_58 = arith.constant dense<0.000000e+00> : vector<8x24xf32>
    %124 = tpu.matmul %123, %86, %cst_58 {dimension_numbers = #tpu.dot_dimension_numbers<[1], [0], [0], [1], [0, 0, 1, 1], [], []>} : vector<8x8xbf16>, vector<8x24xbf16>, vector<8x24xf32> -> vector<8x24xf32>
    %125 = arith.addf %122, %124 : vector<8x24xf32>
    %126 = arith.truncf %125 : vector<8x24xf32> to vector<8x24xbf16>
    %127 = vector.extract_strided_slice %126 {offsets = [0, 0], sizes = [4, 24], strides = [1, 1]} : vector<8x24xbf16> to vector<4x24xbf16>
    %c4_59 = arith.constant 4 : index
    %c169_60 = arith.constant 169 : index
    %128 = vector.load %arg10[%c4_59, %c169_60] : memref<16x434xbf16, #tpu.memory_space<vmem>>, vector<4x24xbf16>
    tpu.vector_store %arg10[%c4_59, %c169_60], %127 {strides = array<i32>} : memref<16x434xbf16, #tpu.memory_space<vmem>>, vector<4x24xbf16>,
    %129 = vector.extract_strided_slice %126 {offsets = [4, 0], sizes = [4, 24], strides = [1, 1]} : vector<8x24xbf16> to vector<4x24xbf16>
    %c4_61 = arith.constant 4 : index
    %c193_62 = arith.constant 193 : index
    %130 = vector.load %arg10[%c4_61, %c193_62] : memref<16x434xbf16, #tpu.memory_space<vmem>>, vector<4x24xbf16>
    tpu.vector_store %arg10[%c4_61, %c193_62], %129 {strides = array<i32>} : memref<16x434xbf16, #tpu.memory_space<vmem>>, vector<4x24xbf16>,
    %131 = vector.extract_strided_slice %70 {offsets = [0, 32], sizes = [16, 8], strides = [1, 1]} : vector<16x64xbf16> to vector<16x8xbf16>
    %132 = vector.extract_strided_slice %131 {offsets = [0, 0], sizes = [8, 8], strides = [1, 1]} : vector<16x8xbf16> to vector<8x8xbf16>
    %cst_63 = arith.constant dense<0.000000e+00> : vector<8x24xf32>
    %133 = tpu.matmul %132, %78, %cst_63 {dimension_numbers = #tpu.dot_dimension_numbers<[1], [0], [0], [1], [0, 0, 1, 1], [], []>} : vector<8x8xbf16>, vector<8x24xbf16>, vector<8x24xf32> -> vector<8x24xf32>
    %134 = vector.extract_strided_slice %131 {offsets = [8, 0], sizes = [8, 8], strides = [1, 1]} : vector<16x8xbf16> to vector<8x8xbf16>
    %cst_64 = arith.constant dense<0.000000e+00> : vector<8x24xf32>
    %135 = tpu.matmul %134, %86, %cst_64 {dimension_numbers = #tpu.dot_dimension_numbers<[1], [0], [0], [1], [0, 0, 1, 1], [], []>} : vector<8x8xbf16>, vector<8x24xbf16>, vector<8x24xf32> -> vector<8x24xf32>
    %136 = arith.addf %133, %135 : vector<8x24xf32>
    %137 = arith.truncf %136 : vector<8x24xf32> to vector<8x24xbf16>
    %138 = vector.extract_strided_slice %137 {offsets = [0, 0], sizes = [4, 24], strides = [1, 1]} : vector<8x24xbf16> to vector<4x24xbf16>
    %c4_65 = arith.constant 4 : index
    %c217_66 = arith.constant 217 : index
    %139 = vector.load %arg10[%c4_65, %c217_66] : memref<16x434xbf16, #tpu.memory_space<vmem>>, vector<4x24xbf16>
    tpu.vector_store %arg10[%c4_65, %c217_66], %138 {strides = array<i32>} : memref<16x434xbf16, #tpu.memory_space<vmem>>, vector<4x24xbf16>,
    %140 = vector.extract_strided_slice %137 {offsets = [4, 0], sizes = [4, 24], strides = [1, 1]} : vector<8x24xbf16> to vector<4x24xbf16>
    %c4_67 = arith.constant 4 : index
    %c241_68 = arith.constant 241 : index
    %141 = vector.load %arg10[%c4_67, %c241_68] : memref<16x434xbf16, #tpu.memory_space<vmem>>, vector<4x24xbf16>
    tpu.vector_store %arg10[%c4_67, %c241_68], %140 {strides = array<i32>} : memref<16x434xbf16, #tpu.memory_space<vmem>>, vector<4x24xbf16>,
    %142 = vector.extract_strided_slice %70 {offsets = [0, 40], sizes = [16, 8], strides = [1, 1]} : vector<16x64xbf16> to vector<16x8xbf16>
    %143 = vector.extract_strided_slice %142 {offsets = [0, 0], sizes = [8, 8], strides = [1, 1]} : vector<16x8xbf16> to vector<8x8xbf16>
    %cst_69 = arith.constant dense<0.000000e+00> : vector<8x24xf32>
    %144 = tpu.matmul %143, %78, %cst_69 {dimension_numbers = #tpu.dot_dimension_numbers<[1], [0], [0], [1], [0, 0, 1, 1], [], []>} : vector<8x8xbf16>, vector<8x24xbf16>, vector<8x24xf32> -> vector<8x24xf32>
    %145 = vector.extract_strided_slice %142 {offsets = [8, 0], sizes = [8, 8], strides = [1, 1]} : vector<16x8xbf16> to vector<8x8xbf16>
    %cst_70 = arith.constant dense<0.000000e+00> : vector<8x24xf32>
    %146 = tpu.matmul %145, %86, %cst_70 {dimension_numbers = #tpu.dot_dimension_numbers<[1], [0], [0], [1], [0, 0, 1, 1], [], []>} : vector<8x8xbf16>, vector<8x24xbf16>, vector<8x24xf32> -> vector<8x24xf32>
    %147 = arith.addf %144, %146 : vector<8x24xf32>
    %148 = arith.truncf %147 : vector<8x24xf32> to vector<8x24xbf16>
    %149 = vector.extract_strided_slice %148 {offsets = [0, 0], sizes = [4, 24], strides = [1, 1]} : vector<8x24xbf16> to vector<4x24xbf16>
    %c4_71 = arith.constant 4 : index
    %c265_72 = arith.constant 265 : index
    %150 = vector.load %arg10[%c4_71, %c265_72] : memref<16x434xbf16, #tpu.memory_space<vmem>>, vector<4x24xbf16>
    tpu.vector_store %arg10[%c4_71, %c265_72], %149 {strides = array<i32>} : memref<16x434xbf16, #tpu.memory_space<vmem>>, vector<4x24xbf16>,
    %151 = vector.extract_strided_slice %148 {offsets = [4, 0], sizes = [4, 24], strides = [1, 1]} : vector<8x24xbf16> to vector<4x24xbf16>
    %c4_73 = arith.constant 4 : index
    %c289_74 = arith.constant 289 : index
    %152 = vector.load %arg10[%c4_73, %c289_74] : memref<16x434xbf16, #tpu.memory_space<vmem>>, vector<4x24xbf16>
    tpu.vector_store %arg10[%c4_73, %c289_74], %151 {strides = array<i32>} : memref<16x434xbf16, #tpu.memory_space<vmem>>, vector<4x24xbf16>,
    %153 = vector.extract_strided_slice %70 {offsets = [0, 48], sizes = [16, 8], strides = [1, 1]} : vector<16x64xbf16> to vector<16x8xbf16>
    %154 = vector.extract_strided_slice %153 {offsets = [0, 0], sizes = [8, 8], strides = [1, 1]} : vector<16x8xbf16> to vector<8x8xbf16>
    %cst_75 = arith.constant dense<0.000000e+00> : vector<8x24xf32>
    %155 = tpu.matmul %154, %78, %cst_75 {dimension_numbers = #tpu.dot_dimension_numbers<[1], [0], [0], [1], [0, 0, 1, 1], [], []>} : vector<8x8xbf16>, vector<8x24xbf16>, vector<8x24xf32> -> vector<8x24xf32>
    %156 = vector.extract_strided_slice %153 {offsets = [8, 0], sizes = [8, 8], strides = [1, 1]} : vector<16x8xbf16> to vector<8x8xbf16>
    %cst_76 = arith.constant dense<0.000000e+00> : vector<8x24xf32>
    %157 = tpu.matmul %156, %86, %cst_76 {dimension_numbers = #tpu.dot_dimension_numbers<[1], [0], [0], [1], [0, 0, 1, 1], [], []>} : vector<8x8xbf16>, vector<8x24xbf16>, vector<8x24xf32> -> vector<8x24xf32>
    %158 = arith.addf %155, %157 : vector<8x24xf32>
    %159 = arith.truncf %158 : vector<8x24xf32> to vector<8x24xbf16>
    %160 = vector.extract_strided_slice %159 {offsets = [0, 0], sizes = [4, 24], strides = [1, 1]} : vector<8x24xbf16> to vector<4x24xbf16>
    %c4_77 = arith.constant 4 : index
    %c313_78 = arith.constant 313 : index
    %161 = vector.load %arg10[%c4_77, %c313_78] : memref<16x434xbf16, #tpu.memory_space<vmem>>, vector<4x24xbf16>
    tpu.vector_store %arg10[%c4_77, %c313_78], %160 {strides = array<i32>} : memref<16x434xbf16, #tpu.memory_space<vmem>>, vector<4x24xbf16>,
    %162 = vector.extract_strided_slice %159 {offsets = [4, 0], sizes = [4, 24], strides = [1, 1]} : vector<8x24xbf16> to vector<4x24xbf16>
    %c4_79 = arith.constant 4 : index
    %c337_80 = arith.constant 337 : index
    %163 = vector.load %arg10[%c4_79, %c337_80] : memref<16x434xbf16, #tpu.memory_space<vmem>>, vector<4x24xbf16>
    tpu.vector_store %arg10[%c4_79, %c337_80], %162 {strides = array<i32>} : memref<16x434xbf16, #tpu.memory_space<vmem>>, vector<4x24xbf16>,
    %164 = vector.extract_strided_slice %70 {offsets = [0, 56], sizes = [16, 8], strides = [1, 1]} : vector<16x64xbf16> to vector<16x8xbf16>
    %165 = vector.extract_strided_slice %164 {offsets = [0, 0], sizes = [8, 8], strides = [1, 1]} : vector<16x8xbf16> to vector<8x8xbf16>
    %cst_81 = arith.constant dense<0.000000e+00> : vector<8x24xf32>
    %166 = tpu.matmul %165, %78, %cst_81 {dimension_numbers = #tpu.dot_dimension_numbers<[1], [0], [0], [1], [0, 0, 1, 1], [], []>} : vector<8x8xbf16>, vector<8x24xbf16>, vector<8x24xf32> -> vector<8x24xf32>
    %167 = vector.extract_strided_slice %164 {offsets = [8, 0], sizes = [8, 8], strides = [1, 1]} : vector<16x8xbf16> to vector<8x8xbf16>
    %cst_82 = arith.constant dense<0.000000e+00> : vector<8x24xf32>
    %168 = tpu.matmul %167, %86, %cst_82 {dimension_numbers = #tpu.dot_dimension_numbers<[1], [0], [0], [1], [0, 0, 1, 1], [], []>} : vector<8x8xbf16>, vector<8x24xbf16>, vector<8x24xf32> -> vector<8x24xf32>
    %169 = arith.addf %166, %168 : vector<8x24xf32>
    %170 = arith.truncf %169 : vector<8x24xf32> to vector<8x24xbf16>
    %171 = vector.extract_strided_slice %170 {offsets = [0, 0], sizes = [4, 24], strides = [1, 1]} : vector<8x24xbf16> to vector<4x24xbf16>
    %c4_83 = arith.constant 4 : index
    %c361_84 = arith.constant 361 : index
    %172 = vector.load %arg10[%c4_83, %c361_84] : memref<16x434xbf16, #tpu.memory_space<vmem>>, vector<4x24xbf16>
    tpu.vector_store %arg10[%c4_83, %c361_84], %171 {strides = array<i32>} : memref<16x434xbf16, #tpu.memory_space<vmem>>, vector<4x24xbf16>,
    %173 = vector.extract_strided_slice %170 {offsets = [4, 0], sizes = [4, 24], strides = [1, 1]} : vector<8x24xbf16> to vector<4x24xbf16>
    %c4_85 = arith.constant 4 : index
    %c385_86 = arith.constant 385 : index
    %174 = vector.load %arg10[%c4_85, %c385_86] : memref<16x434xbf16, #tpu.memory_space<vmem>>, vector<4x24xbf16>
    tpu.vector_store %arg10[%c4_85, %c385_86], %173 {strides = array<i32>} : memref<16x434xbf16, #tpu.memory_space<vmem>>, vector<4x24xbf16>,
    %175 = tpu.iota {dimensions = array<i32: 1>} : vector<1x384xi32>
    %c24_i32 = arith.constant 24 : i32
    %c0_i32 = arith.constant 0 : i32
    %176 = arith.cmpi eq, %c24_i32, %c0_i32 : i32
    %c1_i32_87 = arith.constant 1 : i32
    %177 = arith.select %176, %c1_i32_87, %c24_i32 : i32
    %178 = vector.broadcast %177 : i32 to vector<1x384xi32>
    %179 = arith.remsi %175, %178 : vector<1x384xi32>
    %c0_i32_88 = arith.constant 0 : i32
    %180 = vector.broadcast %c0_i32_88 : i32 to vector<1x384xi32>
    %181 = arith.cmpi ne, %179, %180 : vector<1x384xi32>
    %c0_i32_89 = arith.constant 0 : i32
    %182 = vector.broadcast %c0_i32_89 : i32 to vector<1x384xi32>
    %183 = arith.cmpi slt, %179, %182 : vector<1x384xi32>
    %c0_i32_90 = arith.constant 0 : i32
    %184 = arith.cmpi slt, %177, %c0_i32_90 : i32
    %185 = vector.broadcast %184 : i1 to vector<1x384xi1>
    %186 = vector.broadcast %185 : vector<1x384xi1> to vector<1x384xi1>
    %187 = arith.xori %183, %186 : vector<1x384xi1>
    %188 = arith.andi %187, %181 : vector<1x384xi1>
    %189 = vector.broadcast %177 : i32 to vector<1x384xi32>
    %190 = arith.addi %179, %189 : vector<1x384xi32>
    %191 = arith.select %188, %190, %179 : vector<1x384xi1>, vector<1x384xi32>
    %c16_i32 = arith.constant 16 : i32
    %192 = vector.broadcast %c16_i32 : i32 to vector<1x384xi32>
    %193 = arith.cmpi slt, %191, %192 : vector<1x384xi32>
    %194 = arith.extui %193 : vector<1x384xi1> to vector<1x384xi32>
    %195 = arith.sitofp %194 : vector<1x384xi32> to vector<1x384xf32>
    %cst_91 = arith.constant 0.000000e+00 : f32
    %196 = vector.broadcast %cst_91 : f32 to vector<16x384xf32>
    %c0_92 = arith.constant 0 : index
    %c0_93 = arith.constant 0 : index
    %c0_94 = arith.constant 0 : index
    %197 = vector.load %arg5[%c0_92, %c0_93, %c0_94] : memref<9x16x16xbf16, #tpu.memory_space<vmem>>, vector<1x16x16xbf16>
    %198 = vector.shape_cast %197 : vector<1x16x16xbf16> to vector<16x16xbf16>
    %c0_95 = arith.constant 0 : index
    %c0_96 = arith.constant 0 : index
    %199 = vector.load %arg10[%c0_95, %c0_96] : memref<16x434xbf16, #tpu.memory_space<vmem>>, vector<16x384xbf16>
    %cst_97 = arith.constant dense<0.000000e+00> : vector<16x384xf32>
    %200 = tpu.matmul %198, %199, %cst_97 {dimension_numbers = #tpu.dot_dimension_numbers<[1], [0], [0], [1], [0, 0, 1, 1], [], []>} : vector<16x16xbf16>, vector<16x384xbf16>, vector<16x384xf32> -> vector<16x384xf32>
    %201 = arith.addf %196, %200 : vector<16x384xf32>
    %c1 = arith.constant 1 : index
    %c0_98 = arith.constant 0 : index
    %c0_99 = arith.constant 0 : index
    %202 = vector.load %arg5[%c1, %c0_98, %c0_99] : memref<9x16x16xbf16, #tpu.memory_space<vmem>>, vector<1x16x16xbf16>
    %203 = vector.shape_cast %202 : vector<1x16x16xbf16> to vector<16x16xbf16>
    %c0_100 = arith.constant 0 : index
    %c1_101 = arith.constant 1 : index
    %204 = vector.load %arg10[%c0_100, %c1_101] : memref<16x434xbf16, #tpu.memory_space<vmem>>, vector<16x384xbf16>
    %cst_102 = arith.constant dense<0.000000e+00> : vector<16x384xf32>
    %205 = tpu.matmul %203, %204, %cst_102 {dimension_numbers = #tpu.dot_dimension_numbers<[1], [0], [0], [1], [0, 0, 1, 1], [], []>} : vector<16x16xbf16>, vector<16x384xbf16>, vector<16x384xf32> -> vector<16x384xf32>
    %206 = arith.addf %201, %205 : vector<16x384xf32>
    %c2 = arith.constant 2 : index
    %c0_103 = arith.constant 0 : index
    %c0_104 = arith.constant 0 : index
    %207 = vector.load %arg5[%c2, %c0_103, %c0_104] : memref<9x16x16xbf16, #tpu.memory_space<vmem>>, vector<1x16x16xbf16>
    %208 = vector.shape_cast %207 : vector<1x16x16xbf16> to vector<16x16xbf16>
    %c0_105 = arith.constant 0 : index
    %c2_106 = arith.constant 2 : index
    %209 = vector.load %arg10[%c0_105, %c2_106] : memref<16x434xbf16, #tpu.memory_space<vmem>>, vector<16x384xbf16>
    %cst_107 = arith.constant dense<0.000000e+00> : vector<16x384xf32>
    %210 = tpu.matmul %208, %209, %cst_107 {dimension_numbers = #tpu.dot_dimension_numbers<[1], [0], [0], [1], [0, 0, 1, 1], [], []>} : vector<16x16xbf16>, vector<16x384xbf16>, vector<16x384xf32> -> vector<16x384xf32>
    %211 = arith.addf %206, %210 : vector<16x384xf32>
    %c3 = arith.constant 3 : index
    %c0_108 = arith.constant 0 : index
    %c0_109 = arith.constant 0 : index
    %212 = vector.load %arg5[%c3, %c0_108, %c0_109] : memref<9x16x16xbf16, #tpu.memory_space<vmem>>, vector<1x16x16xbf16>
    %213 = vector.shape_cast %212 : vector<1x16x16xbf16> to vector<16x16xbf16>
    %c0_110 = arith.constant 0 : index
    %c24 = arith.constant 24 : index
    %214 = vector.load %arg10[%c0_110, %c24] : memref<16x434xbf16, #tpu.memory_space<vmem>>, vector<16x384xbf16>
    %cst_111 = arith.constant dense<0.000000e+00> : vector<16x384xf32>
    %215 = tpu.matmul %213, %214, %cst_111 {dimension_numbers = #tpu.dot_dimension_numbers<[1], [0], [0], [1], [0, 0, 1, 1], [], []>} : vector<16x16xbf16>, vector<16x384xbf16>, vector<16x384xf32> -> vector<16x384xf32>
    %216 = arith.addf %211, %215 : vector<16x384xf32>
    %c4_112 = arith.constant 4 : index
    %c0_113 = arith.constant 0 : index
    %c0_114 = arith.constant 0 : index
    %217 = vector.load %arg5[%c4_112, %c0_113, %c0_114] : memref<9x16x16xbf16, #tpu.memory_space<vmem>>, vector<1x16x16xbf16>
    %218 = vector.shape_cast %217 : vector<1x16x16xbf16> to vector<16x16xbf16>
    %c0_115 = arith.constant 0 : index
    %c25_116 = arith.constant 25 : index
    %219 = vector.load %arg10[%c0_115, %c25_116] : memref<16x434xbf16, #tpu.memory_space<vmem>>, vector<16x384xbf16>
    %cst_117 = arith.constant dense<0.000000e+00> : vector<16x384xf32>
    %220 = tpu.matmul %218, %219, %cst_117 {dimension_numbers = #tpu.dot_dimension_numbers<[1], [0], [0], [1], [0, 0, 1, 1], [], []>} : vector<16x16xbf16>, vector<16x384xbf16>, vector<16x384xf32> -> vector<16x384xf32>
    %221 = arith.addf %216, %220 : vector<16x384xf32>
    %c5 = arith.constant 5 : index
    %c0_118 = arith.constant 0 : index
    %c0_119 = arith.constant 0 : index
    %222 = vector.load %arg5[%c5, %c0_118, %c0_119] : memref<9x16x16xbf16, #tpu.memory_space<vmem>>, vector<1x16x16xbf16>
    %223 = vector.shape_cast %222 : vector<1x16x16xbf16> to vector<16x16xbf16>
    %c0_120 = arith.constant 0 : index
    %c26 = arith.constant 26 : index
    %224 = vector.load %arg10[%c0_120, %c26] : memref<16x434xbf16, #tpu.memory_space<vmem>>, vector<16x384xbf16>
    %cst_121 = arith.constant dense<0.000000e+00> : vector<16x384xf32>
    %225 = tpu.matmul %223, %224, %cst_121 {dimension_numbers = #tpu.dot_dimension_numbers<[1], [0], [0], [1], [0, 0, 1, 1], [], []>} : vector<16x16xbf16>, vector<16x384xbf16>, vector<16x384xf32> -> vector<16x384xf32>
    %226 = arith.addf %221, %225 : vector<16x384xf32>
    %c6 = arith.constant 6 : index
    %c0_122 = arith.constant 0 : index
    %c0_123 = arith.constant 0 : index
    %227 = vector.load %arg5[%c6, %c0_122, %c0_123] : memref<9x16x16xbf16, #tpu.memory_space<vmem>>, vector<1x16x16xbf16>
    %228 = vector.shape_cast %227 : vector<1x16x16xbf16> to vector<16x16xbf16>
    %c0_124 = arith.constant 0 : index
    %c48 = arith.constant 48 : index
    %229 = vector.load %arg10[%c0_124, %c48] : memref<16x434xbf16, #tpu.memory_space<vmem>>, vector<16x384xbf16>
    %cst_125 = arith.constant dense<0.000000e+00> : vector<16x384xf32>
    %230 = tpu.matmul %228, %229, %cst_125 {dimension_numbers = #tpu.dot_dimension_numbers<[1], [0], [0], [1], [0, 0, 1, 1], [], []>} : vector<16x16xbf16>, vector<16x384xbf16>, vector<16x384xf32> -> vector<16x384xf32>
    %231 = arith.addf %226, %230 : vector<16x384xf32>
    %c7 = arith.constant 7 : index
    %c0_126 = arith.constant 0 : index
    %c0_127 = arith.constant 0 : index
    %232 = vector.load %arg5[%c7, %c0_126, %c0_127] : memref<9x16x16xbf16, #tpu.memory_space<vmem>>, vector<1x16x16xbf16>
    %233 = vector.shape_cast %232 : vector<1x16x16xbf16> to vector<16x16xbf16>
    %c0_128 = arith.constant 0 : index
    %c49_129 = arith.constant 49 : index
    %234 = vector.load %arg10[%c0_128, %c49_129] : memref<16x434xbf16, #tpu.memory_space<vmem>>, vector<16x384xbf16>
    %cst_130 = arith.constant dense<0.000000e+00> : vector<16x384xf32>
    %235 = tpu.matmul %233, %234, %cst_130 {dimension_numbers = #tpu.dot_dimension_numbers<[1], [0], [0], [1], [0, 0, 1, 1], [], []>} : vector<16x16xbf16>, vector<16x384xbf16>, vector<16x384xf32> -> vector<16x384xf32>
    %236 = arith.addf %231, %235 : vector<16x384xf32>
    %c8_131 = arith.constant 8 : index
    %c0_132 = arith.constant 0 : index
    %c0_133 = arith.constant 0 : index
    %237 = vector.load %arg5[%c8_131, %c0_132, %c0_133] : memref<9x16x16xbf16, #tpu.memory_space<vmem>>, vector<1x16x16xbf16>
    %238 = vector.shape_cast %237 : vector<1x16x16xbf16> to vector<16x16xbf16>
    %c0_134 = arith.constant 0 : index
    %c50 = arith.constant 50 : index
    %239 = vector.load %arg10[%c0_134, %c50] : memref<16x434xbf16, #tpu.memory_space<vmem>>, vector<16x384xbf16>
    %cst_135 = arith.constant dense<0.000000e+00> : vector<16x384xf32>
    %240 = tpu.matmul %238, %239, %cst_135 {dimension_numbers = #tpu.dot_dimension_numbers<[1], [0], [0], [1], [0, 0, 1, 1], [], []>} : vector<16x16xbf16>, vector<16x384xbf16>, vector<16x384xf32> -> vector<16x384xf32>
    %241 = arith.addf %236, %240 : vector<16x384xf32>
    %c0_136 = arith.constant 0 : index
    %c0_137 = arith.constant 0 : index
    %242 = vector.load %arg6[%c0_136, %c0_137] : memref<16x1xf32, #tpu.memory_space<vmem>>, vector<16x1xf32>
    %243 = vector.broadcast %242 : vector<16x1xf32> to vector<16x384xf32>
    %244 = arith.addf %241, %243 : vector<16x384xf32>
    %cst_138 = arith.constant 0.000000e+00 : f32
    %245 = vector.broadcast %cst_138 : f32 to vector<16x384xf32>
    %246 = arith.maximumf %244, %245 : vector<16x384xf32>
    %247 = vector.broadcast %195 : vector<1x384xf32> to vector<16x384xf32>
    %248 = arith.mulf %246, %247 : vector<16x384xf32>
    %249 = arith.truncf %248 : vector<16x384xf32> to vector<16x384xbf16>
    %c0_139 = arith.constant 0 : index
    %c25_140 = arith.constant 25 : index
    %250 = vector.load %arg11[%c0_139, %c25_140] : memref<16x434xbf16, #tpu.memory_space<vmem>>, vector<16x384xbf16>
    tpu.vector_store %arg11[%c0_139, %c25_140], %249 {strides = array<i32>} : memref<16x434xbf16, #tpu.memory_space<vmem>>, vector<16x384xbf16>,
    %cst_141 = arith.constant 0.000000e+00 : f32
    %251 = vector.broadcast %cst_141 : f32 to vector<16x384xf32>
    %c0_142 = arith.constant 0 : index
    %c0_143 = arith.constant 0 : index
    %c0_144 = arith.constant 0 : index
    %252 = vector.load %arg7[%c0_142, %c0_143, %c0_144] : memref<9x16x16xbf16, #tpu.memory_space<vmem>>, vector<1x16x16xbf16>
    %253 = vector.shape_cast %252 : vector<1x16x16xbf16> to vector<16x16xbf16>
    %c0_145 = arith.constant 0 : index
    %c0_146 = arith.constant 0 : index
    %254 = vector.load %arg11[%c0_145, %c0_146] : memref<16x434xbf16, #tpu.memory_space<vmem>>, vector<16x384xbf16>
    %cst_147 = arith.constant dense<0.000000e+00> : vector<16x384xf32>
    %255 = tpu.matmul %253, %254, %cst_147 {dimension_numbers = #tpu.dot_dimension_numbers<[1], [0], [0], [1], [0, 0, 1, 1], [], []>} : vector<16x16xbf16>, vector<16x384xbf16>, vector<16x384xf32> -> vector<16x384xf32>
    %256 = arith.addf %251, %255 : vector<16x384xf32>
    %c1_148 = arith.constant 1 : index
    %c0_149 = arith.constant 0 : index
    %c0_150 = arith.constant 0 : index
    %257 = vector.load %arg7[%c1_148, %c0_149, %c0_150] : memref<9x16x16xbf16, #tpu.memory_space<vmem>>, vector<1x16x16xbf16>
    %258 = vector.shape_cast %257 : vector<1x16x16xbf16> to vector<16x16xbf16>
    %c0_151 = arith.constant 0 : index
    %c1_152 = arith.constant 1 : index
    %259 = vector.load %arg11[%c0_151, %c1_152] : memref<16x434xbf16, #tpu.memory_space<vmem>>, vector<16x384xbf16>
    %cst_153 = arith.constant dense<0.000000e+00> : vector<16x384xf32>
    %260 = tpu.matmul %258, %259, %cst_153 {dimension_numbers = #tpu.dot_dimension_numbers<[1], [0], [0], [1], [0, 0, 1, 1], [], []>} : vector<16x16xbf16>, vector<16x384xbf16>, vector<16x384xf32> -> vector<16x384xf32>
    %261 = arith.addf %256, %260 : vector<16x384xf32>
    %c2_154 = arith.constant 2 : index
    %c0_155 = arith.constant 0 : index
    %c0_156 = arith.constant 0 : index
    %262 = vector.load %arg7[%c2_154, %c0_155, %c0_156] : memref<9x16x16xbf16, #tpu.memory_space<vmem>>, vector<1x16x16xbf16>
    %263 = vector.shape_cast %262 : vector<1x16x16xbf16> to vector<16x16xbf16>
    %c0_157 = arith.constant 0 : index
    %c2_158 = arith.constant 2 : index
    %264 = vector.load %arg11[%c0_157, %c2_158] : memref<16x434xbf16, #tpu.memory_space<vmem>>, vector<16x384xbf16>
    %cst_159 = arith.constant dense<0.000000e+00> : vector<16x384xf32>
    %265 = tpu.matmul %263, %264, %cst_159 {dimension_numbers = #tpu.dot_dimension_numbers<[1], [0], [0], [1], [0, 0, 1, 1], [], []>} : vector<16x16xbf16>, vector<16x384xbf16>, vector<16x384xf32> -> vector<16x384xf32>
    %266 = arith.addf %261, %265 : vector<16x384xf32>
    %c3_160 = arith.constant 3 : index
    %c0_161 = arith.constant 0 : index
    %c0_162 = arith.constant 0 : index
    %267 = vector.load %arg7[%c3_160, %c0_161, %c0_162] : memref<9x16x16xbf16, #tpu.memory_space<vmem>>, vector<1x16x16xbf16>
    %268 = vector.shape_cast %267 : vector<1x16x16xbf16> to vector<16x16xbf16>
    %c0_163 = arith.constant 0 : index
    %c24_164 = arith.constant 24 : index
    %269 = vector.load %arg11[%c0_163, %c24_164] : memref<16x434xbf16, #tpu.memory_space<vmem>>, vector<16x384xbf16>
    %cst_165 = arith.constant dense<0.000000e+00> : vector<16x384xf32>
    %270 = tpu.matmul %268, %269, %cst_165 {dimension_numbers = #tpu.dot_dimension_numbers<[1], [0], [0], [1], [0, 0, 1, 1], [], []>} : vector<16x16xbf16>, vector<16x384xbf16>, vector<16x384xf32> -> vector<16x384xf32>
    %271 = arith.addf %266, %270 : vector<16x384xf32>
    %c4_166 = arith.constant 4 : index
    %c0_167 = arith.constant 0 : index
    %c0_168 = arith.constant 0 : index
    %272 = vector.load %arg7[%c4_166, %c0_167, %c0_168] : memref<9x16x16xbf16, #tpu.memory_space<vmem>>, vector<1x16x16xbf16>
    %273 = vector.shape_cast %272 : vector<1x16x16xbf16> to vector<16x16xbf16>
    %c0_169 = arith.constant 0 : index
    %c25_170 = arith.constant 25 : index
    %274 = vector.load %arg11[%c0_169, %c25_170] : memref<16x434xbf16, #tpu.memory_space<vmem>>, vector<16x384xbf16>
    %cst_171 = arith.constant dense<0.000000e+00> : vector<16x384xf32>
    %275 = tpu.matmul %273, %274, %cst_171 {dimension_numbers = #tpu.dot_dimension_numbers<[1], [0], [0], [1], [0, 0, 1, 1], [], []>} : vector<16x16xbf16>, vector<16x384xbf16>, vector<16x384xf32> -> vector<16x384xf32>
    %276 = arith.addf %271, %275 : vector<16x384xf32>
    %c5_172 = arith.constant 5 : index
    %c0_173 = arith.constant 0 : index
    %c0_174 = arith.constant 0 : index
    %277 = vector.load %arg7[%c5_172, %c0_173, %c0_174] : memref<9x16x16xbf16, #tpu.memory_space<vmem>>, vector<1x16x16xbf16>
    %278 = vector.shape_cast %277 : vector<1x16x16xbf16> to vector<16x16xbf16>
    %c0_175 = arith.constant 0 : index
    %c26_176 = arith.constant 26 : index
    %279 = vector.load %arg11[%c0_175, %c26_176] : memref<16x434xbf16, #tpu.memory_space<vmem>>, vector<16x384xbf16>
    %cst_177 = arith.constant dense<0.000000e+00> : vector<16x384xf32>
    %280 = tpu.matmul %278, %279, %cst_177 {dimension_numbers = #tpu.dot_dimension_numbers<[1], [0], [0], [1], [0, 0, 1, 1], [], []>} : vector<16x16xbf16>, vector<16x384xbf16>, vector<16x384xf32> -> vector<16x384xf32>
    %281 = arith.addf %276, %280 : vector<16x384xf32>
    %c6_178 = arith.constant 6 : index
    %c0_179 = arith.constant 0 : index
    %c0_180 = arith.constant 0 : index
    %282 = vector.load %arg7[%c6_178, %c0_179, %c0_180] : memref<9x16x16xbf16, #tpu.memory_space<vmem>>, vector<1x16x16xbf16>
    %283 = vector.shape_cast %282 : vector<1x16x16xbf16> to vector<16x16xbf16>
    %c0_181 = arith.constant 0 : index
    %c48_182 = arith.constant 48 : index
    %284 = vector.load %arg11[%c0_181, %c48_182] : memref<16x434xbf16, #tpu.memory_space<vmem>>, vector<16x384xbf16>
    %cst_183 = arith.constant dense<0.000000e+00> : vector<16x384xf32>
    %285 = tpu.matmul %283, %284, %cst_183 {dimension_numbers = #tpu.dot_dimension_numbers<[1], [0], [0], [1], [0, 0, 1, 1], [], []>} : vector<16x16xbf16>, vector<16x384xbf16>, vector<16x384xf32> -> vector<16x384xf32>
    %286 = arith.addf %281, %285 : vector<16x384xf32>
    %c7_184 = arith.constant 7 : index
    %c0_185 = arith.constant 0 : index
    %c0_186 = arith.constant 0 : index
    %287 = vector.load %arg7[%c7_184, %c0_185, %c0_186] : memref<9x16x16xbf16, #tpu.memory_space<vmem>>, vector<1x16x16xbf16>
    %288 = vector.shape_cast %287 : vector<1x16x16xbf16> to vector<16x16xbf16>
    %c0_187 = arith.constant 0 : index
    %c49_188 = arith.constant 49 : index
    %289 = vector.load %arg11[%c0_187, %c49_188] : memref<16x434xbf16, #tpu.memory_space<vmem>>, vector<16x384xbf16>
    %cst_189 = arith.constant dense<0.000000e+00> : vector<16x384xf32>
    %290 = tpu.matmul %288, %289, %cst_189 {dimension_numbers = #tpu.dot_dimension_numbers<[1], [0], [0], [1], [0, 0, 1, 1], [], []>} : vector<16x16xbf16>, vector<16x384xbf16>, vector<16x384xf32> -> vector<16x384xf32>
    %291 = arith.addf %286, %290 : vector<16x384xf32>
    %c8_190 = arith.constant 8 : index
    %c0_191 = arith.constant 0 : index
    %c0_192 = arith.constant 0 : index
    %292 = vector.load %arg7[%c8_190, %c0_191, %c0_192] : memref<9x16x16xbf16, #tpu.memory_space<vmem>>, vector<1x16x16xbf16>
    %293 = vector.shape_cast %292 : vector<1x16x16xbf16> to vector<16x16xbf16>
    %c0_193 = arith.constant 0 : index
    %c50_194 = arith.constant 50 : index
    %294 = vector.load %arg11[%c0_193, %c50_194] : memref<16x434xbf16, #tpu.memory_space<vmem>>, vector<16x384xbf16>
    %cst_195 = arith.constant dense<0.000000e+00> : vector<16x384xf32>
    %295 = tpu.matmul %293, %294, %cst_195 {dimension_numbers = #tpu.dot_dimension_numbers<[1], [0], [0], [1], [0, 0, 1, 1], [], []>} : vector<16x16xbf16>, vector<16x384xbf16>, vector<16x384xf32> -> vector<16x384xf32>
    %296 = arith.addf %291, %295 : vector<16x384xf32>
    %c0_196 = arith.constant 0 : index
    %c0_197 = arith.constant 0 : index
    %297 = vector.load %arg8[%c0_196, %c0_197] : memref<16x1xf32, #tpu.memory_space<vmem>>, vector<16x1xf32>
    %298 = vector.broadcast %297 : vector<16x1xf32> to vector<16x384xf32>
    %299 = arith.addf %296, %298 : vector<16x384xf32>
    %cst_198 = arith.constant 0.000000e+00 : f32
    %300 = vector.broadcast %cst_198 : f32 to vector<16x384xf32>
    %301 = arith.maximumf %299, %300 : vector<16x384xf32>
    %302 = vector.extract_strided_slice %301 {offsets = [0, 0], sizes = [4, 384], strides = [1, 1]} : vector<16x384xf32> to vector<4x384xf32>
    %c0_199 = arith.constant 0 : index
    %c0_200 = arith.constant 0 : index
    %c0_201 = arith.constant 0 : index
    %303 = vector.load %arg9[%c0_199, %c0_200, %c0_201] : memref<1x4x384xf32, #tpu.memory_space<vmem>>, vector<1x4x384xf32>
    %304 = vector.shape_cast %303 : vector<1x4x384xf32> to vector<4x384xf32>
    %305 = vector.shape_cast %302 : vector<4x384xf32> to vector<1x4x384xf32>
    tpu.vector_store %arg9[%c0_199, %c0_200, %c0_201], %305 {strides = array<i32>} : memref<1x4x384xf32, #tpu.memory_space<vmem>>, vector<1x4x384xf32>,
    return
  }
  func.func @transform_0(%arg0: i32) -> (i32, i32, i32) {
    %c0_i32 = arith.constant 0 : i32
    %c0_i32_0 = arith.constant 0 : i32
    %c0_i32_1 = arith.constant 0 : i32
    return %arg0, %c0_i32, %c0_i32_0 : i32, i32, i32
  }
  func.func @transform_1(%arg0: i32) -> (i32, i32, i32) {
    %c0_i32 = arith.constant 0 : i32
    %c0_i32_0 = arith.constant 0 : i32
    %c0_i32_1 = arith.constant 0 : i32
    return %arg0, %c0_i32, %c0_i32_0 : i32, i32, i32
  }
  func.func @transform_2(%arg0: i32) -> (i32, i32) {
    %c0_i32 = arith.constant 0 : i32
    %c0_i32_0 = arith.constant 0 : i32
    %c0_i32_1 = arith.constant 0 : i32
    return %c0_i32, %c0_i32_0 : i32, i32
  }
  func.func @transform_3(%arg0: i32) -> (i32, i32) {
    %c0_i32 = arith.constant 0 : i32
    %c0_i32_0 = arith.constant 0 : i32
    %c0_i32_1 = arith.constant 0 : i32
    return %c0_i32, %c0_i32_0 : i32, i32
  }
  func.func @transform_4(%arg0: i32) -> (i32, i32, i32) {
    %c0_i32 = arith.constant 0 : i32
    %c0_i32_0 = arith.constant 0 : i32
    %c0_i32_1 = arith.constant 0 : i32
    %c0_i32_2 = arith.constant 0 : i32
    return %c0_i32, %c0_i32_0, %c0_i32_1 : i32, i32, i32
  }
  func.func @transform_5(%arg0: i32) -> (i32, i32) {
    %c0_i32 = arith.constant 0 : i32
    %c0_i32_0 = arith.constant 0 : i32
    %c0_i32_1 = arith.constant 0 : i32
    return %c0_i32, %c0_i32_0 : i32, i32
  }
  func.func @transform_6(%arg0: i32) -> (i32, i32, i32) {
    %c0_i32 = arith.constant 0 : i32
    %c0_i32_0 = arith.constant 0 : i32
    %c0_i32_1 = arith.constant 0 : i32
    %c0_i32_2 = arith.constant 0 : i32
    return %c0_i32, %c0_i32_0, %c0_i32_1 : i32, i32, i32
  }
  func.func @transform_7(%arg0: i32) -> (i32, i32) {
    %c0_i32 = arith.constant 0 : i32
    %c0_i32_0 = arith.constant 0 : i32
    %c0_i32_1 = arith.constant 0 : i32
    return %c0_i32, %c0_i32_0 : i32, i32
  }
  func.func @transform_8(%arg0: i32) -> (i32, i32, i32) {
    %c0_i32 = arith.constant 0 : i32
    %c0_i32_0 = arith.constant 0 : i32
    %c0_i32_1 = arith.constant 0 : i32
    return %arg0, %c0_i32, %c0_i32_0 : i32, i32, i32
  }
}

</mosaic_0001>

<llo_original>
// kernel: tile.8
$region0: #{tile.8}
  #allocation2 [shape = 's32[1]{0}', space=sflag, size = 0x4, scoped, tag = 'scoped memory for tile.8']
  %s0 = inlined_call_operand.hbm [shape: f32[4], index: 0, kind: input, shape index: {}]
  %s1 = inlined_call_operand.vmem [shape: f32[4,4], index: 1, kind: output, shape index: {}]
  $region1: #{tile.8} parent=0
    #allocation0 [shape = 'u8[512]{0}', space=vmem, size = 0x400, scoped, tag = 'operand span for operand 0']
    #allocation1 [shape = 's32[1]{0}', space=sflag, size = 0x4, scoped, tag = 'scoped memory for tile.8']
    %2 = vsyncpa [#allocation1], 0
    // Predicated region
    $region2: #{tile.8} parent=1 // pred_check
      _
    $region3: #{tile.8} parent=1 // pred_check_branch
      %4 = sbr.rel (0) target = $region5
    $region4: #{tile.8} parent=1 // pred_region
      %6 = vsyncadd [#allocation1], 0
      %s8 = sshll.u32 %s0, 4
      %s9 = int_to_ptr.hbm [resolvable:$true] %s8
      %s10 = sshll.u32 [#allocation0], 4
      %s11 = int_to_ptr.vmem [resolvable:$true] %s10
      %13 = dma.hbm_to_vmem [thread:$0]  %s9, 16, %s11, [#allocation1]
    $region5: #{tile.8} parent=1 // pred_fallthru
      _
    // Predicated region
    $region6: #{tile.8} parent=1 // pred_check
      _
    $region7: #{tile.8} parent=1 // pred_check_branch
      %15 = sbr.rel (0) target = $region9
    $region8: #{tile.8} parent=1 // pred_region
      %17 = dma.done [#allocation1], 16
    $region9: #{tile.8} parent=1 // pred_fallthru
      _
    %v18 = vld [vmem:[#allocation0] ss:$0 sm:$0xff]
    %19 = vst [vmem:[%s1] sm:$0xf] %v18
    %20 = vsyncpa [#allocation1], 1

// kernel: tile.0
$region0: #{tile.0}
  %s0 = inlined_call_operand.vmem [shape: f32[4,4], index: 0, kind: input, shape index: {}]
  %s1 = inlined_call_operand.vmem [shape: f32[16,1], index: 1, kind: output, shape index: {}]
  $region1: #{tile.0} parent=0
    #allocation0 [shape = 'u8[4096]{0}', space=vmem, size = 0x1000, scoped, tag = 'scoped mem for input reshape']
    %s3 = ssub.s32 16, 1
    %v4 = vld [vmem:[%s0] sm:%s3]
    %5 = vst [vmem:[#allocation0] sm:%s3] %v4
    %v6 = vld [vmem:[#allocation0] sm:$0xf]
    %vm7 = vcmask 7168
    %8 = vst.msk [vmem:[%s1] ss:$4 sm:$0xf] %vm7, %v6
    %v9 = vld [vmem:[#allocation0] sm:$0xf]
    %10 = vrot.lane.b32.xlu0 %v9, 127
    %v11 = vpop.permute.xlu0 %10
    %vm12 = vcmask 7168
    %s13 = scalar_lea.vmem %s1, 1
    %14 = vst.msk [vmem:[%s13] ss:$4 sm:$0xf] %vm12, %v11
    %v15 = vld [vmem:[#allocation0] sm:$0xf]
    %16 = vrot.lane.b32.xlu0 %v15, 126
    %v17 = vpop.permute.xlu0 %16
    %vm18 = vcmask 7168
    %s19 = scalar_lea.vmem %s1, 2
    %20 = vst.msk [vmem:[%s19] ss:$4 sm:$0xf] %vm18, %v17
    %v21 = vld [vmem:[#allocation0] sm:$0xf]
    %22 = vrot.lane.b32.xlu0 %v21, 125
    %v23 = vpop.permute.xlu0 %22
    %vm24 = vcmask 7168
    %s25 = scalar_lea.vmem %s1, 3
    %26 = vst.msk [vmem:[%s25] ss:$4 sm:$0xf] %vm24, %v23

// kernel: unet_up_forward.1
$region0: #{unet_up_forward.1}
  #allocation0 [shape = 'u32[]', space=smem, size = 0x4, offset = 0x4, fixed_abs, tag = 'smem constant byte address 0x4 - core index']
  #allocation1 [shape = 'u32[72,128]{1,0:T(1,128)}', space=vmem, size = 0x9000, scoped, tag = 'internal scratch']
  #allocation2 [shape = 'bf16[16,434]{1,0:T(8,128)(2,1)}', space=vmem, size = 0x4000, scoped, tag = 'scratch operand']
  #allocation3 [shape = 'bf16[16,434]{1,0:T(8,128)(2,1)}', space=vmem, size = 0x4000, scoped, tag = 'scratch operand']
  %s0 = inlined_call_operand.vmem [shape: f32[2,4,256], index: 0, kind: input, shape index: {}]
  %s1 = inlined_call_operand.vmem [shape: f32[2,8,64], index: 1, kind: input, shape index: {}]
  %s2 = inlined_call_operand.vmem [shape: bf16[16,8], index: 2, kind: input, shape index: {}]
  %s3 = inlined_call_operand.vmem [shape: f32[16,1], index: 3, kind: input, shape index: {}]
  %s4 = inlined_call_operand.vmem [shape: bf16[9,16,16], index: 4, kind: input, shape index: {}]
  %s5 = inlined_call_operand.vmem [shape: f32[16,1], index: 5, kind: input, shape index: {}]
  %s6 = inlined_call_operand.vmem [shape: bf16[9,16,16], index: 6, kind: input, shape index: {}]
  %s7 = inlined_call_operand.vmem [shape: f32[16,1], index: 7, kind: input, shape index: {}]
  %s8 = inlined_call_operand.vmem [shape: f32[2,4,384], index: 8, kind: output, shape index: {}]
  %s9 = sld [smem:[#allocation0]]
  $region65: #{unet_up_forward.1} parent=0
    _
  %s11 = ssub.s32 1, %s9
  %s12 = scalar_select 0, %s11, %s9
  loop: start=0, step=1, limit=4
  $region2: #{unet_up_forward.1} parent=0 // loop_pre_header
    _
  $region3: #{unet_up_forward.1} parent=0 // loop_header
    %s14 = sphi 0, %s18
    %p15 = scmp.ge.s32.totalorder %s14, 4
    %s24 = sphi 0, %s26
    %s27 = sphi 0, %s24
    %s28 = sphi 0, %s27
    %s44 = sphi 0, %s28
    %s50 = sphi 0, %s52
    %s53 = sphi 0, %s50
    %s54 = sphi 0, %s53
    %s70 = sphi 0, %s54
    %s74 = sphi 0, %s74
    %s76 = sphi 0, %s74
    %s77 = sphi 0, %s76
    %s91 = sphi 0, %s77
    %s95 = sphi 0, %s95
    %s97 = sphi 0, %s95
    %s98 = sphi 0, %s97
    %s112 = sphi 0, %s98
    %s116 = sphi 0, %s116
    %s118 = sphi 0, %s116
    %s119 = sphi 0, %s118
    %s133 = sphi 0, %s119
    %s137 = sphi 0, %s137
    %s139 = sphi 0, %s137
    %s140 = sphi 0, %s139
    %s154 = sphi 0, %s140
    %s158 = sphi 0, %s158
    %s160 = sphi 0, %s158
    %s161 = sphi 0, %s160
    %s175 = sphi 0, %s161
    %s179 = sphi 0, %s179
    %s181 = sphi 0, %s179
    %s182 = sphi 0, %s181
    %s196 = sphi 0, %s182
    %s202 = sphi 0, %s204
    %s205 = sphi 0, %s202
    %s206 = sphi 0, %s205
    %s222 = sphi 0, %s206
  $region4: #{unet_up_forward.1} parent=0 // loop_header_branch
    %17 = sbr.rel (%p15) target = $region8
  $region5: #{unet_up_forward.1} parent=0 // loop_body
    %s19 = ssub.s32 %s14, 1
    %s20 = ssub.s32 %s14, 2
    %s21 = sadd.s32 %s14, 1
    %s22 = ssub.s32 %s14, %s21
    %p23 = scmp.eq.s32.totalorder %s22, 0
    %s25 = sadd.s32 %s24, 1
    %s26 = scalar_select %p23, %s24, %s25
    %p29 = pneg %p23
    %p30 = scmp.eq.s32.totalorder %s14, 1
    %p31 = por %p29, %p30
    %p32 = scmp.ne.s32.totalorder %s24, %s27
    %p33 = scmp.eq.s32.totalorder %s14, 0
    %p34 = por %p32, %p33
    %p35 = scmp.ne.s32.totalorder %s24, %s27
    %p36 = scmp.eq.s32.totalorder %s19, 1
    %p37 = por %p35, %p36
    %p38 = scmp.ne.s32.totalorder %s27, %s28
    %p39 = scmp.eq.s32.totalorder %s19, 0
    %p40 = por %p38, %p39
    %p41 = scmp.ne.s32.totalorder %s27, %s28
    %p42 = scmp.eq.s32.totalorder %s20, 1
    %p43 = por %p41, %p42
    %p45 = scmp.ne.s32.totalorder %s28, %s44
    %p46 = scmp.eq.s32.totalorder %s20, 0
    %p47 = por %p45, %p46
    %s48 = ssub.s32 %s14, %s21
    %p49 = scmp.eq.s32.totalorder %s48, 0
    %s51 = sadd.s32 %s50, 1
    %s52 = scalar_select %p49, %s50, %s51
    %p55 = pneg %p49
    %p56 = scmp.eq.s32.totalorder %s14, 1
    %p57 = por %p55, %p56
    %p58 = scmp.ne.s32.totalorder %s50, %s53
    %p59 = scmp.eq.s32.totalorder %s14, 0
    %p60 = por %p58, %p59
    %p61 = scmp.ne.s32.totalorder %s50, %s53
    %p62 = scmp.eq.s32.totalorder %s19, 1
    %p63 = por %p61, %p62
    %p64 = scmp.ne.s32.totalorder %s53, %s54
    %p65 = scmp.eq.s32.totalorder %s19, 0
    %p66 = por %p64, %p65
    %p67 = scmp.ne.s32.totalorder %s53, %s54
    %p68 = scmp.eq.s32.totalorder %s20, 1
    %p69 = por %p67, %p68
    %p71 = scmp.ne.s32.totalorder %s54, %s70
    %p72 = scmp.eq.s32.totalorder %s20, 0
    %p73 = por %p71, %p72
    %s75 = sadd.s32 %s74, 1
    %p78 = scmp.eq.s32.totalorder %s14, 1
    %p79 = scmp.ne.s32.totalorder %s74, %s76
    %p80 = scmp.eq.s32.totalorder %s14, 0
    %p81 = por %p79, %p80
    %p82 = scmp.ne.s32.totalorder %s74, %s76
    %p83 = scmp.eq.s32.totalorder %s19, 1
    %p84 = por %p82, %p83
    %p85 = scmp.ne.s32.totalorder %s76, %s77
    %p86 = scmp.eq.s32.totalorder %s19, 0
    %p87 = por %p85, %p86
    %p88 = scmp.ne.s32.totalorder %s76, %s77
    %p89 = scmp.eq.s32.totalorder %s20, 1
    %p90 = por %p88, %p89
    %p92 = scmp.ne.s32.totalorder %s77, %s91
    %p93 = scmp.eq.s32.totalorder %s20, 0
    %p94 = por %p92, %p93
    %s96 = sadd.s32 %s95, 1
    %p99 = scmp.eq.s32.totalorder %s14, 1
    %p100 = scmp.ne.s32.totalorder %s95, %s97
    %p101 = scmp.eq.s32.totalorder %s14, 0
    %p102 = por %p100, %p101
    %p103 = scmp.ne.s32.totalorder %s95, %s97
    %p104 = scmp.eq.s32.totalorder %s19, 1
    %p105 = por %p103, %p104
    %p106 = scmp.ne.s32.totalorder %s97, %s98
    %p107 = scmp.eq.s32.totalorder %s19, 0
    %p108 = por %p106, %p107
    %p109 = scmp.ne.s32.totalorder %s97, %s98
    %p110 = scmp.eq.s32.totalorder %s20, 1
    %p111 = por %p109, %p110
    %p113 = scmp.ne.s32.totalorder %s98, %s112
    %p114 = scmp.eq.s32.totalorder %s20, 0
    %p115 = por %p113, %p114
    %s117 = sadd.s32 %s116, 1
    %p120 = scmp.eq.s32.totalorder %s14, 1
    %p121 = scmp.ne.s32.totalorder %s116, %s118
    %p122 = scmp.eq.s32.totalorder %s14, 0
    %p123 = por %p121, %p122
    %p124 = scmp.ne.s32.totalorder %s116, %s118
    %p125 = scmp.eq.s32.totalorder %s19, 1
    %p126 = por %p124, %p125
    %p127 = scmp.ne.s32.totalorder %s118, %s119
    %p128 = scmp.eq.s32.totalorder %s19, 0
    %p129 = por %p127, %p128
    %p130 = scmp.ne.s32.totalorder %s118, %s119
    %p131 = scmp.eq.s32.totalorder %s20, 1
    %p132 = por %p130, %p131
    %p134 = scmp.ne.s32.totalorder %s119, %s133
    %p135 = scmp.eq.s32.totalorder %s20, 0
    %p136 = por %p134, %p135
    %s138 = sadd.s32 %s137, 1
    %p141 = scmp.eq.s32.totalorder %s14, 1
    %p142 = scmp.ne.s32.totalorder %s137, %s139
    %p143 = scmp.eq.s32.totalorder %s14, 0
    %p144 = por %p142, %p143
    %p145 = scmp.ne.s32.totalorder %s137, %s139
    %p146 = scmp.eq.s32.totalorder %s19, 1
    %p147 = por %p145, %p146
    %p148 = scmp.ne.s32.totalorder %s139, %s140
    %p149 = scmp.eq.s32.totalorder %s19, 0
    %p150 = por %p148, %p149
    %p151 = scmp.ne.s32.totalorder %s139, %s140
    %p152 = scmp.eq.s32.totalorder %s20, 1
    %p153 = por %p151, %p152
    %p155 = scmp.ne.s32.totalorder %s140, %s154
    %p156 = scmp.eq.s32.totalorder %s20, 0
    %p157 = por %p155, %p156
    %s159 = sadd.s32 %s158, 1
    %p162 = scmp.eq.s32.totalorder %s14, 1
    %p163 = scmp.ne.s32.totalorder %s158, %s160
    %p164 = scmp.eq.s32.totalorder %s14, 0
    %p165 = por %p163, %p164
    %p166 = scmp.ne.s32.totalorder %s158, %s160
    %p167 = scmp.eq.s32.totalorder %s19, 1
    %p168 = por %p166, %p167
    %p169 = scmp.ne.s32.totalorder %s160, %s161
    %p170 = scmp.eq.s32.totalorder %s19, 0
    %p171 = por %p169, %p170
    %p172 = scmp.ne.s32.totalorder %s160, %s161
    %p173 = scmp.eq.s32.totalorder %s20, 1
    %p174 = por %p172, %p173
    %p176 = scmp.ne.s32.totalorder %s161, %s175
    %p177 = scmp.eq.s32.totalorder %s20, 0
    %p178 = por %p176, %p177
    %s180 = sadd.s32 %s179, 1
    %p183 = scmp.eq.s32.totalorder %s14, 1
    %p184 = scmp.ne.s32.totalorder %s179, %s181
    %p185 = scmp.eq.s32.totalorder %s14, 0
    %p186 = por %p184, %p185
    %p187 = scmp.ne.s32.totalorder %s179, %s181
    %p188 = scmp.eq.s32.totalorder %s19, 1
    %p189 = por %p187, %p188
    %p190 = scmp.ne.s32.totalorder %s181, %s182
    %p191 = scmp.eq.s32.totalorder %s19, 0
    %p192 = por %p190, %p191
    %p193 = scmp.ne.s32.totalorder %s181, %s182
    %p194 = scmp.eq.s32.totalorder %s20, 1
    %p195 = por %p193, %p194
    %p197 = scmp.ne.s32.totalorder %s182, %s196
    %p198 = scmp.eq.s32.totalorder %s20, 0
    %p199 = por %p197, %p198
    %s200 = ssub.s32 %s14, %s21
    %p201 = scmp.eq.s32.totalorder %s200, 0
    %s203 = sadd.s32 %s202, 1
    %s204 = scalar_select %p201, %s202, %s203
    %p207 = pneg %p201
    %p208 = scmp.eq.s32.totalorder %s14, 1
    %p209 = por %p207, %p208
    %p210 = scmp.ne.s32.totalorder %s202, %s205
    %p211 = scmp.eq.s32.totalorder %s14, 0
    %p212 = por %p210, %p211
    %p213 = scmp.ne.s32.totalorder %s202, %s205
    %p214 = scmp.eq.s32.totalorder %s19, 1
    %p215 = por %p213, %p214
    %p216 = scmp.ne.s32.totalorder %s205, %s206
    %p217 = scmp.eq.s32.totalorder %s19, 0
    %p218 = por %p216, %p217
    %p219 = scmp.ne.s32.totalorder %s205, %s206
    %p220 = scmp.eq.s32.totalorder %s20, 1
    %p221 = por %p219, %p220
    %p223 = scmp.ne.s32.totalorder %s206, %s222
    %p224 = scmp.eq.s32.totalorder %s20, 0
    %p225 = por %p223, %p224
    %p226 = scmp.le.s32.totalorder 1, %s14
    %p227 = scmp.lt.s32.totalorder %s14, 3
    %p228 = pnand %p226, %p227
    %p229 = pneg %p228
    // Predicated region
    $region9: #{unet_up_forward.1} parent=5 // pred_check
      _
    $region10: #{unet_up_forward.1} parent=5 // pred_check_branch
      %231 = sbr.rel (%p228) target = $region12
    $region11: #{unet_up_forward.1} parent=5 // pred_region
      %s232 = ssub.s32 %s14, 1
      // Predicated region
      $region13: #{unet_up_forward.1} parent=11 // pred_check
        %p233 = pneg %p87
      $region14: #{unet_up_forward.1} parent=11 // pred_check_branch
        %235 = sbr.rel (%p233) target = $region16
      $region15: #{unet_up_forward.1} parent=11 // pred_region
        _
      $region16: #{unet_up_forward.1} parent=11 // pred_fallthru
        _
      // Predicated region
      $region17: #{unet_up_forward.1} parent=11 // pred_check
        %p236 = pneg %p108
      $region18: #{unet_up_forward.1} parent=11 // pred_check_branch
        %238 = sbr.rel (%p236) target = $region20
      $region19: #{unet_up_forward.1} parent=11 // pred_region
        _
      $region20: #{unet_up_forward.1} parent=11 // pred_fallthru
        _
      // Predicated region
      $region21: #{unet_up_forward.1} parent=11 // pred_check
        %p239 = pneg %p129
      $region22: #{unet_up_forward.1} parent=11 // pred_check_branch
        %241 = sbr.rel (%p239) target = $region24
      $region23: #{unet_up_forward.1} parent=11 // pred_region
        _
      $region24: #{unet_up_forward.1} parent=11 // pred_fallthru
        _
      // Predicated region
      $region25: #{unet_up_forward.1} parent=11 // pred_check
        %p242 = pneg %p150
      $region26: #{unet_up_forward.1} parent=11 // pred_check_branch
        %244 = sbr.rel (%p242) target = $region28
      $region27: #{unet_up_forward.1} parent=11 // pred_region
        _
      $region28: #{unet_up_forward.1} parent=11 // pred_fallthru
        _
      // Predicated region
      $region29: #{unet_up_forward.1} parent=11 // pred_check
        %p245 = pneg %p171
      $region30: #{unet_up_forward.1} parent=11 // pred_check_branch
        %247 = sbr.rel (%p245) target = $region32
      $region31: #{unet_up_forward.1} parent=11 // pred_region
        _
      $region32: #{unet_up_forward.1} parent=11 // pred_fallthru
        _
      // Predicated region
      $region33: #{unet_up_forward.1} parent=11 // pred_check
        %p248 = pneg %p192
      $region34: #{unet_up_forward.1} parent=11 // pred_check_branch
        %250 = sbr.rel (%p248) target = $region36
      $region35: #{unet_up_forward.1} parent=11 // pred_region
        _
      $region36: #{unet_up_forward.1} parent=11 // pred_fallthru
        _
    $region12: #{unet_up_forward.1} parent=5 // pred_fallthru
      _
    %p251 = scmp.lt.s32.totalorder %s14, 2
    // Predicated region
    $region37: #{unet_up_forward.1} parent=5 // pred_check
      %p252 = pneg %p251
    $region38: #{unet_up_forward.1} parent=5 // pred_check_branch
      %254 = sbr.rel (%p252) target = $region40
    $region39: #{unet_up_forward.1} parent=5 // pred_region
      // Predicated region
      $region41: #{unet_up_forward.1} parent=39 // pred_check
        %p255 = pneg %p34
      $region42: #{unet_up_forward.1} parent=39 // pred_check_branch
        %257 = sbr.rel (%p255) target = $region44
      $region43: #{unet_up_forward.1} parent=39 // pred_region
        %p258 = scmp.lt.s32.totalorder %s14, 1
        %s259 = scalar_select %p258, %s14, 1
        %s260 = smul.addr %s259, 2
        %s261 = smul.addr %s260, 4
        %s262 = scalar_lea.vmem %s0, %s261
      $region44: #{unet_up_forward.1} parent=39 // pred_fallthru
        _
      // Predicated region
      $region45: #{unet_up_forward.1} parent=39 // pred_check
        %p263 = pneg %p60
      $region46: #{unet_up_forward.1} parent=39 // pred_check_branch
        %265 = sbr.rel (%p263) target = $region48
      $region47: #{unet_up_forward.1} parent=39 // pred_region
        %p266 = scmp.lt.s32.totalorder %s14, 1
        %s267 = scalar_select %p266, %s14, 1
        %s268 = smul.addr %s267, 8
        %s269 = scalar_lea.vmem %s1, %s268
      $region48: #{unet_up_forward.1} parent=39 // pred_fallthru
        _
    $region40: #{unet_up_forward.1} parent=5 // pred_fallthru
      _
    %p270 = scmp.le.s32.totalorder 1, %s14
    %p271 = scmp.lt.s32.totalorder %s14, 3
    %p272 = pnand %p270, %p271
    %p273 = pneg %p272
    // Predicated region
    $region49: #{unet_up_forward.1} parent=5 // pred_check
      _
    $region50: #{unet_up_forward.1} parent=5 // pred_check_branch
      %275 = sbr.rel (%p272) target = $region52
    $region51: #{unet_up_forward.1} parent=5 // pred_region
      %s276 = ssub.s32 %s14, 1
      %p277 = scmp.lt.s32.totalorder %s19, 1
      %s278 = scalar_select %p277, %s19, 1
      %s279 = smul.addr %s278, 2
      %s280 = smul.addr %s279, 4
      %s281 = scalar_lea.vmem %s0, %s280
      %p282 = pneg %p40
      %p283 = pneg %p37
      %p284 = scmp.lt.s32.totalorder %s19, 1
      %s285 = scalar_select %p284, %s19, 1
      %s286 = smul.addr %s285, 8
      %s287 = scalar_lea.vmem %s1, %s286
      %p288 = pneg %p66
      %p289 = pneg %p63
      %p290 = pneg %p87
      %p291 = pneg %p84
      %p292 = pneg %p108
      %p293 = pneg %p105
      %p294 = pneg %p129
      %p295 = pneg %p126
      %p296 = pneg %p150
      %p297 = pneg %p147
      %p298 = pneg %p171
      %p299 = pneg %p168
      %p300 = pneg %p192
      %p301 = pneg %p189
      %p302 = pneg %p218
      %p303 = pneg %p215
      %p304 = scmp.lt.s32.totalorder %s19, 1
      %s305 = scalar_select %p304, %s19, 1
      %s306 = smul.addr %s305, 3
      %s307 = smul.addr %s306, 4
      %s308 = scalar_lea.vmem %s8, %s307
      %p309 = scmp.lt.s32.totalorder %s19, 1
      %s310 = scalar_select %p309, %s19, 1
      %s311 = smul.addr %s310, 2
      %s312 = smul.addr %s311, 4
      %s313 = scalar_lea.vmem %s0, %s312
      %p314 = scmp.lt.s32.totalorder %s19, 1
      %s315 = scalar_select %p314, %s19, 1
      %s316 = smul.addr %s315, 8
      %s317 = scalar_lea.vmem %s1, %s316
      %p318 = scmp.lt.s32.totalorder %s19, 1
      %s319 = scalar_select %p318, %s19, 1
      %s320 = smul.addr %s319, 3
      %s321 = smul.addr %s320, 4
      %s322 = scalar_lea.vmem %s8, %s321
      %vm324 = vcmask 199680
      %325 = vst.msk [vmem:[#allocation2] sm:$0xf] %vm324, 0
      %326 = vst.msk [vmem:[#allocation2 + $0x10] sm:$0xf] %vm324, 0
      %vm327 = vcmask 404680
      %328 = vst.msk [vmem:[#allocation2 + $0xc] sm:$0xf] %vm327, 0
      %329 = vst.msk [vmem:[#allocation2 + $0x1c] sm:$0xf] %vm327, 0
      %330 = vst [vmem:[#allocation2 + $0x10] sm:$0xff] 0
      %vm331 = vcmask 1043456
      %vm332 = vcmask 408580
      %vm333 = vmor %vm332, %vm331
      %334 = vst.msk [vmem:[#allocation2 + $0x18] sm:$0xff] %vm333, 0
      %335 = vst.msk [vmem:[#allocation3] sm:$0xf] %vm324, 0
      %336 = vst.msk [vmem:[#allocation3 + $0x10] sm:$0xf] %vm324, 0
      %337 = vst.msk [vmem:[#allocation3 + $0xc] sm:$0xf] %vm327, 0
      %338 = vst.msk [vmem:[#allocation3 + $0x1c] sm:$0xf] %vm327, 0
      %v339 = vld [vmem:[%s313] sm:$0xff]
      %341 = vst [vmem:[#allocation1] ss:$2 sm:$0xff] %v339
      %v342 = vld.sshfl [vmem:[#allocation1] sm:$0xff pattern:$0x75316420]
      %v343 = vld.sshfl [vmem:[#allocation1 + $0x8] sm:$0xff pattern:$0x75316420]
      %v346 = vpack.c.bf16 %v343, %v342
      %vm347 = vcmask 130048
      %v350 = vsel %vm347, %v346, 0
      %v352 = vunpack.c.l.b16 %v350
      %v353 = vpack.c.b16 %v352, %v352
      %354 = vrot.lane.b32.xlu0 %v353, 25
      %v355 = vpop.permute.xlu0 %354
      %vm357 = vcmask 394440
      %358 = vst.msk [vmem:[#allocation2] sm:$0x3] %vm357, %v355
      %v360 = vunpack.c.l.b16 %v346
      %v361 = vpack.c.b16 %v360, %v360
      %362 = vrot.lane.b32.xlu0 %v361, 112
      %v363 = vpop.permute.xlu0 %362
      %v365 = vsel %vm347, %v363, 0
      %v367 = vunpack.c.l.b16 %v365
      %v368 = vpack.c.b16 %v367, %v367
      %369 = vrot.lane.b32.xlu0 %v368, 49
      %v370 = vpop.permute.xlu0 %369
      %vm372 = vcmask 591240
      %373 = vst.msk [vmem:[#allocation2] sm:$0x3] %vm372, %v370
      %374 = vrot.lane.b32.xlu0 %v361, 96
      %v375 = vpop.permute.xlu0 %374
      %v377 = vsel %vm347, %v375, 0
      %v379 = vunpack.c.l.b16 %v377
      %v380 = vpack.c.b16 %v379, %v379
      %381 = vrot.lane.b32.xlu0 %v380, 73
      %v382 = vpop.permute.xlu0 %381
      %vm384 = vcmask 788040
      %385 = vst.msk [vmem:[#allocation2] sm:$0x3] %vm384, %v382
      %386 = vrot.lane.b32.xlu0 %v361, 80
      %v387 = vpop.permute.xlu0 %386
      %v389 = vsel %vm347, %v387, 0
      %v391 = vunpack.c.l.b16 %v389
      %v392 = vpack.c.b16 %v391, %v391
      %393 = vrot.lane.b32.xlu0 %v392, 97
      %v394 = vpop.permute.xlu0 %393
      %vm396 = vcmask 984840
      %397 = vst.msk [vmem:[#allocation2] sm:$0x3] %vm396, %v394
      %398 = vrot.lane.b32.xlu0 %v361, 64
      %v399 = vpop.permute.xlu0 %398
      %v401 = vsel %vm347, %v399, 0
      %v403 = vunpack.c.l.b16 %v401
      %v404 = vpack.c.b16 %v403, %v403
      %405 = vrot.lane.b32.xlu0 %v404, 121
      %v406 = vpop.permute.xlu0 %405
      %v407 = vrot.slane %v406, 4
      %vm408 = vcmask 990208
      %v409 = vsel %vm408, %v407, %v406
      %vm411 = vcmask 1042376
      %vm412 = vcmask 136196
      %vm413 = vmor %vm412, %vm411
      %414 = vst.msk [vmem:[#allocation2] sm:$0x33] %vm413, %v409
      %415 = vrot.lane.b32.xlu0 %v361, 48
      %v416 = vpop.permute.xlu0 %415
      %v418 = vsel %vm347, %v416, 0
      %v420 = vunpack.c.l.b16 %v418
      %v421 = vpack.c.b16 %v420, %v420
      %422 = vrot.lane.b32.xlu0 %v421, 17
      %v423 = vpop.permute.xlu0 %422
      %vm425 = vcmask 328840
      %426 = vst.msk [vmem:[#allocation2 + $0x4] sm:$0x3] %vm425, %v423
      %427 = vrot.lane.b32.xlu0 %v361, 32
      %v428 = vpop.permute.xlu0 %427
      %v430 = vsel %vm347, %v428, 0
      %v432 = vunpack.c.l.b16 %v430
      %v433 = vpack.c.b16 %v432, %v432
      %434 = vrot.lane.b32.xlu0 %v433, 41
      %v435 = vpop.permute.xlu0 %434
      %vm437 = vcmask 525640
      %438 = vst.msk [vmem:[#allocation2 + $0x4] sm:$0x3] %vm437, %v435
      %439 = vrot.lane.b32.xlu0 %v361, 16
      %v440 = vpop.permute.xlu0 %439
      %v442 = vsel %vm347, %v440, 0
      %v444 = vunpack.c.l.b16 %v442
      %v445 = vpack.c.b16 %v444, %v444
      %446 = vrot.lane.b32.xlu0 %v445, 65
      %v447 = vpop.permute.xlu0 %446
      %vm449 = vcmask 722440
      %450 = vst.msk [vmem:[#allocation2 + $0x4] sm:$0x3] %vm449, %v447
      %v451 = vunpack.c.h.b16 %v346
      %v452 = vpack.c.b16 %v451, %v451
      %v454 = vsel %vm347, %v452, 0
      %v456 = vunpack.c.l.b16 %v454
      %v457 = vpack.c.b16 %v456, %v456
      %458 = vrot.lane.b32.xlu0 %v457, 89
      %v459 = vpop.permute.xlu0 %458
      %vm461 = vcmask 919240
      %462 = vst.msk [vmem:[#allocation2 + $0x4] sm:$0x3] %vm461, %v459
      %463 = vrot.lane.b32.xlu0 %v452, 112
      %v464 = vpop.permute.xlu0 %463
      %v466 = vsel %vm347, %v464, 0
      %v468 = vunpack.c.l.b16 %v466
      %v469 = vpack.c.b16 %v468, %v468
      %470 = vrot.lane.b32.xlu0 %v469, 113
      %v471 = vpop.permute.xlu0 %470
      %v472 = vrot.slane %v471, 4
      %vm473 = vcmask 924672
      %v474 = vsel %vm473, %v472, %v471
      %vm476 = vcmask 1042312
      %vm477 = vcmask 70660
      %vm478 = vmor %vm477, %vm476
      %479 = vst.msk [vmem:[#allocation2 + $0x4] sm:$0x33] %vm478, %v474
      %480 = vrot.lane.b32.xlu0 %v452, 96
      %v481 = vpop.permute.xlu0 %480
      %v483 = vsel %vm347, %v481, 0
      %v485 = vunpack.c.l.b16 %v483
      %v486 = vpack.c.b16 %v485, %v485
      %487 = vrot.lane.b32.xlu0 %v486, 9
      %v488 = vpop.permute.xlu0 %487
      %vm490 = vcmask 263240
      %491 = vst.msk [vmem:[#allocation2 + $0x8] sm:$0x3] %vm490, %v488
      %492 = vrot.lane.b32.xlu0 %v452, 80
      %v493 = vpop.permute.xlu0 %492
      %v495 = vsel %vm347, %v493, 0
      %v497 = vunpack.c.l.b16 %v495
      %v498 = vpack.c.b16 %v497, %v497
      %499 = vrot.lane.b32.xlu0 %v498, 33
      %v500 = vpop.permute.xlu0 %499
      %vm502 = vcmask 460040
      %503 = vst.msk [vmem:[#allocation2 + $0x8] sm:$0x3] %vm502, %v500
      %504 = vrot.lane.b32.xlu0 %v452, 64
      %v505 = vpop.permute.xlu0 %504
      %v507 = vsel %vm347, %v505, 0
      %v509 = vunpack.c.l.b16 %v507
      %v510 = vpack.c.b16 %v509, %v509
      %511 = vrot.lane.b32.xlu0 %v510, 57
      %v512 = vpop.permute.xlu0 %511
      %vm514 = vcmask 656840
      %515 = vst.msk [vmem:[#allocation2 + $0x8] sm:$0x3] %vm514, %v512
      %516 = vrot.lane.b32.xlu0 %v452, 48
      %v517 = vpop.permute.xlu0 %516
      %v519 = vsel %vm347, %v517, 0
      %v521 = vunpack.c.l.b16 %v519
      %v522 = vpack.c.b16 %v521, %v521
      %523 = vrot.lane.b32.xlu0 %v522, 81
      %v524 = vpop.permute.xlu0 %523
      %vm526 = vcmask 853640
      %527 = vst.msk [vmem:[#allocation2 + $0x8] sm:$0x3] %vm526, %v524
      %528 = vrot.lane.b32.xlu0 %v452, 32
      %v529 = vpop.permute.xlu0 %528
      %v531 = vsel %vm347, %v529, 0
      %v533 = vunpack.c.l.b16 %v531
      %v534 = vpack.c.b16 %v533, %v533
      %535 = vrot.lane.b32.xlu0 %v534, 105
      %v536 = vpop.permute.xlu0 %535
      %v537 = vrot.slane %v536, 4
      %vm538 = vcmask 859136
      %v539 = vsel %vm538, %v537, %v536
      %vm541 = vcmask 1042248
      %vm542 = vcmask 5124
      %vm543 = vmor %vm542, %vm541
      %544 = vst.msk [vmem:[#allocation2 + $0x8] sm:$0x33] %vm543, %v539
      %545 = vrot.lane.b32.xlu0 %v452, 16
      %v546 = vpop.permute.xlu0 %545
      %v548 = vsel %vm347, %v546, 0
      %v550 = vunpack.c.l.b16 %v548
      %v551 = vpack.c.b16 %v550, %v550
      %552 = vrot.lane.b32.xlu0 %v551, 1
      %v553 = vpop.permute.xlu0 %552
      %vm555 = vcmask 197640
      %556 = vst.msk [vmem:[#allocation2 + $0xc] sm:$0x3] %vm555, %v553
      %v557 = vld [vmem:[%s317] sm:$0xff]
      %v558 = vpack.c.bf16 %v557, %v557
      %v559 = vld [vmem:[%s2] sm:$0xf]
      %v560 = vld [vmem:[%s2 + $0x4] sm:$0xf]
      %v561 = vld [vmem:[%s3] sm:$0xff]
      %v562 = vld [vmem:[%s3 + $0x8] sm:$0xff]
      %564 = vset.pattern.permute.xlu0 0
      %565 = vperm.xlu0 %564, %v561
      %v566 = vpop.permute.xlu0 %565
      %569 = vset.pattern.permute.xlu0 0
      %570 = vperm.xlu0 %569, %v562
      %v571 = vpop.permute.xlu0 %570
      %v575 = vunpack.c.l.b16 %v559
      %v576 = vunpack.c.l.b16 %v560
      %v577 = vpack.c.b16 %v576, %v575
      %vm578 = vcmask 64512
      %v580 = vsel %vm578, %v577, 0
      %v583 = vsel %vm331, %v558, 0
      %585 = vmatpush.bf16.msra.mxu0 0
      %586 = vmatpush.bf16.msra.mxu0 0
      %587 = vmatpush.bf16.msra.mxu0 0
      %588 = vmatpush.bf16.msra.mxu0 0
      %589 = vmatpush.bf16.msra.mxu0 0
      %590 = vmatpush.bf16.msra.mxu0 0
      %591 = vmatpush.bf16.msra.mxu0 0
      %592 = vmatpush.bf16.msra.mxu0 %v583
      %593 = vmatmul.bf16.gmra.mxu0 %v580
      %v594 = vpop.f32.mrf.mxu0
      %v595 = vadd.f32 %v566, %v594
      %v596 = vpop.f32.mrf.mxu0
      %v597 = vadd.f32 %v571, %v596
      %598 = vdwg.mxu0
      %v599 = vpack.c.bf16 %v595, %v595
      %v600 = vpack.c.bf16 %v597, %v597
      %v601 = vlaneseq
      %v602 = vshrl.u32 %v601, 7
      %v603 = vlaneseq
      %v604 = vand.u32 %v603, 127
      %v605 = vmul.u32 %v602, 2
      %vm606 = vcmp.eq.s32.totalorder %v604, %v605
      %v607 = vsel %vm606, 1, 0
      %v608 = vcvt.s32.f32 %v607
      %v609 = vpack.c.bf16 %v608, %v608
      %v610 = vadd.s32 %v605, 1
      %vm611 = vcmp.eq.s32.totalorder %v604, %v610
      %v612 = vsel %vm611, 1, 0
      %v613 = vcvt.s32.f32 %v612
      %v614 = vpack.c.bf16 %v613, %v613
      %v616 = vsel %vm578, %v600, 0
      %v619 = vsel %vm331, %v614, 0
      %621 = vmatpush.bf16.msra.mxu0 0
      %622 = vmatpush.bf16.msra.mxu0 0
      %623 = vmatpush.bf16.msra.mxu0 0
      %624 = vmatpush.bf16.msra.mxu0 0
      %625 = vmatpush.bf16.msra.mxu0 0
      %626 = vmatpush.bf16.msra.mxu0 0
      %627 = vmatpush.bf16.msra.mxu0 0
      %628 = vmatpush.bf16.msra.mxu0 %v619
      %629 = vmatmul.bf16.gmra.mxu0 %v616
      %v630 = vpop.f32.mrf.mxu0
      %v631 = vadd.f32 0.0, %v630
      %v632 = vpop.f32.mrf.mxu0
      %633 = vdwg.mxu0
      %v635 = vsel %vm578, %v599, 0
      %v638 = vsel %vm331, %v609, 0
      %640 = vmatpush.bf16.msra.mxu0 0
      %641 = vmatpush.bf16.msra.mxu0 0
      %642 = vmatpush.bf16.msra.mxu0 0
      %643 = vmatpush.bf16.msra.mxu0 0
      %644 = vmatpush.bf16.msra.mxu0 0
      %645 = vmatpush.bf16.msra.mxu0 0
      %646 = vmatpush.bf16.msra.mxu0 0
      %647 = vmatpush.bf16.msra.mxu0 %v638
      %648 = vmatmul.bf16.gmra.mxu0 %v635
      %v649 = vpop.f32.mrf.mxu0
      %v650 = vadd.f32 %v631, %v649
      %v651 = vpop.f32.mrf.mxu0
      %652 = vdwg.mxu0
      %v653 = vpack.c.bf16 %v650, %v650
      %v655 = vrot.slane %v653, 6
      %656 = vrot.lane.b32.xlu0 %v655, 25
      %v657 = vpop.permute.xlu0 %656
      %vm659 = vcmask 396490
      %660 = vst.msk [vmem:[#allocation2] sm:$0xc] %vm659, %v657
      %661 = vrot.lane.b32.xlu0 %v653, 49
      %v662 = vpop.permute.xlu0 %661
      %vm664 = vcmask 593290
      %665 = vst.msk [vmem:[#allocation2] sm:$0xc] %vm664, %v662
      %v667 = vunpack.c.l.b16 %v600
      %v668 = vpack.c.b16 %v667, %v667
      %669 = vrot.lane.b32.xlu0 %v668, 120
      %v670 = vpop.permute.xlu0 %669
      %v672 = vsel %vm578, %v670, 0
      %674 = vmatpush.bf16.msra.mxu0 0
      %675 = vmatpush.bf16.msra.mxu0 0
      %676 = vmatpush.bf16.msra.mxu0 0
      %677 = vmatpush.bf16.msra.mxu0 0
      %678 = vmatpush.bf16.msra.mxu0 0
      %679 = vmatpush.bf16.msra.mxu0 0
      %680 = vmatpush.bf16.msra.mxu0 0
      %681 = vmatpush.bf16.msra.mxu0 %v619
      %682 = vmatmul.bf16.gmra.mxu0 %v672
      %v683 = vpop.f32.mrf.mxu0
      %v684 = vadd.f32 0.0, %v683
      %v685 = vpop.f32.mrf.mxu0
      %686 = vdwg.mxu0
      %v688 = vunpack.c.l.b16 %v599
      %v689 = vpack.c.b16 %v688, %v688
      %690 = vrot.lane.b32.xlu0 %v689, 120
      %v691 = vpop.permute.xlu0 %690
      %v693 = vsel %vm578, %v691, 0
      %695 = vmatpush.bf16.msra.mxu0 0
      %696 = vmatpush.bf16.msra.mxu0 0
      %697 = vmatpush.bf16.msra.mxu0 0
      %698 = vmatpush.bf16.msra.mxu0 0
      %699 = vmatpush.bf16.msra.mxu0 0
      %700 = vmatpush.bf16.msra.mxu0 0
      %701 = vmatpush.bf16.msra.mxu0 0
      %702 = vmatpush.bf16.msra.mxu0 %v638
      %703 = vmatmul.bf16.gmra.mxu0 %v693
      %v704 = vpop.f32.mrf.mxu0
      %v705 = vadd.f32 %v684, %v704
      %v706 = vpop.f32.mrf.mxu0
      %707 = vdwg.mxu0
      %v708 = vpack.c.bf16 %v705, %v705
      %v710 = vrot.slane %v708, 6
      %711 = vrot.lane.b32.xlu0 %v710, 73
      %v712 = vpop.permute.xlu0 %711
      %vm714 = vcmask 790090
      %715 = vst.msk [vmem:[#allocation2] sm:$0xc] %vm714, %v712
      %716 = vrot.lane.b32.xlu0 %v708, 97
      %v717 = vpop.permute.xlu0 %716
      %vm719 = vcmask 986890
      %720 = vst.msk [vmem:[#allocation2] sm:$0xc] %vm719, %v717
      %721 = vrot.lane.b32.xlu0 %v668, 112
      %v722 = vpop.permute.xlu0 %721
      %v724 = vsel %vm578, %v722, 0
      %726 = vmatpush.bf16.msra.mxu0 0
      %727 = vmatpush.bf16.msra.mxu0 0
      %728 = vmatpush.bf16.msra.mxu0 0
      %729 = vmatpush.bf16.msra.mxu0 0
      %730 = vmatpush.bf16.msra.mxu0 0
      %731 = vmatpush.bf16.msra.mxu0 0
      %732 = vmatpush.bf16.msra.mxu0 0
      %733 = vmatpush.bf16.msra.mxu0 %v619
      %734 = vmatmul.bf16.gmra.mxu0 %v724
      %v735 = vpop.f32.mrf.mxu0
      %v736 = vadd.f32 0.0, %v735
      %v737 = vpop.f32.mrf.mxu0
      %738 = vdwg.mxu0
      %739 = vrot.lane.b32.xlu0 %v689, 112
      %v740 = vpop.permute.xlu0 %739
      %v742 = vsel %vm578, %v740, 0
      %744 = vmatpush.bf16.msra.mxu0 0
      %745 = vmatpush.bf16.msra.mxu0 0
      %746 = vmatpush.bf16.msra.mxu0 0
      %747 = vmatpush.bf16.msra.mxu0 0
      %748 = vmatpush.bf16.msra.mxu0 0
      %749 = vmatpush.bf16.msra.mxu0 0
      %750 = vmatpush.bf16.msra.mxu0 0
      %751 = vmatpush.bf16.msra.mxu0 %v638
      %752 = vmatmul.bf16.gmra.mxu0 %v742
      %v753 = vpop.f32.mrf.mxu0
      %v754 = vadd.f32 %v736, %v753
      %v755 = vpop.f32.mrf.mxu0
      %756 = vdwg.mxu0
      %v757 = vpack.c.bf16 %v754, %v754
      %v759 = vrot.slane %v757, 6
      %760 = vrot.lane.b32.xlu0 %v759, 121
      %v761 = vpop.permute.xlu0 %760
      %v762 = vrot.slane %v761, 4
      %v763 = vsel %vm408, %v762, %v761
      %vm765 = vcmask 1044426
      %vm766 = vcmask 138246
      %vm767 = vmor %vm766, %vm765
      %768 = vst.msk [vmem:[#allocation2] sm:$0xcc] %vm767, %v763
      %769 = vrot.lane.b32.xlu0 %v757, 17
      %v770 = vpop.permute.xlu0 %769
      %vm772 = vcmask 330890
      %773 = vst.msk [vmem:[#allocation2 + $0x4] sm:$0xc] %vm772, %v770
      %774 = vrot.lane.b32.xlu0 %v668, 104
      %v775 = vpop.permute.xlu0 %774
      %v777 = vsel %vm578, %v775, 0
      %779 = vmatpush.bf16.msra.mxu0 0
      %780 = vmatpush.bf16.msra.mxu0 0
      %781 = vmatpush.bf16.msra.mxu0 0
      %782 = vmatpush.bf16.msra.mxu0 0
      %783 = vmatpush.bf16.msra.mxu0 0
      %784 = vmatpush.bf16.msra.mxu0 0
      %785 = vmatpush.bf16.msra.mxu0 0
      %786 = vmatpush.bf16.msra.mxu0 %v619
      %787 = vmatmul.bf16.gmra.mxu0 %v777
      %v788 = vpop.f32.mrf.mxu0
      %v789 = vadd.f32 0.0, %v788
      %v790 = vpop.f32.mrf.mxu0
      %791 = vdwg.mxu0
      %792 = vrot.lane.b32.xlu0 %v689, 104
      %v793 = vpop.permute.xlu0 %792
      %v795 = vsel %vm578, %v793, 0
      %797 = vmatpush.bf16.msra.mxu0 0
      %798 = vmatpush.bf16.msra.mxu0 0
      %799 = vmatpush.bf16.msra.mxu0 0
      %800 = vmatpush.bf16.msra.mxu0 0
      %801 = vmatpush.bf16.msra.mxu0 0
      %802 = vmatpush.bf16.msra.mxu0 0
      %803 = vmatpush.bf16.msra.mxu0 0
      %804 = vmatpush.bf16.msra.mxu0 %v638
      %805 = vmatmul.bf16.gmra.mxu0 %v795
      %v806 = vpop.f32.mrf.mxu0
      %v807 = vadd.f32 %v789, %v806
      %v808 = vpop.f32.mrf.mxu0
      %809 = vdwg.mxu0
      %v810 = vpack.c.bf16 %v807, %v807
      %v812 = vrot.slane %v810, 6
      %813 = vrot.lane.b32.xlu0 %v812, 41
      %v814 = vpop.permute.xlu0 %813
      %vm816 = vcmask 527690
      %817 = vst.msk [vmem:[#allocation2 + $0x4] sm:$0xc] %vm816, %v814
      %818 = vrot.lane.b32.xlu0 %v810, 65
      %v819 = vpop.permute.xlu0 %818
      %vm821 = vcmask 724490
      %822 = vst.msk [vmem:[#allocation2 + $0x4] sm:$0xc] %vm821, %v819
      %823 = vrot.lane.b32.xlu0 %v668, 96
      %v824 = vpop.permute.xlu0 %823
      %v826 = vsel %vm578, %v824, 0
      %828 = vmatpush.bf16.msra.mxu0 0
      %829 = vmatpush.bf16.msra.mxu0 0
      %830 = vmatpush.bf16.msra.mxu0 0
      %831 = vmatpush.bf16.msra.mxu0 0
      %832 = vmatpush.bf16.msra.mxu0 0
      %833 = vmatpush.bf16.msra.mxu0 0
      %834 = vmatpush.bf16.msra.mxu0 0
      %835 = vmatpush.bf16.msra.mxu0 %v619
      %836 = vmatmul.bf16.gmra.mxu0 %v826
      %v837 = vpop.f32.mrf.mxu0
      %v838 = vadd.f32 0.0, %v837
      %v839 = vpop.f32.mrf.mxu0
      %840 = vdwg.mxu0
      %841 = vrot.lane.b32.xlu0 %v689, 96
      %v842 = vpop.permute.xlu0 %841
      %v844 = vsel %vm578, %v842, 0
      %846 = vmatpush.bf16.msra.mxu0 0
      %847 = vmatpush.bf16.msra.mxu0 0
      %848 = vmatpush.bf16.msra.mxu0 0
      %849 = vmatpush.bf16.msra.mxu0 0
      %850 = vmatpush.bf16.msra.mxu0 0
      %851 = vmatpush.bf16.msra.mxu0 0
      %852 = vmatpush.bf16.msra.mxu0 0
      %853 = vmatpush.bf16.msra.mxu0 %v638
      %854 = vmatmul.bf16.gmra.mxu0 %v844
      %v855 = vpop.f32.mrf.mxu0
      %v856 = vadd.f32 %v838, %v855
      %v857 = vpop.f32.mrf.mxu0
      %858 = vdwg.mxu0
      %v859 = vpack.c.bf16 %v856, %v856
      %v861 = vrot.slane %v859, 6
      %862 = vrot.lane.b32.xlu0 %v861, 89
      %v863 = vpop.permute.xlu0 %862
      %vm865 = vcmask 921290
      %866 = vst.msk [vmem:[#allocation2 + $0x4] sm:$0xc] %vm865, %v863
      %867 = vrot.lane.b32.xlu0 %v859, 113
      %v868 = vpop.permute.xlu0 %867
      %v869 = vrot.slane %v868, 4
      %v870 = vsel %vm473, %v869, %v868
      %vm872 = vcmask 1044362
      %vm873 = vcmask 72710
      %vm874 = vmor %vm873, %vm872
      %875 = vst.msk [vmem:[#allocation2 + $0x4] sm:$0xcc] %vm874, %v870
      %876 = vrot.lane.b32.xlu0 %v668, 88
      %v877 = vpop.permute.xlu0 %876
      %v879 = vsel %vm578, %v877, 0
      %881 = vmatpush.bf16.msra.mxu0 0
      %882 = vmatpush.bf16.msra.mxu0 0
      %883 = vmatpush.bf16.msra.mxu0 0
      %884 = vmatpush.bf16.msra.mxu0 0
      %885 = vmatpush.bf16.msra.mxu0 0
      %886 = vmatpush.bf16.msra.mxu0 0
      %887 = vmatpush.bf16.msra.mxu0 0
      %888 = vmatpush.bf16.msra.mxu0 %v619
      %889 = vmatmul.bf16.gmra.mxu0 %v879
      %v890 = vpop.f32.mrf.mxu0
      %v891 = vadd.f32 0.0, %v890
      %v892 = vpop.f32.mrf.mxu0
      %893 = vdwg.mxu0
      %894 = vrot.lane.b32.xlu0 %v689, 88
      %v895 = vpop.permute.xlu0 %894
      %v897 = vsel %vm578, %v895, 0
      %899 = vmatpush.bf16.msra.mxu0 0
      %900 = vmatpush.bf16.msra.mxu0 0
      %901 = vmatpush.bf16.msra.mxu0 0
      %902 = vmatpush.bf16.msra.mxu0 0
      %903 = vmatpush.bf16.msra.mxu0 0
      %904 = vmatpush.bf16.msra.mxu0 0
      %905 = vmatpush.bf16.msra.mxu0 0
      %906 = vmatpush.bf16.msra.mxu0 %v638
      %907 = vmatmul.bf16.gmra.mxu0 %v897
      %v908 = vpop.f32.mrf.mxu0
      %v909 = vadd.f32 %v891, %v908
      %v910 = vpop.f32.mrf.mxu0
      %911 = vdwg.mxu0
      %v912 = vpack.c.bf16 %v909, %v909
      %v914 = vrot.slane %v912, 6
      %915 = vrot.lane.b32.xlu0 %v914, 9
      %v916 = vpop.permute.xlu0 %915
      %vm918 = vcmask 265290
      %919 = vst.msk [vmem:[#allocation2 + $0x8] sm:$0xc] %vm918, %v916
      %920 = vrot.lane.b32.xlu0 %v912, 33
      %v921 = vpop.permute.xlu0 %920
      %vm923 = vcmask 462090
      %924 = vst.msk [vmem:[#allocation2 + $0x8] sm:$0xc] %vm923, %v921
      %925 = vrot.lane.b32.xlu0 %v668, 80
      %v926 = vpop.permute.xlu0 %925
      %v928 = vsel %vm578, %v926, 0
      %930 = vmatpush.bf16.msra.mxu0 0
      %931 = vmatpush.bf16.msra.mxu0 0
      %932 = vmatpush.bf16.msra.mxu0 0
      %933 = vmatpush.bf16.msra.mxu0 0
      %934 = vmatpush.bf16.msra.mxu0 0
      %935 = vmatpush.bf16.msra.mxu0 0
      %936 = vmatpush.bf16.msra.mxu0 0
      %937 = vmatpush.bf16.msra.mxu0 %v619
      %938 = vmatmul.bf16.gmra.mxu0 %v928
      %v939 = vpop.f32.mrf.mxu0
      %v940 = vadd.f32 0.0, %v939
      %v941 = vpop.f32.mrf.mxu0
      %942 = vdwg.mxu0
      %943 = vrot.lane.b32.xlu0 %v689, 80
      %v944 = vpop.permute.xlu0 %943
      %v946 = vsel %vm578, %v944, 0
      %948 = vmatpush.bf16.msra.mxu0 0
      %949 = vmatpush.bf16.msra.mxu0 0
      %950 = vmatpush.bf16.msra.mxu0 0
      %951 = vmatpush.bf16.msra.mxu0 0
      %952 = vmatpush.bf16.msra.mxu0 0
      %953 = vmatpush.bf16.msra.mxu0 0
      %954 = vmatpush.bf16.msra.mxu0 0
      %955 = vmatpush.bf16.msra.mxu0 %v638
      %956 = vmatmul.bf16.gmra.mxu0 %v946
      %v957 = vpop.f32.mrf.mxu0
      %v958 = vadd.f32 %v940, %v957
      %v959 = vpop.f32.mrf.mxu0
      %960 = vdwg.mxu0
      %v961 = vpack.c.bf16 %v958, %v958
      %v963 = vrot.slane %v961, 6
      %964 = vrot.lane.b32.xlu0 %v963, 57
      %v965 = vpop.permute.xlu0 %964
      %vm967 = vcmask 658890
      %968 = vst.msk [vmem:[#allocation2 + $0x8] sm:$0xc] %vm967, %v965
      %969 = vrot.lane.b32.xlu0 %v961, 81
      %v970 = vpop.permute.xlu0 %969
      %vm972 = vcmask 855690
      %973 = vst.msk [vmem:[#allocation2 + $0x8] sm:$0xc] %vm972, %v970
      %974 = vrot.lane.b32.xlu0 %v668, 72
      %v975 = vpop.permute.xlu0 %974
      %v977 = vsel %vm578, %v975, 0
      %979 = vmatpush.bf16.msra.mxu0 0
      %980 = vmatpush.bf16.msra.mxu0 0
      %981 = vmatpush.bf16.msra.mxu0 0
      %982 = vmatpush.bf16.msra.mxu0 0
      %983 = vmatpush.bf16.msra.mxu0 0
      %984 = vmatpush.bf16.msra.mxu0 0
      %985 = vmatpush.bf16.msra.mxu0 0
      %986 = vmatpush.bf16.msra.mxu0 %v619
      %987 = vmatmul.bf16.gmra.mxu0 %v977
      %v988 = vpop.f32.mrf.mxu0
      %v989 = vadd.f32 0.0, %v988
      %v990 = vpop.f32.mrf.mxu0
      %991 = vdwg.mxu0
      %992 = vrot.lane.b32.xlu0 %v689, 72
      %v993 = vpop.permute.xlu0 %992
      %v995 = vsel %vm578, %v993, 0
      %997 = vmatpush.bf16.msra.mxu0 0
      %998 = vmatpush.bf16.msra.mxu0 0
      %999 = vmatpush.bf16.msra.mxu0 0
      %1000 = vmatpush.bf16.msra.mxu0 0
      %1001 = vmatpush.bf16.msra.mxu0 0
      %1002 = vmatpush.bf16.msra.mxu0 0
      %1003 = vmatpush.bf16.msra.mxu0 0
      %1004 = vmatpush.bf16.msra.mxu0 %v638
      %1005 = vmatmul.bf16.gmra.mxu0 %v995
      %v1006 = vpop.f32.mrf.mxu0
      %v1007 = vadd.f32 %v989, %v1006
      %v1008 = vpop.f32.mrf.mxu0
      %1009 = vdwg.mxu0
      %v1010 = vpack.c.bf16 %v1007, %v1007
      %v1012 = vrot.slane %v1010, 6
      %1013 = vrot.lane.b32.xlu0 %v1012, 105
      %v1014 = vpop.permute.xlu0 %1013
      %v1015 = vrot.slane %v1014, 4
      %v1016 = vsel %vm538, %v1015, %v1014
      %vm1018 = vcmask 1044298
      %vm1019 = vcmask 7174
      %vm1020 = vmor %vm1019, %vm1018
      %1021 = vst.msk [vmem:[#allocation2 + $0x8] sm:$0xcc] %vm1020, %v1016
      %1022 = vrot.lane.b32.xlu0 %v1010, 1
      %v1023 = vpop.permute.xlu0 %1022
      %vm1025 = vcmask 199690
      %1026 = vst.msk [vmem:[#allocation2 + $0xc] sm:$0xc] %vm1025, %v1023
      %v1027 = vadd.s32 %v604, 128
      %v1028 = vadd.s32 %v604, 256
      %vm1029 = vcmp.lt.s32.totalorder %v604, 0
      %v1030 = vsub.s32 0, %v604
      %v1031 = vsel %vm1029, %v1030, %v604
      %v1032 = vand.u32 %v1031, 65535
      %v1033 = vshrl.u32 %v1031, 16
      %v1035 = vmul.u32 %v1032, 43691
      %v1036 = vmul.u32 %v1032, 43690
      %v1037 = vmul.u32 %v1033, 43691
      %v1038 = vmul.u32 %v1033, 43690
      %v1039 = vshll.u32 %v1036, 16
      %v1040 = vshrl.u32 %v1036, 16
      %v1041 = vshll.u32 %v1037, 16
      %v1042 = vshrl.u32 %v1037, 16
      %vm1043 = vc.u32 %v1035, %v1039
      %v1044 = vsel %vm1043, 1, 0
      %v1045 = vadd.s32 %v1035, %v1039
      %v1046 = vadd.s32 %v1038, %v1044
      %vm1047 = vc.u32 %v1045, %v1041
      %v1048 = vsel %vm1047, 1, 0
      %v1049 = vadd.s32 %v1045, %v1041
      %v1050 = vadd.s32 %v1046, %v1048
      %v1051 = vadd.s32 %v1050, %v1040
      %v1052 = vadd.s32 %v1051, %v1042
      %v1053 = vshrl.u32 %v1052, 4
      %v1054 = vmul.u32 %v1053, 24
      %v1055 = vsub.s32 %v1031, %v1054
      %v1056 = vsub.s32 0, %v1055
      %v1057 = vsel %vm1029, %v1056, %v1055
      %vm1058 = vcmp.lt.s32.totalorder %v1027, 0
      %v1059 = vsub.s32 0, %v1027
      %v1060 = vsel %vm1058, %v1059, %v1027
      %v1061 = vand.u32 %v1060, 65535
      %v1062 = vshrl.u32 %v1060, 16
      %v1064 = vmul.u32 %v1061, 43691
      %v1065 = vmul.u32 %v1061, 43690
      %v1066 = vmul.u32 %v1062, 43691
      %v1067 = vmul.u32 %v1062, 43690
      %v1068 = vshll.u32 %v1065, 16
      %v1069 = vshrl.u32 %v1065, 16
      %v1070 = vshll.u32 %v1066, 16
      %v1071 = vshrl.u32 %v1066, 16
      %vm1072 = vc.u32 %v1064, %v1068
      %v1073 = vsel %vm1072, 1, 0
      %v1074 = vadd.s32 %v1064, %v1068
      %v1075 = vadd.s32 %v1067, %v1073
      %vm1076 = vc.u32 %v1074, %v1070
      %v1077 = vsel %vm1076, 1, 0
      %v1078 = vadd.s32 %v1074, %v1070
      %v1079 = vadd.s32 %v1075, %v1077
      %v1080 = vadd.s32 %v1079, %v1069
      %v1081 = vadd.s32 %v1080, %v1071
      %v1082 = vshrl.u32 %v1081, 4
      %v1083 = vmul.u32 %v1082, 24
      %v1084 = vsub.s32 %v1060, %v1083
      %v1085 = vsub.s32 0, %v1084
      %v1086 = vsel %vm1058, %v1085, %v1084
      %vm1087 = vcmp.lt.s32.totalorder %v1028, 0
      %v1088 = vsub.s32 0, %v1028
      %v1089 = vsel %vm1087, %v1088, %v1028
      %v1090 = vand.u32 %v1089, 65535
      %v1091 = vshrl.u32 %v1089, 16
      %v1093 = vmul.u32 %v1090, 43691
      %v1094 = vmul.u32 %v1090, 43690
      %v1095 = vmul.u32 %v1091, 43691
      %v1096 = vmul.u32 %v1091, 43690
      %v1097 = vshll.u32 %v1094, 16
      %v1098 = vshrl.u32 %v1094, 16
      %v1099 = vshll.u32 %v1095, 16
      %v1100 = vshrl.u32 %v1095, 16
      %vm1101 = vc.u32 %v1093, %v1097
      %v1102 = vsel %vm1101, 1, 0
      %v1103 = vadd.s32 %v1093, %v1097
      %v1104 = vadd.s32 %v1096, %v1102
      %vm1105 = vc.u32 %v1103, %v1099
      %v1106 = vsel %vm1105, 1, 0
      %v1107 = vadd.s32 %v1103, %v1099
      %v1108 = vadd.s32 %v1104, %v1106
      %v1109 = vadd.s32 %v1108, %v1098
      %v1110 = vadd.s32 %v1109, %v1100
      %v1111 = vshrl.u32 %v1110, 4
      %v1112 = vmul.u32 %v1111, 24
      %v1113 = vsub.s32 %v1089, %v1112
      %v1114 = vsub.s32 0, %v1113
      %v1115 = vsel %vm1087, %v1114, %v1113
      %vm1116 = vcmp.ne.s32.totalorder %v1057, 0
      %vm1117 = vcmp.ne.s32.totalorder %v1086, 0
      %vm1118 = vcmp.ne.s32.totalorder %v1115, 0
      %vm1119 = vcmp.lt.s32.totalorder %v1057, 0
      %vm1120 = vcmp.lt.s32.totalorder %v1086, 0
      %vm1121 = vcmp.lt.s32.totalorder %v1115, 0
      %vm1122 = vmand %vm1119, %vm1116
      %vm1123 = vmand %vm1120, %vm1117
      %vm1124 = vmand %vm1121, %vm1118
      %v1125 = vadd.s32 %v1057, 24
      %v1126 = vadd.s32 %v1086, 24
      %v1127 = vadd.s32 %v1115, 24
      %v1128 = vsel %vm1122, %v1125, %v1057
      %v1129 = vsel %vm1123, %v1126, %v1086
      %v1130 = vsel %vm1124, %v1127, %v1115
      %vm1131 = vcmp.lt.s32.totalorder %v1128, 16
      %vm1132 = vcmp.lt.s32.totalorder %v1129, 16
      %vm1133 = vcmp.lt.s32.totalorder %v1130, 16
      %v1134 = vsel %vm1131, 1, 0
      %v1135 = vsel %vm1132, 1, 0
      %v1136 = vsel %vm1133, 1, 0
      %v1137 = vcvt.s32.f32 %v1134
      %v1138 = vcvt.s32.f32 %v1135
      %v1139 = vcvt.s32.f32 %v1136
      %v1140 = vld [vmem:[%s4] sm:$0xf]
      %v1141 = vld [vmem:[%s4 + $0x4] sm:$0xf]
      %v1142 = vld [vmem:[#allocation2] sm:$0xff]
      %v1143 = vld [vmem:[#allocation2 + $0x8] sm:$0xf]
      %v1144 = vld [vmem:[#allocation2 + $0x10] sm:$0xff]
      %v1145 = vld [vmem:[#allocation2 + $0x18] sm:$0xf]
      %s1146 = scalar_lea.vmem %s4, 8
      %v1147 = vld [vmem:[%s1146] sm:$0xf]
      %v1148 = vld [vmem:[%s1146 + $0x4] sm:$0xf]
      %v1149 = vld [vmem:[#allocation2 + $0x8] sm:$0xff]
      %v1150 = vld [vmem:[#allocation2 + $0x18] sm:$0xff]
      %v1153 = vunpack.c.l.b16 %v1147
      %v1154 = vunpack.c.l.b16 %v1148
      %v1155 = vpack.c.b16 %v1154, %v1153
      %v1160 = vunpack.c.l.b16 %v1142
      %v1161 = vunpack.c.h.b16 %v1142
      %v1162 = vunpack.c.l.b16 %v1149
      %v1163 = vunpack.c.h.b16 %v1149
      %v1164 = vunpack.c.l.b16 %v1144
      %v1165 = vunpack.c.h.b16 %v1144
      %v1166 = vunpack.c.l.b16 %v1150
      %v1167 = vunpack.c.h.b16 %v1150
      %v1168 = vpack.c.b16 %v1164, %v1160
      %v1169 = vpack.c.b16 %v1165, %v1161
      %v1170 = vpack.c.b16 %v1166, %v1162
      %v1171 = vpack.c.b16 %v1167, %v1163
      %1172 = vrot.lane.b32.xlu0 %v1168, 127
      %v1173 = vpop.permute.xlu0 %1172
      %1174 = vrot.lane.b32.xlu0 %v1169, 127
      %v1175 = vpop.permute.xlu0 %1174
      %1176 = vrot.lane.b32.xlu0 %v1170, 127
      %v1177 = vpop.permute.xlu0 %1176
      %1178 = vrot.lane.b32.xlu0 %v1171, 127
      %v1179 = vpop.permute.xlu0 %1178
      %vm1180 = vcmask 1039360
      %v1181 = vsel %vm1180, %v1173, %v1175
      %v1182 = vsel %vm1180, %v1175, %v1177
      %v1183 = vsel %vm1180, %v1177, %v1179
      %v1188 = vsel %vm347, %v1155, 0
      %1190 = vmatpush.bf16.msra.mxu0 0
      %1191 = vmatpush.bf16.msra.mxu0 0
      %1192 = vmatpush.bf16.msra.mxu0 0
      %1193 = vmatpush.bf16.msra.mxu0 0
      %1194 = vmatpush.bf16.msra.mxu0 0
      %1195 = vmatpush.bf16.msra.mxu0 0
      %1196 = vmatpush.bf16.msra.mxu0 0
      %1197 = vmatpush.bf16.msra.mxu0 %v1181
      %1198 = vmatmul.bf16.gmra.mxu0 %v1188
      %v1199 = vpop.f32.mrf.mxu0
      %v1200 = vadd.f32 0.0, %v1199
      %v1201 = vpop.f32.mrf.mxu0
      %v1202 = vadd.f32 0.0, %v1201
      %1203 = vdwg.mxu0
      %1204 = vmatpush.bf16.msra.mxu0 0
      %1205 = vmatpush.bf16.msra.mxu0 0
      %1206 = vmatpush.bf16.msra.mxu0 0
      %1207 = vmatpush.bf16.msra.mxu0 0
      %1208 = vmatpush.bf16.msra.mxu0 0
      %1209 = vmatpush.bf16.msra.mxu0 0
      %1210 = vmatpush.bf16.msra.mxu0 0
      %1211 = vmatpush.bf16.msra.mxu0 %v1182
      %1212 = vmatmul.bf16.gmra.mxu0 %v1188
      %v1213 = vpop.f32.mrf.mxu0
      %v1214 = vadd.f32 0.0, %v1213
      %v1215 = vpop.f32.mrf.mxu0
      %v1216 = vadd.f32 0.0, %v1215
      %1217 = vdwg.mxu0
      %1218 = vmatpush.bf16.msra.mxu0 0
      %1219 = vmatpush.bf16.msra.mxu0 0
      %1220 = vmatpush.bf16.msra.mxu0 0
      %1221 = vmatpush.bf16.msra.mxu0 0
      %1222 = vmatpush.bf16.msra.mxu0 0
      %1223 = vmatpush.bf16.msra.mxu0 0
      %1224 = vmatpush.bf16.msra.mxu0 0
      %1225 = vmatpush.bf16.msra.mxu0 %v1183
      %1226 = vmatmul.bf16.gmra.mxu0 %v1188
      %v1227 = vpop.f32.mrf.mxu0
      %v1228 = vadd.f32 0.0, %v1227
      %v1229 = vpop.f32.mrf.mxu0
      %v1230 = vadd.f32 0.0, %v1229
      %1231 = vdwg.mxu0
      %v1234 = vunpack.c.l.b16 %v1140
      %v1235 = vunpack.c.l.b16 %v1141
      %v1236 = vpack.c.b16 %v1235, %v1234
      %v1239 = vunpack.c.l.b16 %v1143
      %v1240 = vunpack.c.l.b16 %v1145
      %v1241 = vpack.c.b16 %v1240, %v1239
      %v1246 = vsel %vm347, %v1236, 0
      %1248 = vmatpush.bf16.msra.mxu0 0
      %1249 = vmatpush.bf16.msra.mxu0 0
      %1250 = vmatpush.bf16.msra.mxu0 0
      %1251 = vmatpush.bf16.msra.mxu0 0
      %1252 = vmatpush.bf16.msra.mxu0 0
      %1253 = vmatpush.bf16.msra.mxu0 0
      %1254 = vmatpush.bf16.msra.mxu0 0
      %1255 = vmatpush.bf16.msra.mxu0 %v1168
      %1256 = vmatmul.bf16.gmra.mxu0 %v1246
      %v1257 = vpop.f32.mrf.mxu0
      %v1258 = vadd.f32 %v1200, %v1257
      %v1259 = vpop.f32.mrf.mxu0
      %v1260 = vadd.f32 %v1202, %v1259
      %1261 = vdwg.mxu0
      %1262 = vmatpush.bf16.msra.mxu0 0
      %1263 = vmatpush.bf16.msra.mxu0 0
      %1264 = vmatpush.bf16.msra.mxu0 0
      %1265 = vmatpush.bf16.msra.mxu0 0
      %1266 = vmatpush.bf16.msra.mxu0 0
      %1267 = vmatpush.bf16.msra.mxu0 0
      %1268 = vmatpush.bf16.msra.mxu0 0
      %1269 = vmatpush.bf16.msra.mxu0 %v1169
      %1270 = vmatmul.bf16.gmra.mxu0 %v1246
      %v1271 = vpop.f32.mrf.mxu0
      %v1272 = vadd.f32 %v1214, %v1271
      %v1273 = vpop.f32.mrf.mxu0
      %v1274 = vadd.f32 %v1216, %v1273
      %1275 = vdwg.mxu0
      %1276 = vmatpush.bf16.msra.mxu0 0
      %1277 = vmatpush.bf16.msra.mxu0 0
      %1278 = vmatpush.bf16.msra.mxu0 0
      %1279 = vmatpush.bf16.msra.mxu0 0
      %1280 = vmatpush.bf16.msra.mxu0 0
      %1281 = vmatpush.bf16.msra.mxu0 0
      %1282 = vmatpush.bf16.msra.mxu0 0
      %1283 = vmatpush.bf16.msra.mxu0 %v1241
      %1284 = vmatmul.bf16.gmra.mxu0 %v1246
      %v1285 = vpop.f32.mrf.mxu0
      %v1286 = vadd.f32 %v1228, %v1285
      %v1287 = vpop.f32.mrf.mxu0
      %v1288 = vadd.f32 %v1230, %v1287
      %1289 = vdwg.mxu0
      %s1290 = scalar_lea.vmem %s4, 16
      %v1291 = vld [vmem:[%s1290] sm:$0xf]
      %v1292 = vld [vmem:[%s1290 + $0x4] sm:$0xf]
      %v1295 = vunpack.c.l.b16 %v1291
      %v1296 = vunpack.c.l.b16 %v1292
      %v1297 = vpack.c.b16 %v1296, %v1295
      %1298 = vrot.lane.b32.xlu0 %v1168, 126
      %v1299 = vpop.permute.xlu0 %1298
      %1300 = vrot.lane.b32.xlu0 %v1169, 126
      %v1301 = vpop.permute.xlu0 %1300
      %1302 = vrot.lane.b32.xlu0 %v1170, 126
      %v1303 = vpop.permute.xlu0 %1302
      %1304 = vrot.lane.b32.xlu0 %v1171, 126
      %v1305 = vpop.permute.xlu0 %1304
      %vm1306 = vcmask 1031168
      %v1307 = vsel %vm1306, %v1299, %v1301
      %v1308 = vsel %vm1306, %v1301, %v1303
      %v1309 = vsel %vm1306, %v1303, %v1305
      %v1314 = vsel %vm347, %v1297, 0
      %1316 = vmatpush.bf16.msra.mxu0 0
      %1317 = vmatpush.bf16.msra.mxu0 0
      %1318 = vmatpush.bf16.msra.mxu0 0
      %1319 = vmatpush.bf16.msra.mxu0 0
      %1320 = vmatpush.bf16.msra.mxu0 0
      %1321 = vmatpush.bf16.msra.mxu0 0
      %1322 = vmatpush.bf16.msra.mxu0 0
      %1323 = vmatpush.bf16.msra.mxu0 %v1307
      %1324 = vmatmul.bf16.gmra.mxu0 %v1314
      %v1325 = vpop.f32.mrf.mxu0
      %v1326 = vadd.f32 0.0, %v1325
      %v1327 = vpop.f32.mrf.mxu0
      %v1328 = vadd.f32 0.0, %v1327
      %1329 = vdwg.mxu0
      %1330 = vmatpush.bf16.msra.mxu0 0
      %1331 = vmatpush.bf16.msra.mxu0 0
      %1332 = vmatpush.bf16.msra.mxu0 0
      %1333 = vmatpush.bf16.msra.mxu0 0
      %1334 = vmatpush.bf16.msra.mxu0 0
      %1335 = vmatpush.bf16.msra.mxu0 0
      %1336 = vmatpush.bf16.msra.mxu0 0
      %1337 = vmatpush.bf16.msra.mxu0 %v1308
      %1338 = vmatmul.bf16.gmra.mxu0 %v1314
      %v1339 = vpop.f32.mrf.mxu0
      %v1340 = vadd.f32 0.0, %v1339
      %v1341 = vpop.f32.mrf.mxu0
      %v1342 = vadd.f32 0.0, %v1341
      %1343 = vdwg.mxu0
      %1344 = vmatpush.bf16.msra.mxu0 0
      %1345 = vmatpush.bf16.msra.mxu0 0
      %1346 = vmatpush.bf16.msra.mxu0 0
      %1347 = vmatpush.bf16.msra.mxu0 0
      %1348 = vmatpush.bf16.msra.mxu0 0
      %1349 = vmatpush.bf16.msra.mxu0 0
      %1350 = vmatpush.bf16.msra.mxu0 0
      %1351 = vmatpush.bf16.msra.mxu0 %v1309
      %1352 = vmatmul.bf16.gmra.mxu0 %v1314
      %v1353 = vpop.f32.mrf.mxu0
      %v1354 = vadd.f32 0.0, %v1353
      %v1355 = vpop.f32.mrf.mxu0
      %v1356 = vadd.f32 0.0, %v1355
      %1357 = vdwg.mxu0
      %v1358 = vadd.f32 %v1258, %v1326
      %v1359 = vadd.f32 %v1272, %v1340
      %v1360 = vadd.f32 %v1286, %v1354
      %v1361 = vadd.f32 %v1260, %v1328
      %v1362 = vadd.f32 %v1274, %v1342
      %v1363 = vadd.f32 %v1288, %v1356
      %s1364 = scalar_lea.vmem %s4, 24
      %v1365 = vld [vmem:[%s1364] sm:$0xf]
      %v1366 = vld [vmem:[%s1364 + $0x4] sm:$0xf]
      %v1369 = vunpack.c.l.b16 %v1365
      %v1370 = vunpack.c.l.b16 %v1366
      %v1371 = vpack.c.b16 %v1370, %v1369
      %1372 = vrot.lane.b32.xlu0 %v1168, 104
      %v1373 = vpop.permute.xlu0 %1372
      %1374 = vrot.lane.b32.xlu0 %v1169, 104
      %v1375 = vpop.permute.xlu0 %1374
      %1376 = vrot.lane.b32.xlu0 %v1170, 104
      %v1377 = vpop.permute.xlu0 %1376
      %1378 = vrot.lane.b32.xlu0 %v1171, 104
      %v1379 = vpop.permute.xlu0 %1378
      %vm1380 = vcmask 850944
      %v1381 = vsel %vm1380, %v1373, %v1375
      %v1382 = vsel %vm1380, %v1375, %v1377
      %v1383 = vsel %vm1380, %v1377, %v1379
      %v1388 = vsel %vm347, %v1371, 0
      %1390 = vmatpush.bf16.msra.mxu0 0
      %1391 = vmatpush.bf16.msra.mxu0 0
      %1392 = vmatpush.bf16.msra.mxu0 0
      %1393 = vmatpush.bf16.msra.mxu0 0
      %1394 = vmatpush.bf16.msra.mxu0 0
      %1395 = vmatpush.bf16.msra.mxu0 0
      %1396 = vmatpush.bf16.msra.mxu0 0
      %1397 = vmatpush.bf16.msra.mxu0 %v1381
      %1398 = vmatmul.bf16.gmra.mxu0 %v1388
      %v1399 = vpop.f32.mrf.mxu0
      %v1400 = vadd.f32 0.0, %v1399
      %v1401 = vpop.f32.mrf.mxu0
      %v1402 = vadd.f32 0.0, %v1401
      %1403 = vdwg.mxu0
      %1404 = vmatpush.bf16.msra.mxu0 0
      %1405 = vmatpush.bf16.msra.mxu0 0
      %1406 = vmatpush.bf16.msra.mxu0 0
      %1407 = vmatpush.bf16.msra.mxu0 0
      %1408 = vmatpush.bf16.msra.mxu0 0
      %1409 = vmatpush.bf16.msra.mxu0 0
      %1410 = vmatpush.bf16.msra.mxu0 0
      %1411 = vmatpush.bf16.msra.mxu0 %v1382
      %1412 = vmatmul.bf16.gmra.mxu0 %v1388
      %v1413 = vpop.f32.mrf.mxu0
      %v1414 = vadd.f32 0.0, %v1413
      %v1415 = vpop.f32.mrf.mxu0
      %v1416 = vadd.f32 0.0, %v1415
      %1417 = vdwg.mxu0
      %1418 = vmatpush.bf16.msra.mxu0 0
      %1419 = vmatpush.bf16.msra.mxu0 0
      %1420 = vmatpush.bf16.msra.mxu0 0
      %1421 = vmatpush.bf16.msra.mxu0 0
      %1422 = vmatpush.bf16.msra.mxu0 0
      %1423 = vmatpush.bf16.msra.mxu0 0
      %1424 = vmatpush.bf16.msra.mxu0 0
      %1425 = vmatpush.bf16.msra.mxu0 %v1383
      %1426 = vmatmul.bf16.gmra.mxu0 %v1388
      %v1427 = vpop.f32.mrf.mxu0
      %v1428 = vadd.f32 0.0, %v1427
      %v1429 = vpop.f32.mrf.mxu0
      %v1430 = vadd.f32 0.0, %v1429
      %1431 = vdwg.mxu0
      %v1432 = vadd.f32 %v1358, %v1400
      %v1433 = vadd.f32 %v1359, %v1414
      %v1434 = vadd.f32 %v1360, %v1428
      %v1435 = vadd.f32 %v1361, %v1402
      %v1436 = vadd.f32 %v1362, %v1416
      %v1437 = vadd.f32 %v1363, %v1430
      %s1438 = scalar_lea.vmem %s4, 32
      %v1439 = vld [vmem:[%s1438] sm:$0xf]
      %v1440 = vld [vmem:[%s1438 + $0x4] sm:$0xf]
      %v1443 = vunpack.c.l.b16 %v1439
      %v1444 = vunpack.c.l.b16 %v1440
      %v1445 = vpack.c.b16 %v1444, %v1443
      %1446 = vrot.lane.b32.xlu0 %v1168, 103
      %v1447 = vpop.permute.xlu0 %1446
      %1448 = vrot.lane.b32.xlu0 %v1169, 103
      %v1449 = vpop.permute.xlu0 %1448
      %1450 = vrot.lane.b32.xlu0 %v1170, 103
      %v1451 = vpop.permute.xlu0 %1450
      %1452 = vrot.lane.b32.xlu0 %v1171, 103
      %v1453 = vpop.permute.xlu0 %1452
      %vm1454 = vcmask 842752
      %v1455 = vsel %vm1454, %v1447, %v1449
      %v1456 = vsel %vm1454, %v1449, %v1451
      %v1457 = vsel %vm1454, %v1451, %v1453
      %v1462 = vsel %vm347, %v1445, 0
      %1464 = vmatpush.bf16.msra.mxu0 0
      %1465 = vmatpush.bf16.msra.mxu0 0
      %1466 = vmatpush.bf16.msra.mxu0 0
      %1467 = vmatpush.bf16.msra.mxu0 0
      %1468 = vmatpush.bf16.msra.mxu0 0
      %1469 = vmatpush.bf16.msra.mxu0 0
      %1470 = vmatpush.bf16.msra.mxu0 0
      %1471 = vmatpush.bf16.msra.mxu0 %v1455
      %1472 = vmatmul.bf16.gmra.mxu0 %v1462
      %v1473 = vpop.f32.mrf.mxu0
      %v1474 = vadd.f32 0.0, %v1473
      %v1475 = vpop.f32.mrf.mxu0
      %v1476 = vadd.f32 0.0, %v1475
      %1477 = vdwg.mxu0
      %1478 = vmatpush.bf16.msra.mxu0 0
      %1479 = vmatpush.bf16.msra.mxu0 0
      %1480 = vmatpush.bf16.msra.mxu0 0
      %1481 = vmatpush.bf16.msra.mxu0 0
      %1482 = vmatpush.bf16.msra.mxu0 0
      %1483 = vmatpush.bf16.msra.mxu0 0
      %1484 = vmatpush.bf16.msra.mxu0 0
      %1485 = vmatpush.bf16.msra.mxu0 %v1456
      %1486 = vmatmul.bf16.gmra.mxu0 %v1462
      %v1487 = vpop.f32.mrf.mxu0
      %v1488 = vadd.f32 0.0, %v1487
      %v1489 = vpop.f32.mrf.mxu0
      %v1490 = vadd.f32 0.0, %v1489
      %1491 = vdwg.mxu0
      %1492 = vmatpush.bf16.msra.mxu0 0
      %1493 = vmatpush.bf16.msra.mxu0 0
      %1494 = vmatpush.bf16.msra.mxu0 0
      %1495 = vmatpush.bf16.msra.mxu0 0
      %1496 = vmatpush.bf16.msra.mxu0 0
      %1497 = vmatpush.bf16.msra.mxu0 0
      %1498 = vmatpush.bf16.msra.mxu0 0
      %1499 = vmatpush.bf16.msra.mxu0 %v1457
      %1500 = vmatmul.bf16.gmra.mxu0 %v1462
      %v1501 = vpop.f32.mrf.mxu0
      %v1502 = vadd.f32 0.0, %v1501
      %v1503 = vpop.f32.mrf.mxu0
      %v1504 = vadd.f32 0.0, %v1503
      %1505 = vdwg.mxu0
      %v1506 = vadd.f32 %v1432, %v1474
      %v1507 = vadd.f32 %v1433, %v1488
      %v1508 = vadd.f32 %v1434, %v1502
      %v1509 = vadd.f32 %v1435, %v1476
      %v1510 = vadd.f32 %v1436, %v1490
      %v1511 = vadd.f32 %v1437, %v1504
      %s1512 = scalar_lea.vmem %s4, 40
      %v1513 = vld [vmem:[%s1512] sm:$0xf]
      %v1514 = vld [vmem:[%s1512 + $0x4] sm:$0xf]
      %v1517 = vunpack.c.l.b16 %v1513
      %v1518 = vunpack.c.l.b16 %v1514
      %v1519 = vpack.c.b16 %v1518, %v1517
      %1520 = vrot.lane.b32.xlu0 %v1168, 102
      %v1521 = vpop.permute.xlu0 %1520
      %1522 = vrot.lane.b32.xlu0 %v1169, 102
      %v1523 = vpop.permute.xlu0 %1522
      %1524 = vrot.lane.b32.xlu0 %v1170, 102
      %v1525 = vpop.permute.xlu0 %1524
      %1526 = vrot.lane.b32.xlu0 %v1171, 102
      %v1527 = vpop.permute.xlu0 %1526
      %vm1528 = vcmask 834560
      %v1529 = vsel %vm1528, %v1521, %v1523
      %v1530 = vsel %vm1528, %v1523, %v1525
      %v1531 = vsel %vm1528, %v1525, %v1527
      %v1536 = vsel %vm347, %v1519, 0
      %1538 = vmatpush.bf16.msra.mxu0 0
      %1539 = vmatpush.bf16.msra.mxu0 0
      %1540 = vmatpush.bf16.msra.mxu0 0
      %1541 = vmatpush.bf16.msra.mxu0 0
      %1542 = vmatpush.bf16.msra.mxu0 0
      %1543 = vmatpush.bf16.msra.mxu0 0
      %1544 = vmatpush.bf16.msra.mxu0 0
      %1545 = vmatpush.bf16.msra.mxu0 %v1529
      %1546 = vmatmul.bf16.gmra.mxu0 %v1536
      %v1547 = vpop.f32.mrf.mxu0
      %v1548 = vadd.f32 0.0, %v1547
      %v1549 = vpop.f32.mrf.mxu0
      %v1550 = vadd.f32 0.0, %v1549
      %1551 = vdwg.mxu0
      %1552 = vmatpush.bf16.msra.mxu0 0
      %1553 = vmatpush.bf16.msra.mxu0 0
      %1554 = vmatpush.bf16.msra.mxu0 0
      %1555 = vmatpush.bf16.msra.mxu0 0
      %1556 = vmatpush.bf16.msra.mxu0 0
      %1557 = vmatpush.bf16.msra.mxu0 0
      %1558 = vmatpush.bf16.msra.mxu0 0
      %1559 = vmatpush.bf16.msra.mxu0 %v1530
      %1560 = vmatmul.bf16.gmra.mxu0 %v1536
      %v1561 = vpop.f32.mrf.mxu0
      %v1562 = vadd.f32 0.0, %v1561
      %v1563 = vpop.f32.mrf.mxu0
      %v1564 = vadd.f32 0.0, %v1563
      %1565 = vdwg.mxu0
      %1566 = vmatpush.bf16.msra.mxu0 0
      %1567 = vmatpush.bf16.msra.mxu0 0
      %1568 = vmatpush.bf16.msra.mxu0 0
      %1569 = vmatpush.bf16.msra.mxu0 0
      %1570 = vmatpush.bf16.msra.mxu0 0
      %1571 = vmatpush.bf16.msra.mxu0 0
      %1572 = vmatpush.bf16.msra.mxu0 0
      %1573 = vmatpush.bf16.msra.mxu0 %v1531
      %1574 = vmatmul.bf16.gmra.mxu0 %v1536
      %v1575 = vpop.f32.mrf.mxu0
      %v1576 = vadd.f32 0.0, %v1575
      %v1577 = vpop.f32.mrf.mxu0
      %v1578 = vadd.f32 0.0, %v1577
      %1579 = vdwg.mxu0
      %v1580 = vadd.f32 %v1506, %v1548
      %v1581 = vadd.f32 %v1507, %v1562
      %v1582 = vadd.f32 %v1508, %v1576
      %v1583 = vadd.f32 %v1509, %v1550
      %v1584 = vadd.f32 %v1510, %v1564
      %v1585 = vadd.f32 %v1511, %v1578
      %s1586 = scalar_lea.vmem %s4, 48
      %v1587 = vld [vmem:[%s1586] sm:$0xf]
      %v1588 = vld [vmem:[%s1586 + $0x4] sm:$0xf]
      %v1591 = vunpack.c.l.b16 %v1587
      %v1592 = vunpack.c.l.b16 %v1588
      %v1593 = vpack.c.b16 %v1592, %v1591
      %1594 = vrot.lane.b32.xlu0 %v1168, 80
      %v1595 = vpop.permute.xlu0 %1594
      %1596 = vrot.lane.b32.xlu0 %v1169, 80
      %v1597 = vpop.permute.xlu0 %1596
      %1598 = vrot.lane.b32.xlu0 %v1170, 80
      %v1599 = vpop.permute.xlu0 %1598
      %1600 = vrot.lane.b32.xlu0 %v1171, 80
      %v1601 = vpop.permute.xlu0 %1600
      %vm1602 = vcmask 654336
      %v1603 = vsel %vm1602, %v1595, %v1597
      %v1604 = vsel %vm1602, %v1597, %v1599
      %v1605 = vsel %vm1602, %v1599, %v1601
      %v1610 = vsel %vm347, %v1593, 0
      %1612 = vmatpush.bf16.msra.mxu0 0
      %1613 = vmatpush.bf16.msra.mxu0 0
      %1614 = vmatpush.bf16.msra.mxu0 0
      %1615 = vmatpush.bf16.msra.mxu0 0
      %1616 = vmatpush.bf16.msra.mxu0 0
      %1617 = vmatpush.bf16.msra.mxu0 0
      %1618 = vmatpush.bf16.msra.mxu0 0
      %1619 = vmatpush.bf16.msra.mxu0 %v1603
      %1620 = vmatmul.bf16.gmra.mxu0 %v1610
      %v1621 = vpop.f32.mrf.mxu0
      %v1622 = vadd.f32 0.0, %v1621
      %v1623 = vpop.f32.mrf.mxu0
      %v1624 = vadd.f32 0.0, %v1623
      %1625 = vdwg.mxu0
      %1626 = vmatpush.bf16.msra.mxu0 0
      %1627 = vmatpush.bf16.msra.mxu0 0
      %1628 = vmatpush.bf16.msra.mxu0 0
      %1629 = vmatpush.bf16.msra.mxu0 0
      %1630 = vmatpush.bf16.msra.mxu0 0
      %1631 = vmatpush.bf16.msra.mxu0 0
      %1632 = vmatpush.bf16.msra.mxu0 0
      %1633 = vmatpush.bf16.msra.mxu0 %v1604
      %1634 = vmatmul.bf16.gmra.mxu0 %v1610
      %v1635 = vpop.f32.mrf.mxu0
      %v1636 = vadd.f32 0.0, %v1635
      %v1637 = vpop.f32.mrf.mxu0
      %v1638 = vadd.f32 0.0, %v1637
      %1639 = vdwg.mxu0
      %1640 = vmatpush.bf16.msra.mxu0 0
      %1641 = vmatpush.bf16.msra.mxu0 0
      %1642 = vmatpush.bf16.msra.mxu0 0
      %1643 = vmatpush.bf16.msra.mxu0 0
      %1644 = vmatpush.bf16.msra.mxu0 0
      %1645 = vmatpush.bf16.msra.mxu0 0
      %1646 = vmatpush.bf16.msra.mxu0 0
      %1647 = vmatpush.bf16.msra.mxu0 %v1605
      %1648 = vmatmul.bf16.gmra.mxu0 %v1610
      %v1649 = vpop.f32.mrf.mxu0
      %v1650 = vadd.f32 0.0, %v1649
      %v1651 = vpop.f32.mrf.mxu0
      %v1652 = vadd.f32 0.0, %v1651
      %1653 = vdwg.mxu0
      %v1654 = vadd.f32 %v1580, %v1622
      %v1655 = vadd.f32 %v1581, %v1636
      %v1656 = vadd.f32 %v1582, %v1650
      %v1657 = vadd.f32 %v1583, %v1624
      %v1658 = vadd.f32 %v1584, %v1638
      %v1659 = vadd.f32 %v1585, %v1652
      %s1660 = scalar_lea.vmem %s4, 56
      %v1661 = vld [vmem:[%s1660] sm:$0xf]
      %v1662 = vld [vmem:[%s1660 + $0x4] sm:$0xf]
      %v1665 = vunpack.c.l.b16 %v1661
      %v1666 = vunpack.c.l.b16 %v1662
      %v1667 = vpack.c.b16 %v1666, %v1665
      %1668 = vrot.lane.b32.xlu0 %v1168, 79
      %v1669 = vpop.permute.xlu0 %1668
      %1670 = vrot.lane.b32.xlu0 %v1169, 79
      %v1671 = vpop.permute.xlu0 %1670
      %1672 = vrot.lane.b32.xlu0 %v1170, 79
      %v1673 = vpop.permute.xlu0 %1672
      %1674 = vrot.lane.b32.xlu0 %v1171, 79
      %v1675 = vpop.permute.xlu0 %1674
      %vm1676 = vcmask 646144
      %v1677 = vsel %vm1676, %v1669, %v1671
      %v1678 = vsel %vm1676, %v1671, %v1673
      %v1679 = vsel %vm1676, %v1673, %v1675
      %v1684 = vsel %vm347, %v1667, 0
      %1686 = vmatpush.bf16.msra.mxu0 0
      %1687 = vmatpush.bf16.msra.mxu0 0
      %1688 = vmatpush.bf16.msra.mxu0 0
      %1689 = vmatpush.bf16.msra.mxu0 0
      %1690 = vmatpush.bf16.msra.mxu0 0
      %1691 = vmatpush.bf16.msra.mxu0 0
      %1692 = vmatpush.bf16.msra.mxu0 0
      %1693 = vmatpush.bf16.msra.mxu0 %v1677
      %1694 = vmatmul.bf16.gmra.mxu0 %v1684
      %v1695 = vpop.f32.mrf.mxu0
      %v1696 = vadd.f32 0.0, %v1695
      %v1697 = vpop.f32.mrf.mxu0
      %v1698 = vadd.f32 0.0, %v1697
      %1699 = vdwg.mxu0
      %1700 = vmatpush.bf16.msra.mxu0 0
      %1701 = vmatpush.bf16.msra.mxu0 0
      %1702 = vmatpush.bf16.msra.mxu0 0
      %1703 = vmatpush.bf16.msra.mxu0 0
      %1704 = vmatpush.bf16.msra.mxu0 0
      %1705 = vmatpush.bf16.msra.mxu0 0
      %1706 = vmatpush.bf16.msra.mxu0 0
      %1707 = vmatpush.bf16.msra.mxu0 %v1678
      %1708 = vmatmul.bf16.gmra.mxu0 %v1684
      %v1709 = vpop.f32.mrf.mxu0
      %v1710 = vadd.f32 0.0, %v1709
      %v1711 = vpop.f32.mrf.mxu0
      %v1712 = vadd.f32 0.0, %v1711
      %1713 = vdwg.mxu0
      %1714 = vmatpush.bf16.msra.mxu0 0
      %1715 = vmatpush.bf16.msra.mxu0 0
      %1716 = vmatpush.bf16.msra.mxu0 0
      %1717 = vmatpush.bf16.msra.mxu0 0
      %1718 = vmatpush.bf16.msra.mxu0 0
      %1719 = vmatpush.bf16.msra.mxu0 0
      %1720 = vmatpush.bf16.msra.mxu0 0
      %1721 = vmatpush.bf16.msra.mxu0 %v1679
      %1722 = vmatmul.bf16.gmra.mxu0 %v1684
      %v1723 = vpop.f32.mrf.mxu0
      %v1724 = vadd.f32 0.0, %v1723
      %v1725 = vpop.f32.mrf.mxu0
      %v1726 = vadd.f32 0.0, %v1725
      %1727 = vdwg.mxu0
      %v1728 = vadd.f32 %v1654, %v1696
      %v1729 = vadd.f32 %v1655, %v1710
      %v1730 = vadd.f32 %v1656, %v1724
      %v1731 = vadd.f32 %v1657, %v1698
      %v1732 = vadd.f32 %v1658, %v1712
      %v1733 = vadd.f32 %v1659, %v1726
      %s1734 = scalar_lea.vmem %s4, 64
      %v1735 = vld [vmem:[%s1734] sm:$0xf]
      %v1736 = vld [vmem:[%s1734 + $0x4] sm:$0xf]
      %v1739 = vunpack.c.l.b16 %v1735
      %v1740 = vunpack.c.l.b16 %v1736
      %v1741 = vpack.c.b16 %v1740, %v1739
      %1742 = vrot.lane.b32.xlu0 %v1168, 78
      %v1743 = vpop.permute.xlu0 %1742
      %1744 = vrot.lane.b32.xlu0 %v1169, 78
      %v1745 = vpop.permute.xlu0 %1744
      %1746 = vrot.lane.b32.xlu0 %v1170, 78
      %v1747 = vpop.permute.xlu0 %1746
      %1748 = vrot.lane.b32.xlu0 %v1171, 78
      %v1749 = vpop.permute.xlu0 %1748
      %vm1750 = vcmask 637952
      %v1751 = vsel %vm1750, %v1743, %v1745
      %v1752 = vsel %vm1750, %v1745, %v1747
      %v1753 = vsel %vm1750, %v1747, %v1749
      %v1758 = vsel %vm347, %v1741, 0
      %1760 = vmatpush.bf16.msra.mxu0 0
      %1761 = vmatpush.bf16.msra.mxu0 0
      %1762 = vmatpush.bf16.msra.mxu0 0
      %1763 = vmatpush.bf16.msra.mxu0 0
      %1764 = vmatpush.bf16.msra.mxu0 0
      %1765 = vmatpush.bf16.msra.mxu0 0
      %1766 = vmatpush.bf16.msra.mxu0 0
      %1767 = vmatpush.bf16.msra.mxu0 %v1751
      %1768 = vmatmul.bf16.gmra.mxu0 %v1758
      %v1769 = vpop.f32.mrf.mxu0
      %v1770 = vadd.f32 0.0, %v1769
      %v1771 = vpop.f32.mrf.mxu0
      %v1772 = vadd.f32 0.0, %v1771
      %1773 = vdwg.mxu0
      %1774 = vmatpush.bf16.msra.mxu0 0
      %1775 = vmatpush.bf16.msra.mxu0 0
      %1776 = vmatpush.bf16.msra.mxu0 0
      %1777 = vmatpush.bf16.msra.mxu0 0
      %1778 = vmatpush.bf16.msra.mxu0 0
      %1779 = vmatpush.bf16.msra.mxu0 0
      %1780 = vmatpush.bf16.msra.mxu0 0
      %1781 = vmatpush.bf16.msra.mxu0 %v1752
      %1782 = vmatmul.bf16.gmra.mxu0 %v1758
      %v1783 = vpop.f32.mrf.mxu0
      %v1784 = vadd.f32 0.0, %v1783
      %v1785 = vpop.f32.mrf.mxu0
      %v1786 = vadd.f32 0.0, %v1785
      %1787 = vdwg.mxu0
      %1788 = vmatpush.bf16.msra.mxu0 0
      %1789 = vmatpush.bf16.msra.mxu0 0
      %1790 = vmatpush.bf16.msra.mxu0 0
      %1791 = vmatpush.bf16.msra.mxu0 0
      %1792 = vmatpush.bf16.msra.mxu0 0
      %1793 = vmatpush.bf16.msra.mxu0 0
      %1794 = vmatpush.bf16.msra.mxu0 0
      %1795 = vmatpush.bf16.msra.mxu0 %v1753
      %1796 = vmatmul.bf16.gmra.mxu0 %v1758
      %v1797 = vpop.f32.mrf.mxu0
      %v1798 = vadd.f32 0.0, %v1797
      %v1799 = vpop.f32.mrf.mxu0
      %v1800 = vadd.f32 0.0, %v1799
      %1801 = vdwg.mxu0
      %v1802 = vadd.f32 %v1728, %v1770
      %v1803 = vadd.f32 %v1729, %v1784
      %v1804 = vadd.f32 %v1730, %v1798
      %v1805 = vadd.f32 %v1731, %v1772
      %v1806 = vadd.f32 %v1732, %v1786
      %v1807 = vadd.f32 %v1733, %v1800
      %v1808 = vld [vmem:[%s5] sm:$0xff]
      %v1809 = vld [vmem:[%s5 + $0x8] sm:$0xff]
      %1811 = vset.pattern.permute.xlu0 0
      %1812 = vperm.xlu0 %1811, %v1808
      %v1813 = vpop.permute.xlu0 %1812
      %1816 = vset.pattern.permute.xlu0 0
      %1817 = vperm.xlu0 %1816, %v1809
      %v1818 = vpop.permute.xlu0 %1817
      %v1820 = vadd.f32 %v1802, %v1813
      %v1821 = vadd.f32 %v1803, %v1813
      %v1822 = vadd.f32 %v1804, %v1813
      %v1823 = vadd.f32 %v1805, %v1818
      %v1824 = vadd.f32 %v1806, %v1818
      %v1825 = vadd.f32 %v1807, %v1818
      %v1826 = vmax.f32 %v1820, 0.0
      %v1827 = vmax.f32 %v1821, 0.0
      %v1828 = vmax.f32 %v1822, 0.0
      %v1829 = vmax.f32 %v1823, 0.0
      %v1830 = vmax.f32 %v1824, 0.0
      %v1831 = vmax.f32 %v1825, 0.0
      %v1832 = vmul.f32 %v1826, %v1137
      %v1833 = vmul.f32 %v1827, %v1138
      %v1834 = vmul.f32 %v1828, %v1139
      %v1835 = vmul.f32 %v1829, %v1137
      %v1836 = vmul.f32 %v1830, %v1138
      %v1837 = vmul.f32 %v1831, %v1139
      %v1838 = vpack.c.bf16 %v1833, %v1832
      %v1839 = vpack.c.bf16 %v1834, %v1834
      %v1840 = vpack.c.bf16 %v1836, %v1835
      %v1841 = vpack.c.bf16 %v1837, %v1837
      %1846 = vrot.lane.b32.xlu0 %v1838, 25
      %v1847 = vpop.permute.xlu0 %1846
      %1848 = vrot.lane.b32.xlu0 %v1839, 25
      %v1849 = vpop.permute.xlu0 %1848
      %1850 = vrot.lane.b32.xlu0 %v1840, 25
      %v1851 = vpop.permute.xlu0 %1850
      %1852 = vrot.lane.b32.xlu0 %v1841, 25
      %v1853 = vpop.permute.xlu0 %1852
      %v1854 = vrot.slane %v1847, 4
      %v1855 = vrot.slane %v1849, 4
      %v1856 = vrot.slane %v1851, 4
      %v1857 = vrot.slane %v1853, 4
      %vm1858 = vcmask 203776
      %v1859 = vsel %vm1858, %v1854, %v1847
      %vm1860 = vcmask 1043456
      %v1861 = vsel %vm1860, %v1854, %v1855
      %v1862 = vsel %vm1858, %v1861, %v1849
      %v1863 = vsel %vm1858, %v1856, %v1851
      %v1864 = vsel %vm1860, %v1856, %v1857
      %v1865 = vsel %vm1858, %v1864, %v1853
      %vm1870 = vcmask 1043656
      %vm1871 = vcmask 1047556
      %vm1872 = vmor %vm1871, %vm1870
      %1873 = vst.msk [vmem:[#allocation3] sm:$0xff] %vm1872, %v1859
      %vm1874 = vcmask 203780
      %vm1875 = vmor %vm1874, %vm331
      %1876 = vst.msk [vmem:[#allocation3 + $0x8] sm:$0xff] %vm1875, %v1862
      %1877 = vst.msk [vmem:[#allocation3 + $0x10] sm:$0xff] %vm1872, %v1863
      %1878 = vst.msk [vmem:[#allocation3 + $0x18] sm:$0xff] %vm1875, %v1865
      %v1879 = vld [vmem:[%s6] sm:$0xf]
      %v1880 = vld [vmem:[%s6 + $0x4] sm:$0xf]
      %v1881 = vld [vmem:[#allocation3] sm:$0xff]
      %v1882 = vld [vmem:[#allocation3 + $0x8] sm:$0xf]
      %v1883 = vld [vmem:[#allocation3 + $0x10] sm:$0xff]
      %v1884 = vld [vmem:[#allocation3 + $0x18] sm:$0xf]
      %s1885 = scalar_lea.vmem %s6, 8
      %v1886 = vld [vmem:[%s1885] sm:$0xf]
      %v1887 = vld [vmem:[%s1885 + $0x4] sm:$0xf]
      %v1888 = vld [vmem:[#allocation3 + $0x8] sm:$0xff]
      %v1889 = vld [vmem:[#allocation3 + $0x18] sm:$0xff]
      %v1892 = vunpack.c.l.b16 %v1886
      %v1893 = vunpack.c.l.b16 %v1887
      %v1894 = vpack.c.b16 %v1893, %v1892
      %v1899 = vunpack.c.l.b16 %v1881
      %v1900 = vunpack.c.h.b16 %v1881
      %v1901 = vunpack.c.l.b16 %v1888
      %v1902 = vunpack.c.h.b16 %v1888
      %v1903 = vunpack.c.l.b16 %v1883
      %v1904 = vunpack.c.h.b16 %v1883
      %v1905 = vunpack.c.l.b16 %v1889
      %v1906 = vunpack.c.h.b16 %v1889
      %v1907 = vpack.c.b16 %v1903, %v1899
      %v1908 = vpack.c.b16 %v1904, %v1900
      %v1909 = vpack.c.b16 %v1905, %v1901
      %v1910 = vpack.c.b16 %v1906, %v1902
      %1911 = vrot.lane.b32.xlu0 %v1907, 127
      %v1912 = vpop.permute.xlu0 %1911
      %1913 = vrot.lane.b32.xlu0 %v1908, 127
      %v1914 = vpop.permute.xlu0 %1913
      %1915 = vrot.lane.b32.xlu0 %v1909, 127
      %v1916 = vpop.permute.xlu0 %1915
      %1917 = vrot.lane.b32.xlu0 %v1910, 127
      %v1918 = vpop.permute.xlu0 %1917
      %v1919 = vsel %vm1180, %v1912, %v1914
      %v1920 = vsel %vm1180, %v1914, %v1916
      %v1921 = vsel %vm1180, %v1916, %v1918
      %v1926 = vsel %vm347, %v1894, 0
      %1928 = vmatpush.bf16.msra.mxu0 0
      %1929 = vmatpush.bf16.msra.mxu0 0
      %1930 = vmatpush.bf16.msra.mxu0 0
      %1931 = vmatpush.bf16.msra.mxu0 0
      %1932 = vmatpush.bf16.msra.mxu0 0
      %1933 = vmatpush.bf16.msra.mxu0 0
      %1934 = vmatpush.bf16.msra.mxu0 0
      %1935 = vmatpush.bf16.msra.mxu0 %v1919
      %1936 = vmatmul.bf16.gmra.mxu0 %v1926
      %v1937 = vpop.f32.mrf.mxu0
      %v1938 = vadd.f32 0.0, %v1937
      %v1939 = vpop.f32.mrf.mxu0
      %1940 = vdwg.mxu0
      %1941 = vmatpush.bf16.msra.mxu0 0
      %1942 = vmatpush.bf16.msra.mxu0 0
      %1943 = vmatpush.bf16.msra.mxu0 0
      %1944 = vmatpush.bf16.msra.mxu0 0
      %1945 = vmatpush.bf16.msra.mxu0 0
      %1946 = vmatpush.bf16.msra.mxu0 0
      %1947 = vmatpush.bf16.msra.mxu0 0
      %1948 = vmatpush.bf16.msra.mxu0 %v1920
      %1949 = vmatmul.bf16.gmra.mxu0 %v1926
      %v1950 = vpop.f32.mrf.mxu0
      %v1951 = vadd.f32 0.0, %v1950
      %v1952 = vpop.f32.mrf.mxu0
      %1953 = vdwg.mxu0
      %1954 = vmatpush.bf16.msra.mxu0 0
      %1955 = vmatpush.bf16.msra.mxu0 0
      %1956 = vmatpush.bf16.msra.mxu0 0
      %1957 = vmatpush.bf16.msra.mxu0 0
      %1958 = vmatpush.bf16.msra.mxu0 0
      %1959 = vmatpush.bf16.msra.mxu0 0
      %1960 = vmatpush.bf16.msra.mxu0 0
      %1961 = vmatpush.bf16.msra.mxu0 %v1921
      %1962 = vmatmul.bf16.gmra.mxu0 %v1926
      %v1963 = vpop.f32.mrf.mxu0
      %v1964 = vadd.f32 0.0, %v1963
      %v1965 = vpop.f32.mrf.mxu0
      %1966 = vdwg.mxu0
      %v1969 = vunpack.c.l.b16 %v1879
      %v1970 = vunpack.c.l.b16 %v1880
      %v1971 = vpack.c.b16 %v1970, %v1969
      %v1974 = vunpack.c.l.b16 %v1882
      %v1975 = vunpack.c.l.b16 %v1884
      %v1976 = vpack.c.b16 %v1975, %v1974
      %v1981 = vsel %vm347, %v1971, 0
      %1983 = vmatpush.bf16.msra.mxu0 0
      %1984 = vmatpush.bf16.msra.mxu0 0
      %1985 = vmatpush.bf16.msra.mxu0 0
      %1986 = vmatpush.bf16.msra.mxu0 0
      %1987 = vmatpush.bf16.msra.mxu0 0
      %1988 = vmatpush.bf16.msra.mxu0 0
      %1989 = vmatpush.bf16.msra.mxu0 0
      %1990 = vmatpush.bf16.msra.mxu0 %v1907
      %1991 = vmatmul.bf16.gmra.mxu0 %v1981
      %v1992 = vpop.f32.mrf.mxu0
      %v1993 = vadd.f32 %v1938, %v1992
      %v1994 = vpop.f32.mrf.mxu0
      %1995 = vdwg.mxu0
      %1996 = vmatpush.bf16.msra.mxu0 0
      %1997 = vmatpush.bf16.msra.mxu0 0
      %1998 = vmatpush.bf16.msra.mxu0 0
      %1999 = vmatpush.bf16.msra.mxu0 0
      %2000 = vmatpush.bf16.msra.mxu0 0
      %2001 = vmatpush.bf16.msra.mxu0 0
      %2002 = vmatpush.bf16.msra.mxu0 0
      %2003 = vmatpush.bf16.msra.mxu0 %v1908
      %2004 = vmatmul.bf16.gmra.mxu0 %v1981
      %v2005 = vpop.f32.mrf.mxu0
      %v2006 = vadd.f32 %v1951, %v2005
      %v2007 = vpop.f32.mrf.mxu0
      %2008 = vdwg.mxu0
      %2009 = vmatpush.bf16.msra.mxu0 0
      %2010 = vmatpush.bf16.msra.mxu0 0
      %2011 = vmatpush.bf16.msra.mxu0 0
      %2012 = vmatpush.bf16.msra.mxu0 0
      %2013 = vmatpush.bf16.msra.mxu0 0
      %2014 = vmatpush.bf16.msra.mxu0 0
      %2015 = vmatpush.bf16.msra.mxu0 0
      %2016 = vmatpush.bf16.msra.mxu0 %v1976
      %2017 = vmatmul.bf16.gmra.mxu0 %v1981
      %v2018 = vpop.f32.mrf.mxu0
      %v2019 = vadd.f32 %v1964, %v2018
      %v2020 = vpop.f32.mrf.mxu0
      %2021 = vdwg.mxu0
      %s2022 = scalar_lea.vmem %s6, 16
      %v2023 = vld [vmem:[%s2022] sm:$0xf]
      %v2024 = vld [vmem:[%s2022 + $0x4] sm:$0xf]
      %v2027 = vunpack.c.l.b16 %v2023
      %v2028 = vunpack.c.l.b16 %v2024
      %v2029 = vpack.c.b16 %v2028, %v2027
      %2030 = vrot.lane.b32.xlu0 %v1907, 126
      %v2031 = vpop.permute.xlu0 %2030
      %2032 = vrot.lane.b32.xlu0 %v1908, 126
      %v2033 = vpop.permute.xlu0 %2032
      %2034 = vrot.lane.b32.xlu0 %v1909, 126
      %v2035 = vpop.permute.xlu0 %2034
      %2036 = vrot.lane.b32.xlu0 %v1910, 126
      %v2037 = vpop.permute.xlu0 %2036
      %v2038 = vsel %vm1306, %v2031, %v2033
      %v2039 = vsel %vm1306, %v2033, %v2035
      %v2040 = vsel %vm1306, %v2035, %v2037
      %v2045 = vsel %vm347, %v2029, 0
      %2047 = vmatpush.bf16.msra.mxu0 0
      %2048 = vmatpush.bf16.msra.mxu0 0
      %2049 = vmatpush.bf16.msra.mxu0 0
      %2050 = vmatpush.bf16.msra.mxu0 0
      %2051 = vmatpush.bf16.msra.mxu0 0
      %2052 = vmatpush.bf16.msra.mxu0 0
      %2053 = vmatpush.bf16.msra.mxu0 0
      %2054 = vmatpush.bf16.msra.mxu0 %v2038
      %2055 = vmatmul.bf16.gmra.mxu0 %v2045
      %v2056 = vpop.f32.mrf.mxu0
      %v2057 = vadd.f32 0.0, %v2056
      %v2058 = vpop.f32.mrf.mxu0
      %2059 = vdwg.mxu0
      %2060 = vmatpush.bf16.msra.mxu0 0
      %2061 = vmatpush.bf16.msra.mxu0 0
      %2062 = vmatpush.bf16.msra.mxu0 0
      %2063 = vmatpush.bf16.msra.mxu0 0
      %2064 = vmatpush.bf16.msra.mxu0 0
      %2065 = vmatpush.bf16.msra.mxu0 0
      %2066 = vmatpush.bf16.msra.mxu0 0
      %2067 = vmatpush.bf16.msra.mxu0 %v2039
      %2068 = vmatmul.bf16.gmra.mxu0 %v2045
      %v2069 = vpop.f32.mrf.mxu0
      %v2070 = vadd.f32 0.0, %v2069
      %v2071 = vpop.f32.mrf.mxu0
      %2072 = vdwg.mxu0
      %2073 = vmatpush.bf16.msra.mxu0 0
      %2074 = vmatpush.bf16.msra.mxu0 0
      %2075 = vmatpush.bf16.msra.mxu0 0
      %2076 = vmatpush.bf16.msra.mxu0 0
      %2077 = vmatpush.bf16.msra.mxu0 0
      %2078 = vmatpush.bf16.msra.mxu0 0
      %2079 = vmatpush.bf16.msra.mxu0 0
      %2080 = vmatpush.bf16.msra.mxu0 %v2040
      %2081 = vmatmul.bf16.gmra.mxu0 %v2045
      %v2082 = vpop.f32.mrf.mxu0
      %v2083 = vadd.f32 0.0, %v2082
      %v2084 = vpop.f32.mrf.mxu0
      %2085 = vdwg.mxu0
      %v2086 = vadd.f32 %v1993, %v2057
      %v2087 = vadd.f32 %v2006, %v2070
      %v2088 = vadd.f32 %v2019, %v2083
      %s2089 = scalar_lea.vmem %s6, 24
      %v2090 = vld [vmem:[%s2089] sm:$0xf]
      %v2091 = vld [vmem:[%s2089 + $0x4] sm:$0xf]
      %v2094 = vunpack.c.l.b16 %v2090
      %v2095 = vunpack.c.l.b16 %v2091
      %v2096 = vpack.c.b16 %v2095, %v2094
      %2097 = vrot.lane.b32.xlu0 %v1907, 104
      %v2098 = vpop.permute.xlu0 %2097
      %2099 = vrot.lane.b32.xlu0 %v1908, 104
      %v2100 = vpop.permute.xlu0 %2099
      %2101 = vrot.lane.b32.xlu0 %v1909, 104
      %v2102 = vpop.permute.xlu0 %2101
      %2103 = vrot.lane.b32.xlu0 %v1910, 104
      %v2104 = vpop.permute.xlu0 %2103
      %v2105 = vsel %vm1380, %v2098, %v2100
      %v2106 = vsel %vm1380, %v2100, %v2102
      %v2107 = vsel %vm1380, %v2102, %v2104
      %v2112 = vsel %vm347, %v2096, 0
      %2114 = vmatpush.bf16.msra.mxu0 0
      %2115 = vmatpush.bf16.msra.mxu0 0
      %2116 = vmatpush.bf16.msra.mxu0 0
      %2117 = vmatpush.bf16.msra.mxu0 0
      %2118 = vmatpush.bf16.msra.mxu0 0
      %2119 = vmatpush.bf16.msra.mxu0 0
      %2120 = vmatpush.bf16.msra.mxu0 0
      %2121 = vmatpush.bf16.msra.mxu0 %v2105
      %2122 = vmatmul.bf16.gmra.mxu0 %v2112
      %v2123 = vpop.f32.mrf.mxu0
      %v2124 = vadd.f32 0.0, %v2123
      %v2125 = vpop.f32.mrf.mxu0
      %2126 = vdwg.mxu0
      %2127 = vmatpush.bf16.msra.mxu0 0
      %2128 = vmatpush.bf16.msra.mxu0 0
      %2129 = vmatpush.bf16.msra.mxu0 0
      %2130 = vmatpush.bf16.msra.mxu0 0
      %2131 = vmatpush.bf16.msra.mxu0 0
      %2132 = vmatpush.bf16.msra.mxu0 0
      %2133 = vmatpush.bf16.msra.mxu0 0
      %2134 = vmatpush.bf16.msra.mxu0 %v2106
      %2135 = vmatmul.bf16.gmra.mxu0 %v2112
      %v2136 = vpop.f32.mrf.mxu0
      %v2137 = vadd.f32 0.0, %v2136
      %v2138 = vpop.f32.mrf.mxu0
      %2139 = vdwg.mxu0
      %2140 = vmatpush.bf16.msra.mxu0 0
      %2141 = vmatpush.bf16.msra.mxu0 0
      %2142 = vmatpush.bf16.msra.mxu0 0
      %2143 = vmatpush.bf16.msra.mxu0 0
      %2144 = vmatpush.bf16.msra.mxu0 0
      %2145 = vmatpush.bf16.msra.mxu0 0
      %2146 = vmatpush.bf16.msra.mxu0 0
      %2147 = vmatpush.bf16.msra.mxu0 %v2107
      %2148 = vmatmul.bf16.gmra.mxu0 %v2112
      %v2149 = vpop.f32.mrf.mxu0
      %v2150 = vadd.f32 0.0, %v2149
      %v2151 = vpop.f32.mrf.mxu0
      %2152 = vdwg.mxu0
      %v2153 = vadd.f32 %v2086, %v2124
      %v2154 = vadd.f32 %v2087, %v2137
      %v2155 = vadd.f32 %v2088, %v2150
      %s2156 = scalar_lea.vmem %s6, 32
      %v2157 = vld [vmem:[%s2156] sm:$0xf]
      %v2158 = vld [vmem:[%s2156 + $0x4] sm:$0xf]
      %v2161 = vunpack.c.l.b16 %v2157
      %v2162 = vunpack.c.l.b16 %v2158
      %v2163 = vpack.c.b16 %v2162, %v2161
      %2164 = vrot.lane.b32.xlu0 %v1907, 103
      %v2165 = vpop.permute.xlu0 %2164
      %2166 = vrot.lane.b32.xlu0 %v1908, 103
      %v2167 = vpop.permute.xlu0 %2166
      %2168 = vrot.lane.b32.xlu0 %v1909, 103
      %v2169 = vpop.permute.xlu0 %2168
      %2170 = vrot.lane.b32.xlu0 %v1910, 103
      %v2171 = vpop.permute.xlu0 %2170
      %v2172 = vsel %vm1454, %v2165, %v2167
      %v2173 = vsel %vm1454, %v2167, %v2169
      %v2174 = vsel %vm1454, %v2169, %v2171
      %v2179 = vsel %vm347, %v2163, 0
      %2181 = vmatpush.bf16.msra.mxu0 0
      %2182 = vmatpush.bf16.msra.mxu0 0
      %2183 = vmatpush.bf16.msra.mxu0 0
      %2184 = vmatpush.bf16.msra.mxu0 0
      %2185 = vmatpush.bf16.msra.mxu0 0
      %2186 = vmatpush.bf16.msra.mxu0 0
      %2187 = vmatpush.bf16.msra.mxu0 0
      %2188 = vmatpush.bf16.msra.mxu0 %v2172
      %2189 = vmatmul.bf16.gmra.mxu0 %v2179
      %v2190 = vpop.f32.mrf.mxu0
      %v2191 = vadd.f32 0.0, %v2190
      %v2192 = vpop.f32.mrf.mxu0
      %2193 = vdwg.mxu0
      %2194 = vmatpush.bf16.msra.mxu0 0
      %2195 = vmatpush.bf16.msra.mxu0 0
      %2196 = vmatpush.bf16.msra.mxu0 0
      %2197 = vmatpush.bf16.msra.mxu0 0
      %2198 = vmatpush.bf16.msra.mxu0 0
      %2199 = vmatpush.bf16.msra.mxu0 0
      %2200 = vmatpush.bf16.msra.mxu0 0
      %2201 = vmatpush.bf16.msra.mxu0 %v2173
      %2202 = vmatmul.bf16.gmra.mxu0 %v2179
      %v2203 = vpop.f32.mrf.mxu0
      %v2204 = vadd.f32 0.0, %v2203
      %v2205 = vpop.f32.mrf.mxu0
      %2206 = vdwg.mxu0
      %2207 = vmatpush.bf16.msra.mxu0 0
      %2208 = vmatpush.bf16.msra.mxu0 0
      %2209 = vmatpush.bf16.msra.mxu0 0
      %2210 = vmatpush.bf16.msra.mxu0 0
      %2211 = vmatpush.bf16.msra.mxu0 0
      %2212 = vmatpush.bf16.msra.mxu0 0
      %2213 = vmatpush.bf16.msra.mxu0 0
      %2214 = vmatpush.bf16.msra.mxu0 %v2174
      %2215 = vmatmul.bf16.gmra.mxu0 %v2179
      %v2216 = vpop.f32.mrf.mxu0
      %v2217 = vadd.f32 0.0, %v2216
      %v2218 = vpop.f32.mrf.mxu0
      %2219 = vdwg.mxu0
      %v2220 = vadd.f32 %v2153, %v2191
      %v2221 = vadd.f32 %v2154, %v2204
      %v2222 = vadd.f32 %v2155, %v2217
      %s2223 = scalar_lea.vmem %s6, 40
      %v2224 = vld [vmem:[%s2223] sm:$0xf]
      %v2225 = vld [vmem:[%s2223 + $0x4] sm:$0xf]
      %v2228 = vunpack.c.l.b16 %v2224
      %v2229 = vunpack.c.l.b16 %v2225
      %v2230 = vpack.c.b16 %v2229, %v2228
      %2231 = vrot.lane.b32.xlu0 %v1907, 102
      %v2232 = vpop.permute.xlu0 %2231
      %2233 = vrot.lane.b32.xlu0 %v1908, 102
      %v2234 = vpop.permute.xlu0 %2233
      %2235 = vrot.lane.b32.xlu0 %v1909, 102
      %v2236 = vpop.permute.xlu0 %2235
      %2237 = vrot.lane.b32.xlu0 %v1910, 102
      %v2238 = vpop.permute.xlu0 %2237
      %v2239 = vsel %vm1528, %v2232, %v2234
      %v2240 = vsel %vm1528, %v2234, %v2236
      %v2241 = vsel %vm1528, %v2236, %v2238
      %v2246 = vsel %vm347, %v2230, 0
      %2248 = vmatpush.bf16.msra.mxu0 0
      %2249 = vmatpush.bf16.msra.mxu0 0
      %2250 = vmatpush.bf16.msra.mxu0 0
      %2251 = vmatpush.bf16.msra.mxu0 0
      %2252 = vmatpush.bf16.msra.mxu0 0
      %2253 = vmatpush.bf16.msra.mxu0 0
      %2254 = vmatpush.bf16.msra.mxu0 0
      %2255 = vmatpush.bf16.msra.mxu0 %v2239
      %2256 = vmatmul.bf16.gmra.mxu0 %v2246
      %v2257 = vpop.f32.mrf.mxu0
      %v2258 = vadd.f32 0.0, %v2257
      %v2259 = vpop.f32.mrf.mxu0
      %2260 = vdwg.mxu0
      %2261 = vmatpush.bf16.msra.mxu0 0
      %2262 = vmatpush.bf16.msra.mxu0 0
      %2263 = vmatpush.bf16.msra.mxu0 0
      %2264 = vmatpush.bf16.msra.mxu0 0
      %2265 = vmatpush.bf16.msra.mxu0 0
      %2266 = vmatpush.bf16.msra.mxu0 0
      %2267 = vmatpush.bf16.msra.mxu0 0
      %2268 = vmatpush.bf16.msra.mxu0 %v2240
      %2269 = vmatmul.bf16.gmra.mxu0 %v2246
      %v2270 = vpop.f32.mrf.mxu0
      %v2271 = vadd.f32 0.0, %v2270
      %v2272 = vpop.f32.mrf.mxu0
      %2273 = vdwg.mxu0
      %2274 = vmatpush.bf16.msra.mxu0 0
      %2275 = vmatpush.bf16.msra.mxu0 0
      %2276 = vmatpush.bf16.msra.mxu0 0
      %2277 = vmatpush.bf16.msra.mxu0 0
      %2278 = vmatpush.bf16.msra.mxu0 0
      %2279 = vmatpush.bf16.msra.mxu0 0
      %2280 = vmatpush.bf16.msra.mxu0 0
      %2281 = vmatpush.bf16.msra.mxu0 %v2241
      %2282 = vmatmul.bf16.gmra.mxu0 %v2246
      %v2283 = vpop.f32.mrf.mxu0
      %v2284 = vadd.f32 0.0, %v2283
      %v2285 = vpop.f32.mrf.mxu0
      %2286 = vdwg.mxu0
      %v2287 = vadd.f32 %v2220, %v2258
      %v2288 = vadd.f32 %v2221, %v2271
      %v2289 = vadd.f32 %v2222, %v2284
      %s2290 = scalar_lea.vmem %s6, 48
      %v2291 = vld [vmem:[%s2290] sm:$0xf]
      %v2292 = vld [vmem:[%s2290 + $0x4] sm:$0xf]
      %v2295 = vunpack.c.l.b16 %v2291
      %v2296 = vunpack.c.l.b16 %v2292
      %v2297 = vpack.c.b16 %v2296, %v2295
      %2298 = vrot.lane.b32.xlu0 %v1907, 80
      %v2299 = vpop.permute.xlu0 %2298
      %2300 = vrot.lane.b32.xlu0 %v1908, 80
      %v2301 = vpop.permute.xlu0 %2300
      %2302 = vrot.lane.b32.xlu0 %v1909, 80
      %v2303 = vpop.permute.xlu0 %2302
      %2304 = vrot.lane.b32.xlu0 %v1910, 80
      %v2305 = vpop.permute.xlu0 %2304
      %v2306 = vsel %vm1602, %v2299, %v2301
      %v2307 = vsel %vm1602, %v2301, %v2303
      %v2308 = vsel %vm1602, %v2303, %v2305
      %v2313 = vsel %vm347, %v2297, 0
      %2315 = vmatpush.bf16.msra.mxu0 0
      %2316 = vmatpush.bf16.msra.mxu0 0
      %2317 = vmatpush.bf16.msra.mxu0 0
      %2318 = vmatpush.bf16.msra.mxu0 0
      %2319 = vmatpush.bf16.msra.mxu0 0
      %2320 = vmatpush.bf16.msra.mxu0 0
      %2321 = vmatpush.bf16.msra.mxu0 0
      %2322 = vmatpush.bf16.msra.mxu0 %v2306
      %2323 = vmatmul.bf16.gmra.mxu0 %v2313
      %v2324 = vpop.f32.mrf.mxu0
      %v2325 = vadd.f32 0.0, %v2324
      %v2326 = vpop.f32.mrf.mxu0
      %2327 = vdwg.mxu0
      %2328 = vmatpush.bf16.msra.mxu0 0
      %2329 = vmatpush.bf16.msra.mxu0 0
      %2330 = vmatpush.bf16.msra.mxu0 0
      %2331 = vmatpush.bf16.msra.mxu0 0
      %2332 = vmatpush.bf16.msra.mxu0 0
      %2333 = vmatpush.bf16.msra.mxu0 0
      %2334 = vmatpush.bf16.msra.mxu0 0
      %2335 = vmatpush.bf16.msra.mxu0 %v2307
      %2336 = vmatmul.bf16.gmra.mxu0 %v2313
      %v2337 = vpop.f32.mrf.mxu0
      %v2338 = vadd.f32 0.0, %v2337
      %v2339 = vpop.f32.mrf.mxu0
      %2340 = vdwg.mxu0
      %2341 = vmatpush.bf16.msra.mxu0 0
      %2342 = vmatpush.bf16.msra.mxu0 0
      %2343 = vmatpush.bf16.msra.mxu0 0
      %2344 = vmatpush.bf16.msra.mxu0 0
      %2345 = vmatpush.bf16.msra.mxu0 0
      %2346 = vmatpush.bf16.msra.mxu0 0
      %2347 = vmatpush.bf16.msra.mxu0 0
      %2348 = vmatpush.bf16.msra.mxu0 %v2308
      %2349 = vmatmul.bf16.gmra.mxu0 %v2313
      %v2350 = vpop.f32.mrf.mxu0
      %v2351 = vadd.f32 0.0, %v2350
      %v2352 = vpop.f32.mrf.mxu0
      %2353 = vdwg.mxu0
      %v2354 = vadd.f32 %v2287, %v2325
      %v2355 = vadd.f32 %v2288, %v2338
      %v2356 = vadd.f32 %v2289, %v2351
      %s2357 = scalar_lea.vmem %s6, 56
      %v2358 = vld [vmem:[%s2357] sm:$0xf]
      %v2359 = vld [vmem:[%s2357 + $0x4] sm:$0xf]
      %v2362 = vunpack.c.l.b16 %v2358
      %v2363 = vunpack.c.l.b16 %v2359
      %v2364 = vpack.c.b16 %v2363, %v2362
      %2365 = vrot.lane.b32.xlu0 %v1907, 79
      %v2366 = vpop.permute.xlu0 %2365
      %2367 = vrot.lane.b32.xlu0 %v1908, 79
      %v2368 = vpop.permute.xlu0 %2367
      %2369 = vrot.lane.b32.xlu0 %v1909, 79
      %v2370 = vpop.permute.xlu0 %2369
      %2371 = vrot.lane.b32.xlu0 %v1910, 79
      %v2372 = vpop.permute.xlu0 %2371
      %v2373 = vsel %vm1676, %v2366, %v2368
      %v2374 = vsel %vm1676, %v2368, %v2370
      %v2375 = vsel %vm1676, %v2370, %v2372
      %v2380 = vsel %vm347, %v2364, 0
      %2382 = vmatpush.bf16.msra.mxu0 0
      %2383 = vmatpush.bf16.msra.mxu0 0
      %2384 = vmatpush.bf16.msra.mxu0 0
      %2385 = vmatpush.bf16.msra.mxu0 0
      %2386 = vmatpush.bf16.msra.mxu0 0
      %2387 = vmatpush.bf16.msra.mxu0 0
      %2388 = vmatpush.bf16.msra.mxu0 0
      %2389 = vmatpush.bf16.msra.mxu0 %v2373
      %2390 = vmatmul.bf16.gmra.mxu0 %v2380
      %v2391 = vpop.f32.mrf.mxu0
      %v2392 = vadd.f32 0.0, %v2391
      %v2393 = vpop.f32.mrf.mxu0
      %2394 = vdwg.mxu0
      %2395 = vmatpush.bf16.msra.mxu0 0
      %2396 = vmatpush.bf16.msra.mxu0 0
      %2397 = vmatpush.bf16.msra.mxu0 0
      %2398 = vmatpush.bf16.msra.mxu0 0
      %2399 = vmatpush.bf16.msra.mxu0 0
      %2400 = vmatpush.bf16.msra.mxu0 0
      %2401 = vmatpush.bf16.msra.mxu0 0
      %2402 = vmatpush.bf16.msra.mxu0 %v2374
      %2403 = vmatmul.bf16.gmra.mxu0 %v2380
      %v2404 = vpop.f32.mrf.mxu0
      %v2405 = vadd.f32 0.0, %v2404
      %v2406 = vpop.f32.mrf.mxu0
      %2407 = vdwg.mxu0
      %2408 = vmatpush.bf16.msra.mxu0 0
      %2409 = vmatpush.bf16.msra.mxu0 0
      %2410 = vmatpush.bf16.msra.mxu0 0
      %2411 = vmatpush.bf16.msra.mxu0 0
      %2412 = vmatpush.bf16.msra.mxu0 0
      %2413 = vmatpush.bf16.msra.mxu0 0
      %2414 = vmatpush.bf16.msra.mxu0 0
      %2415 = vmatpush.bf16.msra.mxu0 %v2375
      %2416 = vmatmul.bf16.gmra.mxu0 %v2380
      %v2417 = vpop.f32.mrf.mxu0
      %v2418 = vadd.f32 0.0, %v2417
      %v2419 = vpop.f32.mrf.mxu0
      %2420 = vdwg.mxu0
      %v2421 = vadd.f32 %v2354, %v2392
      %v2422 = vadd.f32 %v2355, %v2405
      %v2423 = vadd.f32 %v2356, %v2418
      %s2424 = scalar_lea.vmem %s6, 64
      %v2425 = vld [vmem:[%s2424] sm:$0xf]
      %v2426 = vld [vmem:[%s2424 + $0x4] sm:$0xf]
      %v2429 = vunpack.c.l.b16 %v2425
      %v2430 = vunpack.c.l.b16 %v2426
      %v2431 = vpack.c.b16 %v2430, %v2429
      %2432 = vrot.lane.b32.xlu0 %v1907, 78
      %v2433 = vpop.permute.xlu0 %2432
      %2434 = vrot.lane.b32.xlu0 %v1908, 78
      %v2435 = vpop.permute.xlu0 %2434
      %2436 = vrot.lane.b32.xlu0 %v1909, 78
      %v2437 = vpop.permute.xlu0 %2436
      %2438 = vrot.lane.b32.xlu0 %v1910, 78
      %v2439 = vpop.permute.xlu0 %2438
      %v2440 = vsel %vm1750, %v2433, %v2435
      %v2441 = vsel %vm1750, %v2435, %v2437
      %v2442 = vsel %vm1750, %v2437, %v2439
      %v2447 = vsel %vm347, %v2431, 0
      %2449 = vmatpush.bf16.msra.mxu0 0
      %2450 = vmatpush.bf16.msra.mxu0 0
      %2451 = vmatpush.bf16.msra.mxu0 0
      %2452 = vmatpush.bf16.msra.mxu0 0
      %2453 = vmatpush.bf16.msra.mxu0 0
      %2454 = vmatpush.bf16.msra.mxu0 0
      %2455 = vmatpush.bf16.msra.mxu0 0
      %2456 = vmatpush.bf16.msra.mxu0 %v2440
      %2457 = vmatmul.bf16.gmra.mxu0 %v2447
      %v2458 = vpop.f32.mrf.mxu0
      %v2459 = vadd.f32 0.0, %v2458
      %v2460 = vpop.f32.mrf.mxu0
      %2461 = vdwg.mxu0
      %2462 = vmatpush.bf16.msra.mxu0 0
      %2463 = vmatpush.bf16.msra.mxu0 0
      %2464 = vmatpush.bf16.msra.mxu0 0
      %2465 = vmatpush.bf16.msra.mxu0 0
      %2466 = vmatpush.bf16.msra.mxu0 0
      %2467 = vmatpush.bf16.msra.mxu0 0
      %2468 = vmatpush.bf16.msra.mxu0 0
      %2469 = vmatpush.bf16.msra.mxu0 %v2441
      %2470 = vmatmul.bf16.gmra.mxu0 %v2447
      %v2471 = vpop.f32.mrf.mxu0
      %v2472 = vadd.f32 0.0, %v2471
      %v2473 = vpop.f32.mrf.mxu0
      %2474 = vdwg.mxu0
      %2475 = vmatpush.bf16.msra.mxu0 0
      %2476 = vmatpush.bf16.msra.mxu0 0
      %2477 = vmatpush.bf16.msra.mxu0 0
      %2478 = vmatpush.bf16.msra.mxu0 0
      %2479 = vmatpush.bf16.msra.mxu0 0
      %2480 = vmatpush.bf16.msra.mxu0 0
      %2481 = vmatpush.bf16.msra.mxu0 0
      %2482 = vmatpush.bf16.msra.mxu0 %v2442
      %2483 = vmatmul.bf16.gmra.mxu0 %v2447
      %v2484 = vpop.f32.mrf.mxu0
      %v2485 = vadd.f32 0.0, %v2484
      %v2486 = vpop.f32.mrf.mxu0
      %2487 = vdwg.mxu0
      %v2488 = vadd.f32 %v2421, %v2459
      %v2489 = vadd.f32 %v2422, %v2472
      %v2490 = vadd.f32 %v2423, %v2485
      %v2491 = vld [vmem:[%s7] sm:$0xff]
      %2493 = vset.pattern.permute.xlu0 0
      %2494 = vperm.xlu0 %2493, %v2491
      %v2495 = vpop.permute.xlu0 %2494
      %v2497 = vadd.f32 %v2488, %v2495
      %v2498 = vadd.f32 %v2489, %v2495
      %v2499 = vadd.f32 %v2490, %v2495
      %v2500 = vmax.f32 %v2497, 0.0
      %v2501 = vmax.f32 %v2498, 0.0
      %v2502 = vmax.f32 %v2499, 0.0
      %v2505 = vrot.slane %v2501, 4
      %v2506 = vsel %vm331, %v2500, %v2505
      %2508 = vst [vmem:[%s322] sm:$0xff] %v2506
      %2509 = vst [vmem:[%s322 + $0x8] sm:$0xf] %v2502
      %p2510 = scmp.lt.s32.totalorder %s19, 1
      %s2511 = scalar_select %p2510, %s19, 1
      %s2512 = smul.addr %s2511, 3
      %s2513 = smul.addr %s2512, 4
      %s2514 = scalar_lea.vmem %s8, %s2513
      // Predicated region
      $region53: #{unet_up_forward.1} parent=51 // pred_check
        %p2515 = pneg %p215
      $region54: #{unet_up_forward.1} parent=51 // pred_check_branch
        %2517 = sbr.rel (%p2515) target = $region56
      $region55: #{unet_up_forward.1} parent=51 // pred_region
        _
      $region56: #{unet_up_forward.1} parent=51 // pred_fallthru
        _
    $region52: #{unet_up_forward.1} parent=5 // pred_fallthru
      _
    %p2518 = scmp.le.s32.totalorder 2, %s14
    // Predicated region
    $region57: #{unet_up_forward.1} parent=5 // pred_check
      %p2519 = pneg %p2518
    $region58: #{unet_up_forward.1} parent=5 // pred_check_branch
      %2521 = sbr.rel (%p2519) target = $region60
    $region59: #{unet_up_forward.1} parent=5 // pred_region
      %s2522 = ssub.s32 %s14, 2
      // Predicated region
      $region61: #{unet_up_forward.1} parent=59 // pred_check
        %p2523 = pneg %p221
      $region62: #{unet_up_forward.1} parent=59 // pred_check_branch
        %2525 = sbr.rel (%p2523) target = $region64
      $region63: #{unet_up_forward.1} parent=59 // pred_region
        %p2526 = scmp.lt.s32.totalorder %s20, 1
        %s2527 = scalar_select %p2526, %s20, 1
        %s2528 = smul.addr %s2527, 3
        %s2529 = smul.addr %s2528, 4
        %s2530 = scalar_lea.vmem %s8, %s2529
      $region64: #{unet_up_forward.1} parent=59 // pred_fallthru
        _
    $region60: #{unet_up_forward.1} parent=5 // pred_fallthru
      _
  $region6: #{unet_up_forward.1} parent=0 // loop_footer
    %s18 = sadd.s32 1, %s14
  $region7: #{unet_up_forward.1} parent=0 // loop_footer_branch
    %13 = sbr.rel target = $region3
  $region8: #{unet_up_forward.1} parent=0 // loop_exit
    _

</llo_original>
